<compile_context>
chip_gen: v5e
topology: v5e:2x2
jax: 0.10.0
libtpu: 0.0.40
codegen_flags: <defaults>
</compile_context>

<pallas_src>
import functools

import jax
import jax.numpy as jnp
from jax.experimental import pallas as pl
from jax.experimental.pallas import tpu as pltpu

INPUT = 28       # LSTM input_size
SEQ = 28         # sequence length (x.view(B, 28, -1) with 28x28 input)
HIDDEN = 64      # LSTM hidden_size
NCLS = 10        # fc output classes
NCLS_PAD = 128   # lane-dense FC/softmax epilogue width (sliced back to 10)
CHUNK = 7        # timesteps per interleaved input-projection chunk (28 = 4*7)

assert SEQ % CHUNK == 0


def lstm_kernel(x_ref, wih_ref, whh_ref, b_ref, wfc_ref, bfc_ref,
                out_ref, xg0_ref, xg1_ref):
    """One batch tile of the full forward pass.

    x_ref   : (T, TILE_B, I)      time-major input (bf16)
    wih_ref : (I, 4H)             W_ih^T, gate cols [f, i, o, 2*g]   (bf16)
    whh_ref : (H, 4H)             W_hh^T, gate cols [f, i, o, 2*g]   (bf16)
    b_ref   : (1, 4H)             b_ih + b_hh, same order/scale      (f32)
    wfc_ref : (H, NCLS_PAD)       W_fc^T zero-padded to 128 lanes    (f32)
    bfc_ref : (1, NCLS_PAD)       b_fc; padded lanes hold -1e30      (f32)
    out_ref : (TILE_B, NCLS_PAD)  softmax probabilities (padded cols == 0)
    xg0/xg1 : (CHUNK, TILE_B, 4H) bf16 ping-pong buffers for the hoisted input
              projection so each chunk's MXU matmul overlaps the EUP-bound
              recurrence of the previous chunk.
    """
    T, TB, I = x_ref.shape
    H = HIDDEN
    n_chunks = T // CHUNK

    wih = wih_ref[...]        # (I, 4H)  bf16, resident
    whh = whh_ref[...]        # (H, 4H)  bf16, resident
    bias = b_ref[...]         # (1, 4H)  f32

    bufs = (xg0_ref, xg1_ref)

    def project(ci):
        # One (CHUNK*TB, I) x (I, 4H) MXU matmul; bias folded in once; store bf16.
        x2d = x_ref[pl.ds(ci * CHUNK, CHUNK)].reshape(CHUNK * TB, I)
        xg = jnp.dot(x2d, wih, preferred_element_type=jnp.float32) + bias
        bufs[ci % 2][...] = xg.reshape(CHUNK, TB, 4 * H).astype(jnp.bfloat16)

    project(0)

    # ---- Serial recurrence: h/c carried as values (registers), loop unrolled.
    h = jnp.zeros((TB, H), jnp.float32)
    c = jnp.zeros((TB, H), jnp.float32)

    for ci in range(n_chunks):
        if ci + 1 < n_chunks:
            # Next chunk's input projection (MXU + one vst pass into the other
            # ping-pong buffer) hides under this chunk's EUP-bound recurrence.
            project(ci + 1)
        buf = bufs[ci % 2]
        for dt in range(CHUNK):
            gates = buf[dt].astype(jnp.float32) + jnp.dot(
                h.astype(jnp.bfloat16), whh, preferred_element_type=jnp.float32)
            # Gate columns are [f, i, o, 2*g]: a single lane-dense 4H-wide
            # sigmoid (EUP), with tanh(g) recovered exactly as
            # 2*sigmoid(2g) - 1 -- no second transcendental pass.  f and o sit
            # at lane offset 0 of their 128-lane halves.
            sg = jax.nn.sigmoid(gates)
            f_g = sg[:, 0 * H:1 * H]
            i_g = sg[:, 1 * H:2 * H]
            o_g = sg[:, 2 * H:3 * H]
            g_g = 2.0 * sg[:, 3 * H:4 * H] - 1.0
            c = f_g * c + i_g * g_g
            h = o_g * jnp.tanh(c)
            # TODO(synk): on v6e/v7x the sigmoid/tanh above could run in bf16
            # (~2x EUP rate); kept f32 here so the same kernel is v5e-safe.

    # ---- Lane-dense FC + softmax(dim=1) epilogue on the final hidden state.
    logits = (jnp.dot(h, wfc_ref[...], preferred_element_type=jnp.float32)
              + bfc_ref[...])                               # (TB, NCLS_PAD)
    m = jnp.max(logits, axis=1, keepdims=True)
    e = jnp.exp(logits - m)                                 # padded cols -> 0
    out_ref[...] = (e / jnp.sum(e, axis=1, keepdims=True)).astype(out_ref.dtype)


def _round_up(n, m):
    return ((n + m - 1) // m) * m


def _permute_and_scale_gates(w):
    """Reorder PyTorch's [i, f, g, o] gate blocks to [f, i, o, g] and pre-scale
    the g block by 2 so tanh(g) == 2*sigmoid(2g) - 1 holds exactly in-kernel."""
    H = HIDDEN
    i, f, g, o = w[0:H], w[H:2 * H], w[2 * H:3 * H], w[3 * H:4 * H]
    return jnp.concatenate([f, i, o, 2.0 * g], axis=0)


def prepare_params(params):
    """One-time weight prep: gate permute/scale, transpose, fold biases, cast."""
    w_ih, w_hh, b_ih, b_hh, w_fc, b_fc = params
    w_ih = _permute_and_scale_gates(jnp.asarray(w_ih, jnp.float32))   # (4H, I)
    w_hh = _permute_and_scale_gates(jnp.asarray(w_hh, jnp.float32))   # (4H, H)
    b = _permute_and_scale_gates(jnp.asarray(b_ih, jnp.float32)
                                 + jnp.asarray(b_hh, jnp.float32))    # (4H,)
    wih_t = w_ih.T.astype(jnp.bfloat16)                               # (I, 4H)
    whh_t = w_hh.T.astype(jnp.bfloat16)                               # (H, 4H)
    b = b.reshape(1, 4 * HIDDEN)                                      # (1, 4H)
    # Lane-dense FC: pad output columns to 128; padded bias = -1e30 so padded
    # softmax probabilities underflow to exactly 0.
    wfc_t = jnp.zeros((HIDDEN, NCLS_PAD), jnp.float32)
    wfc_t = wfc_t.at[:, :NCLS].set(jnp.asarray(w_fc, jnp.float32).T)
    bfc = jnp.full((1, NCLS_PAD), -1e30, jnp.float32)
    bfc = bfc.at[0, :NCLS].set(jnp.asarray(b_fc, jnp.float32))
    return wih_t, whh_t, b, wfc_t, bfc


@functools.partial(jax.jit, static_argnames=("tile_b",))
def lstm_forward(x, prepared, *, tile_b=256):
    """x: (B, 28, 28) float. Returns (B, 10) softmax probabilities."""
    wih_t, whh_t, b, wfc_t, bfc = prepared
    B = x.shape[0]

    # Batch-tile policy: multiple of 16 sublanes (bf16 packing).  Keep >= 2
    # tiles whenever B allows so both v7x TensorCores get work on the
    # "parallel" grid axis.  tile_b=256 (~3 MiB/tile with bf16 scratch) fits
    # every generation's scoped-VMEM default; 512 is fine on v6e.
    tile = max(16, min(_round_up(tile_b, 16), _round_up((B + 1) // 2, 16)))
    bp = _round_up(B, tile)
    num_tiles = bp // tile

    # x.view(B, 28, -1); cast once to bf16 (halves input DMA bytes); pad only
    # when needed; go time-major so each projection chunk is a contiguous slab.
    x = x.reshape(B, SEQ, INPUT).astype(jnp.bfloat16)
    if bp != B:
        x = jnp.concatenate(
            [x, jnp.zeros((bp - B, SEQ, INPUT), jnp.bfloat16)], axis=0)
    x_tm = jnp.transpose(x, (1, 0, 2))                      # (T, Bp, I)
    # TODO(synk): keeping the dataset time-major upstream removes this transpose.

    out = pl.pallas_call(
        lstm_kernel,
        out_shape=jax.ShapeDtypeStruct((bp, NCLS_PAD), jnp.float32),
        grid=(num_tiles,),
        in_specs=[
            pl.BlockSpec((SEQ, tile, INPUT), lambda i: (0, i, 0)),      # x (bf16)
            pl.BlockSpec((INPUT, 4 * HIDDEN), lambda i: (0, 0)),        # W_ih^T
            pl.BlockSpec((HIDDEN, 4 * HIDDEN), lambda i: (0, 0)),       # W_hh^T
            pl.BlockSpec((1, 4 * HIDDEN), lambda i: (0, 0)),            # bias
            pl.BlockSpec((HIDDEN, NCLS_PAD), lambda i: (0, 0)),         # W_fc^T
            pl.BlockSpec((1, NCLS_PAD), lambda i: (0, 0)),              # b_fc
        ],
        out_specs=pl.BlockSpec((tile, NCLS_PAD), lambda i: (i, 0)),
        scratch_shapes=[
            pltpu.VMEM((CHUNK, tile, 4 * HIDDEN), jnp.bfloat16),        # xg ping
            pltpu.VMEM((CHUNK, tile, 4 * HIDDEN), jnp.bfloat16),        # xg pong
        ],
        compiler_params=pltpu.CompilerParams(
            dimension_semantics=("parallel",),
        ),
    )(x_tm, wih_t, whh_t, b, wfc_t, bfc)
    return out[:B, :NCLS]


def lstm_reference(x, params):
    """Pure-JAX f32 reference matching PyTorch nn.LSTM + Linear + Softmax."""
    w_ih, w_hh, b_ih, b_hh, w_fc, b_fc = [jnp.asarray(p, jnp.float32)
                                          for p in params]
    H = HIDDEN
    B = x.shape[0]
    xs = jnp.asarray(x, jnp.float32).reshape(B, SEQ, INPUT)
    h = jnp.zeros((B, H), jnp.float32)
    c = jnp.zeros((B, H), jnp.float32)
    for t in range(SEQ):
        g = xs[:, t] @ w_ih.T + b_ih + h @ w_hh.T + b_hh
        i = jax.nn.sigmoid(g[:, 0:H])
        f = jax.nn.sigmoid(g[:, H:2 * H])
        gg = jnp.tanh(g[:, 2 * H:3 * H])
        o = jax.nn.sigmoid(g[:, 3 * H:4 * H])
        c = f * c + i * gg
        h = o * jnp.tanh(c)
    logits = h @ w_fc.T + b_fc
    return jax.nn.softmax(logits, axis=1)


def init_params(key):
    """Deterministic init matching PyTorch default shapes/ranges."""
    ks = jax.random.split(key, 6)
    k_lstm = 1.0 / jnp.sqrt(HIDDEN)
    k_fc = 1.0 / jnp.sqrt(HIDDEN)
    w_ih = jax.random.uniform(ks[0], (4 * HIDDEN, INPUT), jnp.float32,
                              -k_lstm, k_lstm)
    w_hh = jax.random.uniform(ks[1], (4 * HIDDEN, HIDDEN), jnp.float32,
                              -k_lstm, k_lstm)
    b_ih = jax.random.uniform(ks[2], (4 * HIDDEN,), jnp.float32,
                              -k_lstm, k_lstm)
    b_hh = jax.random.uniform(ks[3], (4 * HIDDEN,), jnp.float32,
                              -k_lstm, k_lstm)
    w_fc = jax.random.uniform(ks[4], (NCLS, HIDDEN), jnp.float32, -k_fc, k_fc)
    b_fc = jax.random.uniform(ks[5], (NCLS,), jnp.float32, -k_fc, k_fc)
    return (w_ih, w_hh, b_ih, b_hh, w_fc, b_fc)


if __name__ == "__main__":
    key = jax.random.PRNGKey(0)
    k_params, k_x = jax.random.split(key)
    params = init_params(k_params)
    prepared = prepare_params(params)

    B = 2
    x = jax.random.normal(k_x, (B, 28, 28), jnp.float32)    # MNIST-like input

    out = lstm_forward(x, prepared)
    out = jax.block_until_ready(out)

    assert out.shape == (B, NCLS)
    assert bool(jnp.all(out >= 0.0))
    # Exact softmax normalization -> rows sum to 1 within f32 rounding.
    assert bool(jnp.allclose(jnp.sum(out, axis=1), 1.0, atol=1e-3))

    # Cross-check against the pure-JAX f32 reference (bf16 matmuls / bf16 xg
    # scratch give a small, bounded deviation over the 28-step recurrence).
    ref = lstm_reference(x, params)
    max_err = float(jnp.max(jnp.abs(out - ref)))
    assert max_err < 5e-2, f"kernel vs f32 reference mismatch: {max_err}"

    print("KERNEL_OK")
</pallas_src>

<mosaic_0001>
module attributes {stable_mosaic.version = 11 : i64} {
  func.func @lstm_kernel(%arg0: i32, %arg1: memref<28x16x28xbf16, #tpu.memory_space<vmem>>, %arg2: memref<28x256xbf16, #tpu.memory_space<vmem>>, %arg3: memref<64x256xbf16, #tpu.memory_space<vmem>>, %arg4: memref<1x256xf32, #tpu.memory_space<vmem>>, %arg5: memref<64x128xf32, #tpu.memory_space<vmem>>, %arg6: memref<1x128xf32, #tpu.memory_space<vmem>>, %arg7: memref<16x128xf32, #tpu.memory_space<vmem>>, %arg8: memref<7x16x256xbf16, #tpu.memory_space<vmem>>, %arg9: memref<7x16x256xbf16, #tpu.memory_space<vmem>>) attributes {dimension_semantics = [#tpu.dimension_semantics<parallel>], iteration_bounds = array<i64: 1>, scalar_prefetch = 0 : i64, scratch_operands = 2 : i64, tpu.core_type = #tpu.core_type<tc>, window_params = [{transform_indices = @transform_0, window_bounds = array<i64: 28, 16, 28>}, {pipeline_mode = #tpu.pipeline_mode<synchronous>, transform_indices = @transform_1, window_bounds = array<i64: 28, 256>}, {pipeline_mode = #tpu.pipeline_mode<synchronous>, transform_indices = @transform_2, window_bounds = array<i64: 64, 256>}, {pipeline_mode = #tpu.pipeline_mode<synchronous>, transform_indices = @transform_3, window_bounds = array<i64: 1, 256>}, {pipeline_mode = #tpu.pipeline_mode<synchronous>, transform_indices = @transform_4, window_bounds = array<i64: 64, 128>}, {pipeline_mode = #tpu.pipeline_mode<synchronous>, transform_indices = @transform_5, window_bounds = array<i64: 1, 128>}, {transform_indices = @transform_6, window_bounds = array<i64: 16, 128>}]} {
    %c0 = arith.constant 0 : index
    %c0_0 = arith.constant 0 : index
    %0 = vector.load %arg2[%c0, %c0_0] : memref<28x256xbf16, #tpu.memory_space<vmem>>, vector<28x256xbf16>
    %c0_1 = arith.constant 0 : index
    %c0_2 = arith.constant 0 : index
    %1 = vector.load %arg3[%c0_1, %c0_2] : memref<64x256xbf16, #tpu.memory_space<vmem>>, vector<64x256xbf16>
    %c0_3 = arith.constant 0 : index
    %c0_4 = arith.constant 0 : index
    %2 = vector.load %arg4[%c0_3, %c0_4] : memref<1x256xf32, #tpu.memory_space<vmem>>, vector<1x256xf32>
    %c0_5 = arith.constant 0 : index
    %c0_6 = arith.constant 0 : index
    %c0_7 = arith.constant 0 : index
    %3 = vector.load %arg1[%c0_5, %c0_6, %c0_7] : memref<28x16x28xbf16, #tpu.memory_space<vmem>>, vector<7x16x28xbf16>
    %4 = vector.shape_cast %3 : vector<7x16x28xbf16> to vector<112x28xbf16>
    %cst = arith.constant dense<0.000000e+00> : vector<112x256xf32>
    %5 = tpu.matmul %4, %0, %cst {dimension_numbers = #tpu.dot_dimension_numbers<[1], [0], [0], [1], [0, 0, 1, 1], [], []>} : vector<112x28xbf16>, vector<28x256xbf16>, vector<112x256xf32> -> vector<112x256xf32>
    %6 = vector.broadcast %2 : vector<1x256xf32> to vector<112x256xf32>
    %7 = arith.addf %5, %6 : vector<112x256xf32>
    %8 = vector.shape_cast %7 : vector<112x256xf32> to vector<7x16x256xf32>
    %9 = arith.truncf %8 : vector<7x16x256xf32> to vector<7x16x256xbf16>
    %c0_8 = arith.constant 0 : index
    %c0_9 = arith.constant 0 : index
    %c0_10 = arith.constant 0 : index
    %10 = vector.load %arg8[%c0_8, %c0_9, %c0_10] : memref<7x16x256xbf16, #tpu.memory_space<vmem>>, vector<7x16x256xbf16>
    tpu.vector_store %arg8[%c0_8, %c0_9, %c0_10], %9 {strides = array<i32>} : memref<7x16x256xbf16, #tpu.memory_space<vmem>>, vector<7x16x256xbf16>,
    %cst_11 = arith.constant 0.000000e+00 : f32
    %11 = vector.broadcast %cst_11 : f32 to vector<16x64xf32>
    %cst_12 = arith.constant 0.000000e+00 : f32
    %12 = vector.broadcast %cst_12 : f32 to vector<16x64xf32>
    %c7 = arith.constant 7 : index
    %c0_13 = arith.constant 0 : index
    %c0_14 = arith.constant 0 : index
    %13 = vector.load %arg1[%c7, %c0_13, %c0_14] : memref<28x16x28xbf16, #tpu.memory_space<vmem>>, vector<7x16x28xbf16>
    %14 = vector.shape_cast %13 : vector<7x16x28xbf16> to vector<112x28xbf16>
    %cst_15 = arith.constant dense<0.000000e+00> : vector<112x256xf32>
    %15 = tpu.matmul %14, %0, %cst_15 {dimension_numbers = #tpu.dot_dimension_numbers<[1], [0], [0], [1], [0, 0, 1, 1], [], []>} : vector<112x28xbf16>, vector<28x256xbf16>, vector<112x256xf32> -> vector<112x256xf32>
    %16 = vector.broadcast %2 : vector<1x256xf32> to vector<112x256xf32>
    %17 = arith.addf %15, %16 : vector<112x256xf32>
    %18 = vector.shape_cast %17 : vector<112x256xf32> to vector<7x16x256xf32>
    %19 = arith.truncf %18 : vector<7x16x256xf32> to vector<7x16x256xbf16>
    %c0_16 = arith.constant 0 : index
    %c0_17 = arith.constant 0 : index
    %c0_18 = arith.constant 0 : index
    %20 = vector.load %arg9[%c0_16, %c0_17, %c0_18] : memref<7x16x256xbf16, #tpu.memory_space<vmem>>, vector<7x16x256xbf16>
    tpu.vector_store %arg9[%c0_16, %c0_17, %c0_18], %19 {strides = array<i32>} : memref<7x16x256xbf16, #tpu.memory_space<vmem>>, vector<7x16x256xbf16>,
    %c0_19 = arith.constant 0 : index
    %c0_20 = arith.constant 0 : index
    %c0_21 = arith.constant 0 : index
    %21 = vector.load %arg8[%c0_19, %c0_20, %c0_21] : memref<7x16x256xbf16, #tpu.memory_space<vmem>>, vector<1x16x256xbf16>
    %22 = vector.shape_cast %21 : vector<1x16x256xbf16> to vector<16x256xbf16>
    %23 = arith.extf %22 : vector<16x256xbf16> to vector<16x256xf32>
    %24 = arith.truncf %11 : vector<16x64xf32> to vector<16x64xbf16>
    %cst_22 = arith.constant dense<0.000000e+00> : vector<16x256xf32>
    %25 = tpu.matmul %24, %1, %cst_22 {dimension_numbers = #tpu.dot_dimension_numbers<[1], [0], [0], [1], [0, 0, 1, 1], [], []>} : vector<16x64xbf16>, vector<64x256xbf16>, vector<16x256xf32> -> vector<16x256xf32>
    %26 = arith.addf %23, %25 : vector<16x256xf32>
    %27 = arith.negf %26 : vector<16x256xf32>
    %28 = math.exp %27 : vector<16x256xf32>
    %cst_23 = arith.constant 1.000000e+00 : f32
    %29 = vector.broadcast %cst_23 : f32 to vector<16x256xf32>
    %30 = arith.addf %29, %28 : vector<16x256xf32>
    %31 = arith.divf %29, %30 : vector<16x256xf32>
    %32 = vector.extract_strided_slice %31 {offsets = [0, 0], sizes = [16, 64], strides = [1, 1]} : vector<16x256xf32> to vector<16x64xf32>
    %33 = vector.extract_strided_slice %31 {offsets = [0, 64], sizes = [16, 64], strides = [1, 1]} : vector<16x256xf32> to vector<16x64xf32>
    %34 = vector.extract_strided_slice %31 {offsets = [0, 128], sizes = [16, 64], strides = [1, 1]} : vector<16x256xf32> to vector<16x64xf32>
    %35 = vector.extract_strided_slice %31 {offsets = [0, 192], sizes = [16, 64], strides = [1, 1]} : vector<16x256xf32> to vector<16x64xf32>
    %cst_24 = arith.constant 2.000000e+00 : f32
    %36 = vector.broadcast %cst_24 : f32 to vector<16x64xf32>
    %37 = arith.mulf %36, %35 : vector<16x64xf32>
    %cst_25 = arith.constant 1.000000e+00 : f32
    %38 = vector.broadcast %cst_25 : f32 to vector<16x64xf32>
    %39 = arith.subf %37, %38 : vector<16x64xf32>
    %40 = arith.mulf %32, %12 : vector<16x64xf32>
    %41 = arith.mulf %33, %39 : vector<16x64xf32>
    %42 = arith.addf %40, %41 : vector<16x64xf32>
    %43 = math.tanh %42 : vector<16x64xf32>
    %44 = arith.mulf %34, %43 : vector<16x64xf32>
    %c1 = arith.constant 1 : index
    %c0_26 = arith.constant 0 : index
    %c0_27 = arith.constant 0 : index
    %45 = vector.load %arg8[%c1, %c0_26, %c0_27] : memref<7x16x256xbf16, #tpu.memory_space<vmem>>, vector<1x16x256xbf16>
    %46 = vector.shape_cast %45 : vector<1x16x256xbf16> to vector<16x256xbf16>
    %47 = arith.extf %46 : vector<16x256xbf16> to vector<16x256xf32>
    %48 = arith.truncf %44 : vector<16x64xf32> to vector<16x64xbf16>
    %cst_28 = arith.constant dense<0.000000e+00> : vector<16x256xf32>
    %49 = tpu.matmul %48, %1, %cst_28 {dimension_numbers = #tpu.dot_dimension_numbers<[1], [0], [0], [1], [0, 0, 1, 1], [], []>} : vector<16x64xbf16>, vector<64x256xbf16>, vector<16x256xf32> -> vector<16x256xf32>
    %50 = arith.addf %47, %49 : vector<16x256xf32>
    %51 = arith.negf %50 : vector<16x256xf32>
    %52 = math.exp %51 : vector<16x256xf32>
    %cst_29 = arith.constant 1.000000e+00 : f32
    %53 = vector.broadcast %cst_29 : f32 to vector<16x256xf32>
    %54 = arith.addf %53, %52 : vector<16x256xf32>
    %55 = arith.divf %53, %54 : vector<16x256xf32>
    %56 = vector.extract_strided_slice %55 {offsets = [0, 0], sizes = [16, 64], strides = [1, 1]} : vector<16x256xf32> to vector<16x64xf32>
    %57 = vector.extract_strided_slice %55 {offsets = [0, 64], sizes = [16, 64], strides = [1, 1]} : vector<16x256xf32> to vector<16x64xf32>
    %58 = vector.extract_strided_slice %55 {offsets = [0, 128], sizes = [16, 64], strides = [1, 1]} : vector<16x256xf32> to vector<16x64xf32>
    %59 = vector.extract_strided_slice %55 {offsets = [0, 192], sizes = [16, 64], strides = [1, 1]} : vector<16x256xf32> to vector<16x64xf32>
    %cst_30 = arith.constant 2.000000e+00 : f32
    %60 = vector.broadcast %cst_30 : f32 to vector<16x64xf32>
    %61 = arith.mulf %60, %59 : vector<16x64xf32>
    %cst_31 = arith.constant 1.000000e+00 : f32
    %62 = vector.broadcast %cst_31 : f32 to vector<16x64xf32>
    %63 = arith.subf %61, %62 : vector<16x64xf32>
    %64 = arith.mulf %56, %42 : vector<16x64xf32>
    %65 = arith.mulf %57, %63 : vector<16x64xf32>
    %66 = arith.addf %64, %65 : vector<16x64xf32>
    %67 = math.tanh %66 : vector<16x64xf32>
    %68 = arith.mulf %58, %67 : vector<16x64xf32>
    %c2 = arith.constant 2 : index
    %c0_32 = arith.constant 0 : index
    %c0_33 = arith.constant 0 : index
    %69 = vector.load %arg8[%c2, %c0_32, %c0_33] : memref<7x16x256xbf16, #tpu.memory_space<vmem>>, vector<1x16x256xbf16>
    %70 = vector.shape_cast %69 : vector<1x16x256xbf16> to vector<16x256xbf16>
    %71 = arith.extf %70 : vector<16x256xbf16> to vector<16x256xf32>
    %72 = arith.truncf %68 : vector<16x64xf32> to vector<16x64xbf16>
    %cst_34 = arith.constant dense<0.000000e+00> : vector<16x256xf32>
    %73 = tpu.matmul %72, %1, %cst_34 {dimension_numbers = #tpu.dot_dimension_numbers<[1], [0], [0], [1], [0, 0, 1, 1], [], []>} : vector<16x64xbf16>, vector<64x256xbf16>, vector<16x256xf32> -> vector<16x256xf32>
    %74 = arith.addf %71, %73 : vector<16x256xf32>
    %75 = arith.negf %74 : vector<16x256xf32>
    %76 = math.exp %75 : vector<16x256xf32>
    %cst_35 = arith.constant 1.000000e+00 : f32
    %77 = vector.broadcast %cst_35 : f32 to vector<16x256xf32>
    %78 = arith.addf %77, %76 : vector<16x256xf32>
    %79 = arith.divf %77, %78 : vector<16x256xf32>
    %80 = vector.extract_strided_slice %79 {offsets = [0, 0], sizes = [16, 64], strides = [1, 1]} : vector<16x256xf32> to vector<16x64xf32>
    %81 = vector.extract_strided_slice %79 {offsets = [0, 64], sizes = [16, 64], strides = [1, 1]} : vector<16x256xf32> to vector<16x64xf32>
    %82 = vector.extract_strided_slice %79 {offsets = [0, 128], sizes = [16, 64], strides = [1, 1]} : vector<16x256xf32> to vector<16x64xf32>
    %83 = vector.extract_strided_slice %79 {offsets = [0, 192], sizes = [16, 64], strides = [1, 1]} : vector<16x256xf32> to vector<16x64xf32>
    %cst_36 = arith.constant 2.000000e+00 : f32
    %84 = vector.broadcast %cst_36 : f32 to vector<16x64xf32>
    %85 = arith.mulf %84, %83 : vector<16x64xf32>
    %cst_37 = arith.constant 1.000000e+00 : f32
    %86 = vector.broadcast %cst_37 : f32 to vector<16x64xf32>
    %87 = arith.subf %85, %86 : vector<16x64xf32>
    %88 = arith.mulf %80, %66 : vector<16x64xf32>
    %89 = arith.mulf %81, %87 : vector<16x64xf32>
    %90 = arith.addf %88, %89 : vector<16x64xf32>
    %91 = math.tanh %90 : vector<16x64xf32>
    %92 = arith.mulf %82, %91 : vector<16x64xf32>
    %c3 = arith.constant 3 : index
    %c0_38 = arith.constant 0 : index
    %c0_39 = arith.constant 0 : index
    %93 = vector.load %arg8[%c3, %c0_38, %c0_39] : memref<7x16x256xbf16, #tpu.memory_space<vmem>>, vector<1x16x256xbf16>
    %94 = vector.shape_cast %93 : vector<1x16x256xbf16> to vector<16x256xbf16>
    %95 = arith.extf %94 : vector<16x256xbf16> to vector<16x256xf32>
    %96 = arith.truncf %92 : vector<16x64xf32> to vector<16x64xbf16>
    %cst_40 = arith.constant dense<0.000000e+00> : vector<16x256xf32>
    %97 = tpu.matmul %96, %1, %cst_40 {dimension_numbers = #tpu.dot_dimension_numbers<[1], [0], [0], [1], [0, 0, 1, 1], [], []>} : vector<16x64xbf16>, vector<64x256xbf16>, vector<16x256xf32> -> vector<16x256xf32>
    %98 = arith.addf %95, %97 : vector<16x256xf32>
    %99 = arith.negf %98 : vector<16x256xf32>
    %100 = math.exp %99 : vector<16x256xf32>
    %cst_41 = arith.constant 1.000000e+00 : f32
    %101 = vector.broadcast %cst_41 : f32 to vector<16x256xf32>
    %102 = arith.addf %101, %100 : vector<16x256xf32>
    %103 = arith.divf %101, %102 : vector<16x256xf32>
    %104 = vector.extract_strided_slice %103 {offsets = [0, 0], sizes = [16, 64], strides = [1, 1]} : vector<16x256xf32> to vector<16x64xf32>
    %105 = vector.extract_strided_slice %103 {offsets = [0, 64], sizes = [16, 64], strides = [1, 1]} : vector<16x256xf32> to vector<16x64xf32>
    %106 = vector.extract_strided_slice %103 {offsets = [0, 128], sizes = [16, 64], strides = [1, 1]} : vector<16x256xf32> to vector<16x64xf32>
    %107 = vector.extract_strided_slice %103 {offsets = [0, 192], sizes = [16, 64], strides = [1, 1]} : vector<16x256xf32> to vector<16x64xf32>
    %cst_42 = arith.constant 2.000000e+00 : f32
    %108 = vector.broadcast %cst_42 : f32 to vector<16x64xf32>
    %109 = arith.mulf %108, %107 : vector<16x64xf32>
    %cst_43 = arith.constant 1.000000e+00 : f32
    %110 = vector.broadcast %cst_43 : f32 to vector<16x64xf32>
    %111 = arith.subf %109, %110 : vector<16x64xf32>
    %112 = arith.mulf %104, %90 : vector<16x64xf32>
    %113 = arith.mulf %105, %111 : vector<16x64xf32>
    %114 = arith.addf %112, %113 : vector<16x64xf32>
    %115 = math.tanh %114 : vector<16x64xf32>
    %116 = arith.mulf %106, %115 : vector<16x64xf32>
    %c4 = arith.constant 4 : index
    %c0_44 = arith.constant 0 : index
    %c0_45 = arith.constant 0 : index
    %117 = vector.load %arg8[%c4, %c0_44, %c0_45] : memref<7x16x256xbf16, #tpu.memory_space<vmem>>, vector<1x16x256xbf16>
    %118 = vector.shape_cast %117 : vector<1x16x256xbf16> to vector<16x256xbf16>
    %119 = arith.extf %118 : vector<16x256xbf16> to vector<16x256xf32>
    %120 = arith.truncf %116 : vector<16x64xf32> to vector<16x64xbf16>
    %cst_46 = arith.constant dense<0.000000e+00> : vector<16x256xf32>
    %121 = tpu.matmul %120, %1, %cst_46 {dimension_numbers = #tpu.dot_dimension_numbers<[1], [0], [0], [1], [0, 0, 1, 1], [], []>} : vector<16x64xbf16>, vector<64x256xbf16>, vector<16x256xf32> -> vector<16x256xf32>
    %122 = arith.addf %119, %121 : vector<16x256xf32>
    %123 = arith.negf %122 : vector<16x256xf32>
    %124 = math.exp %123 : vector<16x256xf32>
    %cst_47 = arith.constant 1.000000e+00 : f32
    %125 = vector.broadcast %cst_47 : f32 to vector<16x256xf32>
    %126 = arith.addf %125, %124 : vector<16x256xf32>
    %127 = arith.divf %125, %126 : vector<16x256xf32>
    %128 = vector.extract_strided_slice %127 {offsets = [0, 0], sizes = [16, 64], strides = [1, 1]} : vector<16x256xf32> to vector<16x64xf32>
    %129 = vector.extract_strided_slice %127 {offsets = [0, 64], sizes = [16, 64], strides = [1, 1]} : vector<16x256xf32> to vector<16x64xf32>
    %130 = vector.extract_strided_slice %127 {offsets = [0, 128], sizes = [16, 64], strides = [1, 1]} : vector<16x256xf32> to vector<16x64xf32>
    %131 = vector.extract_strided_slice %127 {offsets = [0, 192], sizes = [16, 64], strides = [1, 1]} : vector<16x256xf32> to vector<16x64xf32>
    %cst_48 = arith.constant 2.000000e+00 : f32
    %132 = vector.broadcast %cst_48 : f32 to vector<16x64xf32>
    %133 = arith.mulf %132, %131 : vector<16x64xf32>
    %cst_49 = arith.constant 1.000000e+00 : f32
    %134 = vector.broadcast %cst_49 : f32 to vector<16x64xf32>
    %135 = arith.subf %133, %134 : vector<16x64xf32>
    %136 = arith.mulf %128, %114 : vector<16x64xf32>
    %137 = arith.mulf %129, %135 : vector<16x64xf32>
    %138 = arith.addf %136, %137 : vector<16x64xf32>
    %139 = math.tanh %138 : vector<16x64xf32>
    %140 = arith.mulf %130, %139 : vector<16x64xf32>
    %c5 = arith.constant 5 : index
    %c0_50 = arith.constant 0 : index
    %c0_51 = arith.constant 0 : index
    %141 = vector.load %arg8[%c5, %c0_50, %c0_51] : memref<7x16x256xbf16, #tpu.memory_space<vmem>>, vector<1x16x256xbf16>
    %142 = vector.shape_cast %141 : vector<1x16x256xbf16> to vector<16x256xbf16>
    %143 = arith.extf %142 : vector<16x256xbf16> to vector<16x256xf32>
    %144 = arith.truncf %140 : vector<16x64xf32> to vector<16x64xbf16>
    %cst_52 = arith.constant dense<0.000000e+00> : vector<16x256xf32>
    %145 = tpu.matmul %144, %1, %cst_52 {dimension_numbers = #tpu.dot_dimension_numbers<[1], [0], [0], [1], [0, 0, 1, 1], [], []>} : vector<16x64xbf16>, vector<64x256xbf16>, vector<16x256xf32> -> vector<16x256xf32>
    %146 = arith.addf %143, %145 : vector<16x256xf32>
    %147 = arith.negf %146 : vector<16x256xf32>
    %148 = math.exp %147 : vector<16x256xf32>
    %cst_53 = arith.constant 1.000000e+00 : f32
    %149 = vector.broadcast %cst_53 : f32 to vector<16x256xf32>
    %150 = arith.addf %149, %148 : vector<16x256xf32>
    %151 = arith.divf %149, %150 : vector<16x256xf32>
    %152 = vector.extract_strided_slice %151 {offsets = [0, 0], sizes = [16, 64], strides = [1, 1]} : vector<16x256xf32> to vector<16x64xf32>
    %153 = vector.extract_strided_slice %151 {offsets = [0, 64], sizes = [16, 64], strides = [1, 1]} : vector<16x256xf32> to vector<16x64xf32>
    %154 = vector.extract_strided_slice %151 {offsets = [0, 128], sizes = [16, 64], strides = [1, 1]} : vector<16x256xf32> to vector<16x64xf32>
    %155 = vector.extract_strided_slice %151 {offsets = [0, 192], sizes = [16, 64], strides = [1, 1]} : vector<16x256xf32> to vector<16x64xf32>
    %cst_54 = arith.constant 2.000000e+00 : f32
    %156 = vector.broadcast %cst_54 : f32 to vector<16x64xf32>
    %157 = arith.mulf %156, %155 : vector<16x64xf32>
    %cst_55 = arith.constant 1.000000e+00 : f32
    %158 = vector.broadcast %cst_55 : f32 to vector<16x64xf32>
    %159 = arith.subf %157, %158 : vector<16x64xf32>
    %160 = arith.mulf %152, %138 : vector<16x64xf32>
    %161 = arith.mulf %153, %159 : vector<16x64xf32>
    %162 = arith.addf %160, %161 : vector<16x64xf32>
    %163 = math.tanh %162 : vector<16x64xf32>
    %164 = arith.mulf %154, %163 : vector<16x64xf32>
    %c6 = arith.constant 6 : index
    %c0_56 = arith.constant 0 : index
    %c0_57 = arith.constant 0 : index
    %165 = vector.load %arg8[%c6, %c0_56, %c0_57] : memref<7x16x256xbf16, #tpu.memory_space<vmem>>, vector<1x16x256xbf16>
    %166 = vector.shape_cast %165 : vector<1x16x256xbf16> to vector<16x256xbf16>
    %167 = arith.extf %166 : vector<16x256xbf16> to vector<16x256xf32>
    %168 = arith.truncf %164 : vector<16x64xf32> to vector<16x64xbf16>
    %cst_58 = arith.constant dense<0.000000e+00> : vector<16x256xf32>
    %169 = tpu.matmul %168, %1, %cst_58 {dimension_numbers = #tpu.dot_dimension_numbers<[1], [0], [0], [1], [0, 0, 1, 1], [], []>} : vector<16x64xbf16>, vector<64x256xbf16>, vector<16x256xf32> -> vector<16x256xf32>
    %170 = arith.addf %167, %169 : vector<16x256xf32>
    %171 = arith.negf %170 : vector<16x256xf32>
    %172 = math.exp %171 : vector<16x256xf32>
    %cst_59 = arith.constant 1.000000e+00 : f32
    %173 = vector.broadcast %cst_59 : f32 to vector<16x256xf32>
    %174 = arith.addf %173, %172 : vector<16x256xf32>
    %175 = arith.divf %173, %174 : vector<16x256xf32>
    %176 = vector.extract_strided_slice %175 {offsets = [0, 0], sizes = [16, 64], strides = [1, 1]} : vector<16x256xf32> to vector<16x64xf32>
    %177 = vector.extract_strided_slice %175 {offsets = [0, 64], sizes = [16, 64], strides = [1, 1]} : vector<16x256xf32> to vector<16x64xf32>
    %178 = vector.extract_strided_slice %175 {offsets = [0, 128], sizes = [16, 64], strides = [1, 1]} : vector<16x256xf32> to vector<16x64xf32>
    %179 = vector.extract_strided_slice %175 {offsets = [0, 192], sizes = [16, 64], strides = [1, 1]} : vector<16x256xf32> to vector<16x64xf32>
    %cst_60 = arith.constant 2.000000e+00 : f32
    %180 = vector.broadcast %cst_60 : f32 to vector<16x64xf32>
    %181 = arith.mulf %180, %179 : vector<16x64xf32>
    %cst_61 = arith.constant 1.000000e+00 : f32
    %182 = vector.broadcast %cst_61 : f32 to vector<16x64xf32>
    %183 = arith.subf %181, %182 : vector<16x64xf32>
    %184 = arith.mulf %176, %162 : vector<16x64xf32>
    %185 = arith.mulf %177, %183 : vector<16x64xf32>
    %186 = arith.addf %184, %185 : vector<16x64xf32>
    %187 = math.tanh %186 : vector<16x64xf32>
    %188 = arith.mulf %178, %187 : vector<16x64xf32>
    %c14 = arith.constant 14 : index
    %c0_62 = arith.constant 0 : index
    %c0_63 = arith.constant 0 : index
    %189 = vector.load %arg1[%c14, %c0_62, %c0_63] : memref<28x16x28xbf16, #tpu.memory_space<vmem>>, vector<7x16x28xbf16>
    %190 = vector.shape_cast %189 : vector<7x16x28xbf16> to vector<112x28xbf16>
    %cst_64 = arith.constant dense<0.000000e+00> : vector<112x256xf32>
    %191 = tpu.matmul %190, %0, %cst_64 {dimension_numbers = #tpu.dot_dimension_numbers<[1], [0], [0], [1], [0, 0, 1, 1], [], []>} : vector<112x28xbf16>, vector<28x256xbf16>, vector<112x256xf32> -> vector<112x256xf32>
    %192 = vector.broadcast %2 : vector<1x256xf32> to vector<112x256xf32>
    %193 = arith.addf %191, %192 : vector<112x256xf32>
    %194 = vector.shape_cast %193 : vector<112x256xf32> to vector<7x16x256xf32>
    %195 = arith.truncf %194 : vector<7x16x256xf32> to vector<7x16x256xbf16>
    %c0_65 = arith.constant 0 : index
    %c0_66 = arith.constant 0 : index
    %c0_67 = arith.constant 0 : index
    %196 = vector.load %arg8[%c0_65, %c0_66, %c0_67] : memref<7x16x256xbf16, #tpu.memory_space<vmem>>, vector<7x16x256xbf16>
    tpu.vector_store %arg8[%c0_65, %c0_66, %c0_67], %195 {strides = array<i32>} : memref<7x16x256xbf16, #tpu.memory_space<vmem>>, vector<7x16x256xbf16>,
    %c0_68 = arith.constant 0 : index
    %c0_69 = arith.constant 0 : index
    %c0_70 = arith.constant 0 : index
    %197 = vector.load %arg9[%c0_68, %c0_69, %c0_70] : memref<7x16x256xbf16, #tpu.memory_space<vmem>>, vector<1x16x256xbf16>
    %198 = vector.shape_cast %197 : vector<1x16x256xbf16> to vector<16x256xbf16>
    %199 = arith.extf %198 : vector<16x256xbf16> to vector<16x256xf32>
    %200 = arith.truncf %188 : vector<16x64xf32> to vector<16x64xbf16>
    %cst_71 = arith.constant dense<0.000000e+00> : vector<16x256xf32>
    %201 = tpu.matmul %200, %1, %cst_71 {dimension_numbers = #tpu.dot_dimension_numbers<[1], [0], [0], [1], [0, 0, 1, 1], [], []>} : vector<16x64xbf16>, vector<64x256xbf16>, vector<16x256xf32> -> vector<16x256xf32>
    %202 = arith.addf %199, %201 : vector<16x256xf32>
    %203 = arith.negf %202 : vector<16x256xf32>
    %204 = math.exp %203 : vector<16x256xf32>
    %cst_72 = arith.constant 1.000000e+00 : f32
    %205 = vector.broadcast %cst_72 : f32 to vector<16x256xf32>
    %206 = arith.addf %205, %204 : vector<16x256xf32>
    %207 = arith.divf %205, %206 : vector<16x256xf32>
    %208 = vector.extract_strided_slice %207 {offsets = [0, 0], sizes = [16, 64], strides = [1, 1]} : vector<16x256xf32> to vector<16x64xf32>
    %209 = vector.extract_strided_slice %207 {offsets = [0, 64], sizes = [16, 64], strides = [1, 1]} : vector<16x256xf32> to vector<16x64xf32>
    %210 = vector.extract_strided_slice %207 {offsets = [0, 128], sizes = [16, 64], strides = [1, 1]} : vector<16x256xf32> to vector<16x64xf32>
    %211 = vector.extract_strided_slice %207 {offsets = [0, 192], sizes = [16, 64], strides = [1, 1]} : vector<16x256xf32> to vector<16x64xf32>
    %cst_73 = arith.constant 2.000000e+00 : f32
    %212 = vector.broadcast %cst_73 : f32 to vector<16x64xf32>
    %213 = arith.mulf %212, %211 : vector<16x64xf32>
    %cst_74 = arith.constant 1.000000e+00 : f32
    %214 = vector.broadcast %cst_74 : f32 to vector<16x64xf32>
    %215 = arith.subf %213, %214 : vector<16x64xf32>
    %216 = arith.mulf %208, %186 : vector<16x64xf32>
    %217 = arith.mulf %209, %215 : vector<16x64xf32>
    %218 = arith.addf %216, %217 : vector<16x64xf32>
    %219 = math.tanh %218 : vector<16x64xf32>
    %220 = arith.mulf %210, %219 : vector<16x64xf32>
    %c1_75 = arith.constant 1 : index
    %c0_76 = arith.constant 0 : index
    %c0_77 = arith.constant 0 : index
    %221 = vector.load %arg9[%c1_75, %c0_76, %c0_77] : memref<7x16x256xbf16, #tpu.memory_space<vmem>>, vector<1x16x256xbf16>
    %222 = vector.shape_cast %221 : vector<1x16x256xbf16> to vector<16x256xbf16>
    %223 = arith.extf %222 : vector<16x256xbf16> to vector<16x256xf32>
    %224 = arith.truncf %220 : vector<16x64xf32> to vector<16x64xbf16>
    %cst_78 = arith.constant dense<0.000000e+00> : vector<16x256xf32>
    %225 = tpu.matmul %224, %1, %cst_78 {dimension_numbers = #tpu.dot_dimension_numbers<[1], [0], [0], [1], [0, 0, 1, 1], [], []>} : vector<16x64xbf16>, vector<64x256xbf16>, vector<16x256xf32> -> vector<16x256xf32>
    %226 = arith.addf %223, %225 : vector<16x256xf32>
    %227 = arith.negf %226 : vector<16x256xf32>
    %228 = math.exp %227 : vector<16x256xf32>
    %cst_79 = arith.constant 1.000000e+00 : f32
    %229 = vector.broadcast %cst_79 : f32 to vector<16x256xf32>
    %230 = arith.addf %229, %228 : vector<16x256xf32>
    %231 = arith.divf %229, %230 : vector<16x256xf32>
    %232 = vector.extract_strided_slice %231 {offsets = [0, 0], sizes = [16, 64], strides = [1, 1]} : vector<16x256xf32> to vector<16x64xf32>
    %233 = vector.extract_strided_slice %231 {offsets = [0, 64], sizes = [16, 64], strides = [1, 1]} : vector<16x256xf32> to vector<16x64xf32>
    %234 = vector.extract_strided_slice %231 {offsets = [0, 128], sizes = [16, 64], strides = [1, 1]} : vector<16x256xf32> to vector<16x64xf32>
    %235 = vector.extract_strided_slice %231 {offsets = [0, 192], sizes = [16, 64], strides = [1, 1]} : vector<16x256xf32> to vector<16x64xf32>
    %cst_80 = arith.constant 2.000000e+00 : f32
    %236 = vector.broadcast %cst_80 : f32 to vector<16x64xf32>
    %237 = arith.mulf %236, %235 : vector<16x64xf32>
    %cst_81 = arith.constant 1.000000e+00 : f32
    %238 = vector.broadcast %cst_81 : f32 to vector<16x64xf32>
    %239 = arith.subf %237, %238 : vector<16x64xf32>
    %240 = arith.mulf %232, %218 : vector<16x64xf32>
    %241 = arith.mulf %233, %239 : vector<16x64xf32>
    %242 = arith.addf %240, %241 : vector<16x64xf32>
    %243 = math.tanh %242 : vector<16x64xf32>
    %244 = arith.mulf %234, %243 : vector<16x64xf32>
    %c2_82 = arith.constant 2 : index
    %c0_83 = arith.constant 0 : index
    %c0_84 = arith.constant 0 : index
    %245 = vector.load %arg9[%c2_82, %c0_83, %c0_84] : memref<7x16x256xbf16, #tpu.memory_space<vmem>>, vector<1x16x256xbf16>
    %246 = vector.shape_cast %245 : vector<1x16x256xbf16> to vector<16x256xbf16>
    %247 = arith.extf %246 : vector<16x256xbf16> to vector<16x256xf32>
    %248 = arith.truncf %244 : vector<16x64xf32> to vector<16x64xbf16>
    %cst_85 = arith.constant dense<0.000000e+00> : vector<16x256xf32>
    %249 = tpu.matmul %248, %1, %cst_85 {dimension_numbers = #tpu.dot_dimension_numbers<[1], [0], [0], [1], [0, 0, 1, 1], [], []>} : vector<16x64xbf16>, vector<64x256xbf16>, vector<16x256xf32> -> vector<16x256xf32>
    %250 = arith.addf %247, %249 : vector<16x256xf32>
    %251 = arith.negf %250 : vector<16x256xf32>
    %252 = math.exp %251 : vector<16x256xf32>
    %cst_86 = arith.constant 1.000000e+00 : f32
    %253 = vector.broadcast %cst_86 : f32 to vector<16x256xf32>
    %254 = arith.addf %253, %252 : vector<16x256xf32>
    %255 = arith.divf %253, %254 : vector<16x256xf32>
    %256 = vector.extract_strided_slice %255 {offsets = [0, 0], sizes = [16, 64], strides = [1, 1]} : vector<16x256xf32> to vector<16x64xf32>
    %257 = vector.extract_strided_slice %255 {offsets = [0, 64], sizes = [16, 64], strides = [1, 1]} : vector<16x256xf32> to vector<16x64xf32>
    %258 = vector.extract_strided_slice %255 {offsets = [0, 128], sizes = [16, 64], strides = [1, 1]} : vector<16x256xf32> to vector<16x64xf32>
    %259 = vector.extract_strided_slice %255 {offsets = [0, 192], sizes = [16, 64], strides = [1, 1]} : vector<16x256xf32> to vector<16x64xf32>
    %cst_87 = arith.constant 2.000000e+00 : f32
    %260 = vector.broadcast %cst_87 : f32 to vector<16x64xf32>
    %261 = arith.mulf %260, %259 : vector<16x64xf32>
    %cst_88 = arith.constant 1.000000e+00 : f32
    %262 = vector.broadcast %cst_88 : f32 to vector<16x64xf32>
    %263 = arith.subf %261, %262 : vector<16x64xf32>
    %264 = arith.mulf %256, %242 : vector<16x64xf32>
    %265 = arith.mulf %257, %263 : vector<16x64xf32>
    %266 = arith.addf %264, %265 : vector<16x64xf32>
    %267 = math.tanh %266 : vector<16x64xf32>
    %268 = arith.mulf %258, %267 : vector<16x64xf32>
    %c3_89 = arith.constant 3 : index
    %c0_90 = arith.constant 0 : index
    %c0_91 = arith.constant 0 : index
    %269 = vector.load %arg9[%c3_89, %c0_90, %c0_91] : memref<7x16x256xbf16, #tpu.memory_space<vmem>>, vector<1x16x256xbf16>
    %270 = vector.shape_cast %269 : vector<1x16x256xbf16> to vector<16x256xbf16>
    %271 = arith.extf %270 : vector<16x256xbf16> to vector<16x256xf32>
    %272 = arith.truncf %268 : vector<16x64xf32> to vector<16x64xbf16>
    %cst_92 = arith.constant dense<0.000000e+00> : vector<16x256xf32>
    %273 = tpu.matmul %272, %1, %cst_92 {dimension_numbers = #tpu.dot_dimension_numbers<[1], [0], [0], [1], [0, 0, 1, 1], [], []>} : vector<16x64xbf16>, vector<64x256xbf16>, vector<16x256xf32> -> vector<16x256xf32>
    %274 = arith.addf %271, %273 : vector<16x256xf32>
    %275 = arith.negf %274 : vector<16x256xf32>
    %276 = math.exp %275 : vector<16x256xf32>
    %cst_93 = arith.constant 1.000000e+00 : f32
    %277 = vector.broadcast %cst_93 : f32 to vector<16x256xf32>
    %278 = arith.addf %277, %276 : vector<16x256xf32>
    %279 = arith.divf %277, %278 : vector<16x256xf32>
    %280 = vector.extract_strided_slice %279 {offsets = [0, 0], sizes = [16, 64], strides = [1, 1]} : vector<16x256xf32> to vector<16x64xf32>
    %281 = vector.extract_strided_slice %279 {offsets = [0, 64], sizes = [16, 64], strides = [1, 1]} : vector<16x256xf32> to vector<16x64xf32>
    %282 = vector.extract_strided_slice %279 {offsets = [0, 128], sizes = [16, 64], strides = [1, 1]} : vector<16x256xf32> to vector<16x64xf32>
    %283 = vector.extract_strided_slice %279 {offsets = [0, 192], sizes = [16, 64], strides = [1, 1]} : vector<16x256xf32> to vector<16x64xf32>
    %cst_94 = arith.constant 2.000000e+00 : f32
    %284 = vector.broadcast %cst_94 : f32 to vector<16x64xf32>
    %285 = arith.mulf %284, %283 : vector<16x64xf32>
    %cst_95 = arith.constant 1.000000e+00 : f32
    %286 = vector.broadcast %cst_95 : f32 to vector<16x64xf32>
    %287 = arith.subf %285, %286 : vector<16x64xf32>
    %288 = arith.mulf %280, %266 : vector<16x64xf32>
    %289 = arith.mulf %281, %287 : vector<16x64xf32>
    %290 = arith.addf %288, %289 : vector<16x64xf32>
    %291 = math.tanh %290 : vector<16x64xf32>
    %292 = arith.mulf %282, %291 : vector<16x64xf32>
    %c4_96 = arith.constant 4 : index
    %c0_97 = arith.constant 0 : index
    %c0_98 = arith.constant 0 : index
    %293 = vector.load %arg9[%c4_96, %c0_97, %c0_98] : memref<7x16x256xbf16, #tpu.memory_space<vmem>>, vector<1x16x256xbf16>
    %294 = vector.shape_cast %293 : vector<1x16x256xbf16> to vector<16x256xbf16>
    %295 = arith.extf %294 : vector<16x256xbf16> to vector<16x256xf32>
    %296 = arith.truncf %292 : vector<16x64xf32> to vector<16x64xbf16>
    %cst_99 = arith.constant dense<0.000000e+00> : vector<16x256xf32>
    %297 = tpu.matmul %296, %1, %cst_99 {dimension_numbers = #tpu.dot_dimension_numbers<[1], [0], [0], [1], [0, 0, 1, 1], [], []>} : vector<16x64xbf16>, vector<64x256xbf16>, vector<16x256xf32> -> vector<16x256xf32>
    %298 = arith.addf %295, %297 : vector<16x256xf32>
    %299 = arith.negf %298 : vector<16x256xf32>
    %300 = math.exp %299 : vector<16x256xf32>
    %cst_100 = arith.constant 1.000000e+00 : f32
    %301 = vector.broadcast %cst_100 : f32 to vector<16x256xf32>
    %302 = arith.addf %301, %300 : vector<16x256xf32>
    %303 = arith.divf %301, %302 : vector<16x256xf32>
    %304 = vector.extract_strided_slice %303 {offsets = [0, 0], sizes = [16, 64], strides = [1, 1]} : vector<16x256xf32> to vector<16x64xf32>
    %305 = vector.extract_strided_slice %303 {offsets = [0, 64], sizes = [16, 64], strides = [1, 1]} : vector<16x256xf32> to vector<16x64xf32>
    %306 = vector.extract_strided_slice %303 {offsets = [0, 128], sizes = [16, 64], strides = [1, 1]} : vector<16x256xf32> to vector<16x64xf32>
    %307 = vector.extract_strided_slice %303 {offsets = [0, 192], sizes = [16, 64], strides = [1, 1]} : vector<16x256xf32> to vector<16x64xf32>
    %cst_101 = arith.constant 2.000000e+00 : f32
    %308 = vector.broadcast %cst_101 : f32 to vector<16x64xf32>
    %309 = arith.mulf %308, %307 : vector<16x64xf32>
    %cst_102 = arith.constant 1.000000e+00 : f32
    %310 = vector.broadcast %cst_102 : f32 to vector<16x64xf32>
    %311 = arith.subf %309, %310 : vector<16x64xf32>
    %312 = arith.mulf %304, %290 : vector<16x64xf32>
    %313 = arith.mulf %305, %311 : vector<16x64xf32>
    %314 = arith.addf %312, %313 : vector<16x64xf32>
    %315 = math.tanh %314 : vector<16x64xf32>
    %316 = arith.mulf %306, %315 : vector<16x64xf32>
    %c5_103 = arith.constant 5 : index
    %c0_104 = arith.constant 0 : index
    %c0_105 = arith.constant 0 : index
    %317 = vector.load %arg9[%c5_103, %c0_104, %c0_105] : memref<7x16x256xbf16, #tpu.memory_space<vmem>>, vector<1x16x256xbf16>
    %318 = vector.shape_cast %317 : vector<1x16x256xbf16> to vector<16x256xbf16>
    %319 = arith.extf %318 : vector<16x256xbf16> to vector<16x256xf32>
    %320 = arith.truncf %316 : vector<16x64xf32> to vector<16x64xbf16>
    %cst_106 = arith.constant dense<0.000000e+00> : vector<16x256xf32>
    %321 = tpu.matmul %320, %1, %cst_106 {dimension_numbers = #tpu.dot_dimension_numbers<[1], [0], [0], [1], [0, 0, 1, 1], [], []>} : vector<16x64xbf16>, vector<64x256xbf16>, vector<16x256xf32> -> vector<16x256xf32>
    %322 = arith.addf %319, %321 : vector<16x256xf32>
    %323 = arith.negf %322 : vector<16x256xf32>
    %324 = math.exp %323 : vector<16x256xf32>
    %cst_107 = arith.constant 1.000000e+00 : f32
    %325 = vector.broadcast %cst_107 : f32 to vector<16x256xf32>
    %326 = arith.addf %325, %324 : vector<16x256xf32>
    %327 = arith.divf %325, %326 : vector<16x256xf32>
    %328 = vector.extract_strided_slice %327 {offsets = [0, 0], sizes = [16, 64], strides = [1, 1]} : vector<16x256xf32> to vector<16x64xf32>
    %329 = vector.extract_strided_slice %327 {offsets = [0, 64], sizes = [16, 64], strides = [1, 1]} : vector<16x256xf32> to vector<16x64xf32>
    %330 = vector.extract_strided_slice %327 {offsets = [0, 128], sizes = [16, 64], strides = [1, 1]} : vector<16x256xf32> to vector<16x64xf32>
    %331 = vector.extract_strided_slice %327 {offsets = [0, 192], sizes = [16, 64], strides = [1, 1]} : vector<16x256xf32> to vector<16x64xf32>
    %cst_108 = arith.constant 2.000000e+00 : f32
    %332 = vector.broadcast %cst_108 : f32 to vector<16x64xf32>
    %333 = arith.mulf %332, %331 : vector<16x64xf32>
    %cst_109 = arith.constant 1.000000e+00 : f32
    %334 = vector.broadcast %cst_109 : f32 to vector<16x64xf32>
    %335 = arith.subf %333, %334 : vector<16x64xf32>
    %336 = arith.mulf %328, %314 : vector<16x64xf32>
    %337 = arith.mulf %329, %335 : vector<16x64xf32>
    %338 = arith.addf %336, %337 : vector<16x64xf32>
    %339 = math.tanh %338 : vector<16x64xf32>
    %340 = arith.mulf %330, %339 : vector<16x64xf32>
    %c6_110 = arith.constant 6 : index
    %c0_111 = arith.constant 0 : index
    %c0_112 = arith.constant 0 : index
    %341 = vector.load %arg9[%c6_110, %c0_111, %c0_112] : memref<7x16x256xbf16, #tpu.memory_space<vmem>>, vector<1x16x256xbf16>
    %342 = vector.shape_cast %341 : vector<1x16x256xbf16> to vector<16x256xbf16>
    %343 = arith.extf %342 : vector<16x256xbf16> to vector<16x256xf32>
    %344 = arith.truncf %340 : vector<16x64xf32> to vector<16x64xbf16>
    %cst_113 = arith.constant dense<0.000000e+00> : vector<16x256xf32>
    %345 = tpu.matmul %344, %1, %cst_113 {dimension_numbers = #tpu.dot_dimension_numbers<[1], [0], [0], [1], [0, 0, 1, 1], [], []>} : vector<16x64xbf16>, vector<64x256xbf16>, vector<16x256xf32> -> vector<16x256xf32>
    %346 = arith.addf %343, %345 : vector<16x256xf32>
    %347 = arith.negf %346 : vector<16x256xf32>
    %348 = math.exp %347 : vector<16x256xf32>
    %cst_114 = arith.constant 1.000000e+00 : f32
    %349 = vector.broadcast %cst_114 : f32 to vector<16x256xf32>
    %350 = arith.addf %349, %348 : vector<16x256xf32>
    %351 = arith.divf %349, %350 : vector<16x256xf32>
    %352 = vector.extract_strided_slice %351 {offsets = [0, 0], sizes = [16, 64], strides = [1, 1]} : vector<16x256xf32> to vector<16x64xf32>
    %353 = vector.extract_strided_slice %351 {offsets = [0, 64], sizes = [16, 64], strides = [1, 1]} : vector<16x256xf32> to vector<16x64xf32>
    %354 = vector.extract_strided_slice %351 {offsets = [0, 128], sizes = [16, 64], strides = [1, 1]} : vector<16x256xf32> to vector<16x64xf32>
    %355 = vector.extract_strided_slice %351 {offsets = [0, 192], sizes = [16, 64], strides = [1, 1]} : vector<16x256xf32> to vector<16x64xf32>
    %cst_115 = arith.constant 2.000000e+00 : f32
    %356 = vector.broadcast %cst_115 : f32 to vector<16x64xf32>
    %357 = arith.mulf %356, %355 : vector<16x64xf32>
    %cst_116 = arith.constant 1.000000e+00 : f32
    %358 = vector.broadcast %cst_116 : f32 to vector<16x64xf32>
    %359 = arith.subf %357, %358 : vector<16x64xf32>
    %360 = arith.mulf %352, %338 : vector<16x64xf32>
    %361 = arith.mulf %353, %359 : vector<16x64xf32>
    %362 = arith.addf %360, %361 : vector<16x64xf32>
    %363 = math.tanh %362 : vector<16x64xf32>
    %364 = arith.mulf %354, %363 : vector<16x64xf32>
    %c21 = arith.constant 21 : index
    %c0_117 = arith.constant 0 : index
    %c0_118 = arith.constant 0 : index
    %365 = vector.load %arg1[%c21, %c0_117, %c0_118] : memref<28x16x28xbf16, #tpu.memory_space<vmem>>, vector<7x16x28xbf16>
    %366 = vector.shape_cast %365 : vector<7x16x28xbf16> to vector<112x28xbf16>
    %cst_119 = arith.constant dense<0.000000e+00> : vector<112x256xf32>
    %367 = tpu.matmul %366, %0, %cst_119 {dimension_numbers = #tpu.dot_dimension_numbers<[1], [0], [0], [1], [0, 0, 1, 1], [], []>} : vector<112x28xbf16>, vector<28x256xbf16>, vector<112x256xf32> -> vector<112x256xf32>
    %368 = vector.broadcast %2 : vector<1x256xf32> to vector<112x256xf32>
    %369 = arith.addf %367, %368 : vector<112x256xf32>
    %370 = vector.shape_cast %369 : vector<112x256xf32> to vector<7x16x256xf32>
    %371 = arith.truncf %370 : vector<7x16x256xf32> to vector<7x16x256xbf16>
    %c0_120 = arith.constant 0 : index
    %c0_121 = arith.constant 0 : index
    %c0_122 = arith.constant 0 : index
    %372 = vector.load %arg9[%c0_120, %c0_121, %c0_122] : memref<7x16x256xbf16, #tpu.memory_space<vmem>>, vector<7x16x256xbf16>
    tpu.vector_store %arg9[%c0_120, %c0_121, %c0_122], %371 {strides = array<i32>} : memref<7x16x256xbf16, #tpu.memory_space<vmem>>, vector<7x16x256xbf16>,
    %c0_123 = arith.constant 0 : index
    %c0_124 = arith.constant 0 : index
    %c0_125 = arith.constant 0 : index
    %373 = vector.load %arg8[%c0_123, %c0_124, %c0_125] : memref<7x16x256xbf16, #tpu.memory_space<vmem>>, vector<1x16x256xbf16>
    %374 = vector.shape_cast %373 : vector<1x16x256xbf16> to vector<16x256xbf16>
    %375 = arith.extf %374 : vector<16x256xbf16> to vector<16x256xf32>
    %376 = arith.truncf %364 : vector<16x64xf32> to vector<16x64xbf16>
    %cst_126 = arith.constant dense<0.000000e+00> : vector<16x256xf32>
    %377 = tpu.matmul %376, %1, %cst_126 {dimension_numbers = #tpu.dot_dimension_numbers<[1], [0], [0], [1], [0, 0, 1, 1], [], []>} : vector<16x64xbf16>, vector<64x256xbf16>, vector<16x256xf32> -> vector<16x256xf32>
    %378 = arith.addf %375, %377 : vector<16x256xf32>
    %379 = arith.negf %378 : vector<16x256xf32>
    %380 = math.exp %379 : vector<16x256xf32>
    %cst_127 = arith.constant 1.000000e+00 : f32
    %381 = vector.broadcast %cst_127 : f32 to vector<16x256xf32>
    %382 = arith.addf %381, %380 : vector<16x256xf32>
    %383 = arith.divf %381, %382 : vector<16x256xf32>
    %384 = vector.extract_strided_slice %383 {offsets = [0, 0], sizes = [16, 64], strides = [1, 1]} : vector<16x256xf32> to vector<16x64xf32>
    %385 = vector.extract_strided_slice %383 {offsets = [0, 64], sizes = [16, 64], strides = [1, 1]} : vector<16x256xf32> to vector<16x64xf32>
    %386 = vector.extract_strided_slice %383 {offsets = [0, 128], sizes = [16, 64], strides = [1, 1]} : vector<16x256xf32> to vector<16x64xf32>
    %387 = vector.extract_strided_slice %383 {offsets = [0, 192], sizes = [16, 64], strides = [1, 1]} : vector<16x256xf32> to vector<16x64xf32>
    %cst_128 = arith.constant 2.000000e+00 : f32
    %388 = vector.broadcast %cst_128 : f32 to vector<16x64xf32>
    %389 = arith.mulf %388, %387 : vector<16x64xf32>
    %cst_129 = arith.constant 1.000000e+00 : f32
    %390 = vector.broadcast %cst_129 : f32 to vector<16x64xf32>
    %391 = arith.subf %389, %390 : vector<16x64xf32>
    %392 = arith.mulf %384, %362 : vector<16x64xf32>
    %393 = arith.mulf %385, %391 : vector<16x64xf32>
    %394 = arith.addf %392, %393 : vector<16x64xf32>
    %395 = math.tanh %394 : vector<16x64xf32>
    %396 = arith.mulf %386, %395 : vector<16x64xf32>
    %c1_130 = arith.constant 1 : index
    %c0_131 = arith.constant 0 : index
    %c0_132 = arith.constant 0 : index
    %397 = vector.load %arg8[%c1_130, %c0_131, %c0_132] : memref<7x16x256xbf16, #tpu.memory_space<vmem>>, vector<1x16x256xbf16>
    %398 = vector.shape_cast %397 : vector<1x16x256xbf16> to vector<16x256xbf16>
    %399 = arith.extf %398 : vector<16x256xbf16> to vector<16x256xf32>
    %400 = arith.truncf %396 : vector<16x64xf32> to vector<16x64xbf16>
    %cst_133 = arith.constant dense<0.000000e+00> : vector<16x256xf32>
    %401 = tpu.matmul %400, %1, %cst_133 {dimension_numbers = #tpu.dot_dimension_numbers<[1], [0], [0], [1], [0, 0, 1, 1], [], []>} : vector<16x64xbf16>, vector<64x256xbf16>, vector<16x256xf32> -> vector<16x256xf32>
    %402 = arith.addf %399, %401 : vector<16x256xf32>
    %403 = arith.negf %402 : vector<16x256xf32>
    %404 = math.exp %403 : vector<16x256xf32>
    %cst_134 = arith.constant 1.000000e+00 : f32
    %405 = vector.broadcast %cst_134 : f32 to vector<16x256xf32>
    %406 = arith.addf %405, %404 : vector<16x256xf32>
    %407 = arith.divf %405, %406 : vector<16x256xf32>
    %408 = vector.extract_strided_slice %407 {offsets = [0, 0], sizes = [16, 64], strides = [1, 1]} : vector<16x256xf32> to vector<16x64xf32>
    %409 = vector.extract_strided_slice %407 {offsets = [0, 64], sizes = [16, 64], strides = [1, 1]} : vector<16x256xf32> to vector<16x64xf32>
    %410 = vector.extract_strided_slice %407 {offsets = [0, 128], sizes = [16, 64], strides = [1, 1]} : vector<16x256xf32> to vector<16x64xf32>
    %411 = vector.extract_strided_slice %407 {offsets = [0, 192], sizes = [16, 64], strides = [1, 1]} : vector<16x256xf32> to vector<16x64xf32>
    %cst_135 = arith.constant 2.000000e+00 : f32
    %412 = vector.broadcast %cst_135 : f32 to vector<16x64xf32>
    %413 = arith.mulf %412, %411 : vector<16x64xf32>
    %cst_136 = arith.constant 1.000000e+00 : f32
    %414 = vector.broadcast %cst_136 : f32 to vector<16x64xf32>
    %415 = arith.subf %413, %414 : vector<16x64xf32>
    %416 = arith.mulf %408, %394 : vector<16x64xf32>
    %417 = arith.mulf %409, %415 : vector<16x64xf32>
    %418 = arith.addf %416, %417 : vector<16x64xf32>
    %419 = math.tanh %418 : vector<16x64xf32>
    %420 = arith.mulf %410, %419 : vector<16x64xf32>
    %c2_137 = arith.constant 2 : index
    %c0_138 = arith.constant 0 : index
    %c0_139 = arith.constant 0 : index
    %421 = vector.load %arg8[%c2_137, %c0_138, %c0_139] : memref<7x16x256xbf16, #tpu.memory_space<vmem>>, vector<1x16x256xbf16>
    %422 = vector.shape_cast %421 : vector<1x16x256xbf16> to vector<16x256xbf16>
    %423 = arith.extf %422 : vector<16x256xbf16> to vector<16x256xf32>
    %424 = arith.truncf %420 : vector<16x64xf32> to vector<16x64xbf16>
    %cst_140 = arith.constant dense<0.000000e+00> : vector<16x256xf32>
    %425 = tpu.matmul %424, %1, %cst_140 {dimension_numbers = #tpu.dot_dimension_numbers<[1], [0], [0], [1], [0, 0, 1, 1], [], []>} : vector<16x64xbf16>, vector<64x256xbf16>, vector<16x256xf32> -> vector<16x256xf32>
    %426 = arith.addf %423, %425 : vector<16x256xf32>
    %427 = arith.negf %426 : vector<16x256xf32>
    %428 = math.exp %427 : vector<16x256xf32>
    %cst_141 = arith.constant 1.000000e+00 : f32
    %429 = vector.broadcast %cst_141 : f32 to vector<16x256xf32>
    %430 = arith.addf %429, %428 : vector<16x256xf32>
    %431 = arith.divf %429, %430 : vector<16x256xf32>
    %432 = vector.extract_strided_slice %431 {offsets = [0, 0], sizes = [16, 64], strides = [1, 1]} : vector<16x256xf32> to vector<16x64xf32>
    %433 = vector.extract_strided_slice %431 {offsets = [0, 64], sizes = [16, 64], strides = [1, 1]} : vector<16x256xf32> to vector<16x64xf32>
    %434 = vector.extract_strided_slice %431 {offsets = [0, 128], sizes = [16, 64], strides = [1, 1]} : vector<16x256xf32> to vector<16x64xf32>
    %435 = vector.extract_strided_slice %431 {offsets = [0, 192], sizes = [16, 64], strides = [1, 1]} : vector<16x256xf32> to vector<16x64xf32>
    %cst_142 = arith.constant 2.000000e+00 : f32
    %436 = vector.broadcast %cst_142 : f32 to vector<16x64xf32>
    %437 = arith.mulf %436, %435 : vector<16x64xf32>
    %cst_143 = arith.constant 1.000000e+00 : f32
    %438 = vector.broadcast %cst_143 : f32 to vector<16x64xf32>
    %439 = arith.subf %437, %438 : vector<16x64xf32>
    %440 = arith.mulf %432, %418 : vector<16x64xf32>
    %441 = arith.mulf %433, %439 : vector<16x64xf32>
    %442 = arith.addf %440, %441 : vector<16x64xf32>
    %443 = math.tanh %442 : vector<16x64xf32>
    %444 = arith.mulf %434, %443 : vector<16x64xf32>
    %c3_144 = arith.constant 3 : index
    %c0_145 = arith.constant 0 : index
    %c0_146 = arith.constant 0 : index
    %445 = vector.load %arg8[%c3_144, %c0_145, %c0_146] : memref<7x16x256xbf16, #tpu.memory_space<vmem>>, vector<1x16x256xbf16>
    %446 = vector.shape_cast %445 : vector<1x16x256xbf16> to vector<16x256xbf16>
    %447 = arith.extf %446 : vector<16x256xbf16> to vector<16x256xf32>
    %448 = arith.truncf %444 : vector<16x64xf32> to vector<16x64xbf16>
    %cst_147 = arith.constant dense<0.000000e+00> : vector<16x256xf32>
    %449 = tpu.matmul %448, %1, %cst_147 {dimension_numbers = #tpu.dot_dimension_numbers<[1], [0], [0], [1], [0, 0, 1, 1], [], []>} : vector<16x64xbf16>, vector<64x256xbf16>, vector<16x256xf32> -> vector<16x256xf32>
    %450 = arith.addf %447, %449 : vector<16x256xf32>
    %451 = arith.negf %450 : vector<16x256xf32>
    %452 = math.exp %451 : vector<16x256xf32>
    %cst_148 = arith.constant 1.000000e+00 : f32
    %453 = vector.broadcast %cst_148 : f32 to vector<16x256xf32>
    %454 = arith.addf %453, %452 : vector<16x256xf32>
    %455 = arith.divf %453, %454 : vector<16x256xf32>
    %456 = vector.extract_strided_slice %455 {offsets = [0, 0], sizes = [16, 64], strides = [1, 1]} : vector<16x256xf32> to vector<16x64xf32>
    %457 = vector.extract_strided_slice %455 {offsets = [0, 64], sizes = [16, 64], strides = [1, 1]} : vector<16x256xf32> to vector<16x64xf32>
    %458 = vector.extract_strided_slice %455 {offsets = [0, 128], sizes = [16, 64], strides = [1, 1]} : vector<16x256xf32> to vector<16x64xf32>
    %459 = vector.extract_strided_slice %455 {offsets = [0, 192], sizes = [16, 64], strides = [1, 1]} : vector<16x256xf32> to vector<16x64xf32>
    %cst_149 = arith.constant 2.000000e+00 : f32
    %460 = vector.broadcast %cst_149 : f32 to vector<16x64xf32>
    %461 = arith.mulf %460, %459 : vector<16x64xf32>
    %cst_150 = arith.constant 1.000000e+00 : f32
    %462 = vector.broadcast %cst_150 : f32 to vector<16x64xf32>
    %463 = arith.subf %461, %462 : vector<16x64xf32>
    %464 = arith.mulf %456, %442 : vector<16x64xf32>
    %465 = arith.mulf %457, %463 : vector<16x64xf32>
    %466 = arith.addf %464, %465 : vector<16x64xf32>
    %467 = math.tanh %466 : vector<16x64xf32>
    %468 = arith.mulf %458, %467 : vector<16x64xf32>
    %c4_151 = arith.constant 4 : index
    %c0_152 = arith.constant 0 : index
    %c0_153 = arith.constant 0 : index
    %469 = vector.load %arg8[%c4_151, %c0_152, %c0_153] : memref<7x16x256xbf16, #tpu.memory_space<vmem>>, vector<1x16x256xbf16>
    %470 = vector.shape_cast %469 : vector<1x16x256xbf16> to vector<16x256xbf16>
    %471 = arith.extf %470 : vector<16x256xbf16> to vector<16x256xf32>
    %472 = arith.truncf %468 : vector<16x64xf32> to vector<16x64xbf16>
    %cst_154 = arith.constant dense<0.000000e+00> : vector<16x256xf32>
    %473 = tpu.matmul %472, %1, %cst_154 {dimension_numbers = #tpu.dot_dimension_numbers<[1], [0], [0], [1], [0, 0, 1, 1], [], []>} : vector<16x64xbf16>, vector<64x256xbf16>, vector<16x256xf32> -> vector<16x256xf32>
    %474 = arith.addf %471, %473 : vector<16x256xf32>
    %475 = arith.negf %474 : vector<16x256xf32>
    %476 = math.exp %475 : vector<16x256xf32>
    %cst_155 = arith.constant 1.000000e+00 : f32
    %477 = vector.broadcast %cst_155 : f32 to vector<16x256xf32>
    %478 = arith.addf %477, %476 : vector<16x256xf32>
    %479 = arith.divf %477, %478 : vector<16x256xf32>
    %480 = vector.extract_strided_slice %479 {offsets = [0, 0], sizes = [16, 64], strides = [1, 1]} : vector<16x256xf32> to vector<16x64xf32>
    %481 = vector.extract_strided_slice %479 {offsets = [0, 64], sizes = [16, 64], strides = [1, 1]} : vector<16x256xf32> to vector<16x64xf32>
    %482 = vector.extract_strided_slice %479 {offsets = [0, 128], sizes = [16, 64], strides = [1, 1]} : vector<16x256xf32> to vector<16x64xf32>
    %483 = vector.extract_strided_slice %479 {offsets = [0, 192], sizes = [16, 64], strides = [1, 1]} : vector<16x256xf32> to vector<16x64xf32>
    %cst_156 = arith.constant 2.000000e+00 : f32
    %484 = vector.broadcast %cst_156 : f32 to vector<16x64xf32>
    %485 = arith.mulf %484, %483 : vector<16x64xf32>
    %cst_157 = arith.constant 1.000000e+00 : f32
    %486 = vector.broadcast %cst_157 : f32 to vector<16x64xf32>
    %487 = arith.subf %485, %486 : vector<16x64xf32>
    %488 = arith.mulf %480, %466 : vector<16x64xf32>
    %489 = arith.mulf %481, %487 : vector<16x64xf32>
    %490 = arith.addf %488, %489 : vector<16x64xf32>
    %491 = math.tanh %490 : vector<16x64xf32>
    %492 = arith.mulf %482, %491 : vector<16x64xf32>
    %c5_158 = arith.constant 5 : index
    %c0_159 = arith.constant 0 : index
    %c0_160 = arith.constant 0 : index
    %493 = vector.load %arg8[%c5_158, %c0_159, %c0_160] : memref<7x16x256xbf16, #tpu.memory_space<vmem>>, vector<1x16x256xbf16>
    %494 = vector.shape_cast %493 : vector<1x16x256xbf16> to vector<16x256xbf16>
    %495 = arith.extf %494 : vector<16x256xbf16> to vector<16x256xf32>
    %496 = arith.truncf %492 : vector<16x64xf32> to vector<16x64xbf16>
    %cst_161 = arith.constant dense<0.000000e+00> : vector<16x256xf32>
    %497 = tpu.matmul %496, %1, %cst_161 {dimension_numbers = #tpu.dot_dimension_numbers<[1], [0], [0], [1], [0, 0, 1, 1], [], []>} : vector<16x64xbf16>, vector<64x256xbf16>, vector<16x256xf32> -> vector<16x256xf32>
    %498 = arith.addf %495, %497 : vector<16x256xf32>
    %499 = arith.negf %498 : vector<16x256xf32>
    %500 = math.exp %499 : vector<16x256xf32>
    %cst_162 = arith.constant 1.000000e+00 : f32
    %501 = vector.broadcast %cst_162 : f32 to vector<16x256xf32>
    %502 = arith.addf %501, %500 : vector<16x256xf32>
    %503 = arith.divf %501, %502 : vector<16x256xf32>
    %504 = vector.extract_strided_slice %503 {offsets = [0, 0], sizes = [16, 64], strides = [1, 1]} : vector<16x256xf32> to vector<16x64xf32>
    %505 = vector.extract_strided_slice %503 {offsets = [0, 64], sizes = [16, 64], strides = [1, 1]} : vector<16x256xf32> to vector<16x64xf32>
    %506 = vector.extract_strided_slice %503 {offsets = [0, 128], sizes = [16, 64], strides = [1, 1]} : vector<16x256xf32> to vector<16x64xf32>
    %507 = vector.extract_strided_slice %503 {offsets = [0, 192], sizes = [16, 64], strides = [1, 1]} : vector<16x256xf32> to vector<16x64xf32>
    %cst_163 = arith.constant 2.000000e+00 : f32
    %508 = vector.broadcast %cst_163 : f32 to vector<16x64xf32>
    %509 = arith.mulf %508, %507 : vector<16x64xf32>
    %cst_164 = arith.constant 1.000000e+00 : f32
    %510 = vector.broadcast %cst_164 : f32 to vector<16x64xf32>
    %511 = arith.subf %509, %510 : vector<16x64xf32>
    %512 = arith.mulf %504, %490 : vector<16x64xf32>
    %513 = arith.mulf %505, %511 : vector<16x64xf32>
    %514 = arith.addf %512, %513 : vector<16x64xf32>
    %515 = math.tanh %514 : vector<16x64xf32>
    %516 = arith.mulf %506, %515 : vector<16x64xf32>
    %c6_165 = arith.constant 6 : index
    %c0_166 = arith.constant 0 : index
    %c0_167 = arith.constant 0 : index
    %517 = vector.load %arg8[%c6_165, %c0_166, %c0_167] : memref<7x16x256xbf16, #tpu.memory_space<vmem>>, vector<1x16x256xbf16>
    %518 = vector.shape_cast %517 : vector<1x16x256xbf16> to vector<16x256xbf16>
    %519 = arith.extf %518 : vector<16x256xbf16> to vector<16x256xf32>
    %520 = arith.truncf %516 : vector<16x64xf32> to vector<16x64xbf16>
    %cst_168 = arith.constant dense<0.000000e+00> : vector<16x256xf32>
    %521 = tpu.matmul %520, %1, %cst_168 {dimension_numbers = #tpu.dot_dimension_numbers<[1], [0], [0], [1], [0, 0, 1, 1], [], []>} : vector<16x64xbf16>, vector<64x256xbf16>, vector<16x256xf32> -> vector<16x256xf32>
    %522 = arith.addf %519, %521 : vector<16x256xf32>
    %523 = arith.negf %522 : vector<16x256xf32>
    %524 = math.exp %523 : vector<16x256xf32>
    %cst_169 = arith.constant 1.000000e+00 : f32
    %525 = vector.broadcast %cst_169 : f32 to vector<16x256xf32>
    %526 = arith.addf %525, %524 : vector<16x256xf32>
    %527 = arith.divf %525, %526 : vector<16x256xf32>
    %528 = vector.extract_strided_slice %527 {offsets = [0, 0], sizes = [16, 64], strides = [1, 1]} : vector<16x256xf32> to vector<16x64xf32>
    %529 = vector.extract_strided_slice %527 {offsets = [0, 64], sizes = [16, 64], strides = [1, 1]} : vector<16x256xf32> to vector<16x64xf32>
    %530 = vector.extract_strided_slice %527 {offsets = [0, 128], sizes = [16, 64], strides = [1, 1]} : vector<16x256xf32> to vector<16x64xf32>
    %531 = vector.extract_strided_slice %527 {offsets = [0, 192], sizes = [16, 64], strides = [1, 1]} : vector<16x256xf32> to vector<16x64xf32>
    %cst_170 = arith.constant 2.000000e+00 : f32
    %532 = vector.broadcast %cst_170 : f32 to vector<16x64xf32>
    %533 = arith.mulf %532, %531 : vector<16x64xf32>
    %cst_171 = arith.constant 1.000000e+00 : f32
    %534 = vector.broadcast %cst_171 : f32 to vector<16x64xf32>
    %535 = arith.subf %533, %534 : vector<16x64xf32>
    %536 = arith.mulf %528, %514 : vector<16x64xf32>
    %537 = arith.mulf %529, %535 : vector<16x64xf32>
    %538 = arith.addf %536, %537 : vector<16x64xf32>
    %539 = math.tanh %538 : vector<16x64xf32>
    %540 = arith.mulf %530, %539 : vector<16x64xf32>
    %c0_172 = arith.constant 0 : index
    %c0_173 = arith.constant 0 : index
    %c0_174 = arith.constant 0 : index
    %541 = vector.load %arg9[%c0_172, %c0_173, %c0_174] : memref<7x16x256xbf16, #tpu.memory_space<vmem>>, vector<1x16x256xbf16>
    %542 = vector.shape_cast %541 : vector<1x16x256xbf16> to vector<16x256xbf16>
    %543 = arith.extf %542 : vector<16x256xbf16> to vector<16x256xf32>
    %544 = arith.truncf %540 : vector<16x64xf32> to vector<16x64xbf16>
    %cst_175 = arith.constant dense<0.000000e+00> : vector<16x256xf32>
    %545 = tpu.matmul %544, %1, %cst_175 {dimension_numbers = #tpu.dot_dimension_numbers<[1], [0], [0], [1], [0, 0, 1, 1], [], []>} : vector<16x64xbf16>, vector<64x256xbf16>, vector<16x256xf32> -> vector<16x256xf32>
    %546 = arith.addf %543, %545 : vector<16x256xf32>
    %547 = arith.negf %546 : vector<16x256xf32>
    %548 = math.exp %547 : vector<16x256xf32>
    %cst_176 = arith.constant 1.000000e+00 : f32
    %549 = vector.broadcast %cst_176 : f32 to vector<16x256xf32>
    %550 = arith.addf %549, %548 : vector<16x256xf32>
    %551 = arith.divf %549, %550 : vector<16x256xf32>
    %552 = vector.extract_strided_slice %551 {offsets = [0, 0], sizes = [16, 64], strides = [1, 1]} : vector<16x256xf32> to vector<16x64xf32>
    %553 = vector.extract_strided_slice %551 {offsets = [0, 64], sizes = [16, 64], strides = [1, 1]} : vector<16x256xf32> to vector<16x64xf32>
    %554 = vector.extract_strided_slice %551 {offsets = [0, 128], sizes = [16, 64], strides = [1, 1]} : vector<16x256xf32> to vector<16x64xf32>
    %555 = vector.extract_strided_slice %551 {offsets = [0, 192], sizes = [16, 64], strides = [1, 1]} : vector<16x256xf32> to vector<16x64xf32>
    %cst_177 = arith.constant 2.000000e+00 : f32
    %556 = vector.broadcast %cst_177 : f32 to vector<16x64xf32>
    %557 = arith.mulf %556, %555 : vector<16x64xf32>
    %cst_178 = arith.constant 1.000000e+00 : f32
    %558 = vector.broadcast %cst_178 : f32 to vector<16x64xf32>
    %559 = arith.subf %557, %558 : vector<16x64xf32>
    %560 = arith.mulf %552, %538 : vector<16x64xf32>
    %561 = arith.mulf %553, %559 : vector<16x64xf32>
    %562 = arith.addf %560, %561 : vector<16x64xf32>
    %563 = math.tanh %562 : vector<16x64xf32>
    %564 = arith.mulf %554, %563 : vector<16x64xf32>
    %c1_179 = arith.constant 1 : index
    %c0_180 = arith.constant 0 : index
    %c0_181 = arith.constant 0 : index
    %565 = vector.load %arg9[%c1_179, %c0_180, %c0_181] : memref<7x16x256xbf16, #tpu.memory_space<vmem>>, vector<1x16x256xbf16>
    %566 = vector.shape_cast %565 : vector<1x16x256xbf16> to vector<16x256xbf16>
    %567 = arith.extf %566 : vector<16x256xbf16> to vector<16x256xf32>
    %568 = arith.truncf %564 : vector<16x64xf32> to vector<16x64xbf16>
    %cst_182 = arith.constant dense<0.000000e+00> : vector<16x256xf32>
    %569 = tpu.matmul %568, %1, %cst_182 {dimension_numbers = #tpu.dot_dimension_numbers<[1], [0], [0], [1], [0, 0, 1, 1], [], []>} : vector<16x64xbf16>, vector<64x256xbf16>, vector<16x256xf32> -> vector<16x256xf32>
    %570 = arith.addf %567, %569 : vector<16x256xf32>
    %571 = arith.negf %570 : vector<16x256xf32>
    %572 = math.exp %571 : vector<16x256xf32>
    %cst_183 = arith.constant 1.000000e+00 : f32
    %573 = vector.broadcast %cst_183 : f32 to vector<16x256xf32>
    %574 = arith.addf %573, %572 : vector<16x256xf32>
    %575 = arith.divf %573, %574 : vector<16x256xf32>
    %576 = vector.extract_strided_slice %575 {offsets = [0, 0], sizes = [16, 64], strides = [1, 1]} : vector<16x256xf32> to vector<16x64xf32>
    %577 = vector.extract_strided_slice %575 {offsets = [0, 64], sizes = [16, 64], strides = [1, 1]} : vector<16x256xf32> to vector<16x64xf32>
    %578 = vector.extract_strided_slice %575 {offsets = [0, 128], sizes = [16, 64], strides = [1, 1]} : vector<16x256xf32> to vector<16x64xf32>
    %579 = vector.extract_strided_slice %575 {offsets = [0, 192], sizes = [16, 64], strides = [1, 1]} : vector<16x256xf32> to vector<16x64xf32>
    %cst_184 = arith.constant 2.000000e+00 : f32
    %580 = vector.broadcast %cst_184 : f32 to vector<16x64xf32>
    %581 = arith.mulf %580, %579 : vector<16x64xf32>
    %cst_185 = arith.constant 1.000000e+00 : f32
    %582 = vector.broadcast %cst_185 : f32 to vector<16x64xf32>
    %583 = arith.subf %581, %582 : vector<16x64xf32>
    %584 = arith.mulf %576, %562 : vector<16x64xf32>
    %585 = arith.mulf %577, %583 : vector<16x64xf32>
    %586 = arith.addf %584, %585 : vector<16x64xf32>
    %587 = math.tanh %586 : vector<16x64xf32>
    %588 = arith.mulf %578, %587 : vector<16x64xf32>
    %c2_186 = arith.constant 2 : index
    %c0_187 = arith.constant 0 : index
    %c0_188 = arith.constant 0 : index
    %589 = vector.load %arg9[%c2_186, %c0_187, %c0_188] : memref<7x16x256xbf16, #tpu.memory_space<vmem>>, vector<1x16x256xbf16>
    %590 = vector.shape_cast %589 : vector<1x16x256xbf16> to vector<16x256xbf16>
    %591 = arith.extf %590 : vector<16x256xbf16> to vector<16x256xf32>
    %592 = arith.truncf %588 : vector<16x64xf32> to vector<16x64xbf16>
    %cst_189 = arith.constant dense<0.000000e+00> : vector<16x256xf32>
    %593 = tpu.matmul %592, %1, %cst_189 {dimension_numbers = #tpu.dot_dimension_numbers<[1], [0], [0], [1], [0, 0, 1, 1], [], []>} : vector<16x64xbf16>, vector<64x256xbf16>, vector<16x256xf32> -> vector<16x256xf32>
    %594 = arith.addf %591, %593 : vector<16x256xf32>
    %595 = arith.negf %594 : vector<16x256xf32>
    %596 = math.exp %595 : vector<16x256xf32>
    %cst_190 = arith.constant 1.000000e+00 : f32
    %597 = vector.broadcast %cst_190 : f32 to vector<16x256xf32>
    %598 = arith.addf %597, %596 : vector<16x256xf32>
    %599 = arith.divf %597, %598 : vector<16x256xf32>
    %600 = vector.extract_strided_slice %599 {offsets = [0, 0], sizes = [16, 64], strides = [1, 1]} : vector<16x256xf32> to vector<16x64xf32>
    %601 = vector.extract_strided_slice %599 {offsets = [0, 64], sizes = [16, 64], strides = [1, 1]} : vector<16x256xf32> to vector<16x64xf32>
    %602 = vector.extract_strided_slice %599 {offsets = [0, 128], sizes = [16, 64], strides = [1, 1]} : vector<16x256xf32> to vector<16x64xf32>
    %603 = vector.extract_strided_slice %599 {offsets = [0, 192], sizes = [16, 64], strides = [1, 1]} : vector<16x256xf32> to vector<16x64xf32>
    %cst_191 = arith.constant 2.000000e+00 : f32
    %604 = vector.broadcast %cst_191 : f32 to vector<16x64xf32>
    %605 = arith.mulf %604, %603 : vector<16x64xf32>
    %cst_192 = arith.constant 1.000000e+00 : f32
    %606 = vector.broadcast %cst_192 : f32 to vector<16x64xf32>
    %607 = arith.subf %605, %606 : vector<16x64xf32>
    %608 = arith.mulf %600, %586 : vector<16x64xf32>
    %609 = arith.mulf %601, %607 : vector<16x64xf32>
    %610 = arith.addf %608, %609 : vector<16x64xf32>
    %611 = math.tanh %610 : vector<16x64xf32>
    %612 = arith.mulf %602, %611 : vector<16x64xf32>
    %c3_193 = arith.constant 3 : index
    %c0_194 = arith.constant 0 : index
    %c0_195 = arith.constant 0 : index
    %613 = vector.load %arg9[%c3_193, %c0_194, %c0_195] : memref<7x16x256xbf16, #tpu.memory_space<vmem>>, vector<1x16x256xbf16>
    %614 = vector.shape_cast %613 : vector<1x16x256xbf16> to vector<16x256xbf16>
    %615 = arith.extf %614 : vector<16x256xbf16> to vector<16x256xf32>
    %616 = arith.truncf %612 : vector<16x64xf32> to vector<16x64xbf16>
    %cst_196 = arith.constant dense<0.000000e+00> : vector<16x256xf32>
    %617 = tpu.matmul %616, %1, %cst_196 {dimension_numbers = #tpu.dot_dimension_numbers<[1], [0], [0], [1], [0, 0, 1, 1], [], []>} : vector<16x64xbf16>, vector<64x256xbf16>, vector<16x256xf32> -> vector<16x256xf32>
    %618 = arith.addf %615, %617 : vector<16x256xf32>
    %619 = arith.negf %618 : vector<16x256xf32>
    %620 = math.exp %619 : vector<16x256xf32>
    %cst_197 = arith.constant 1.000000e+00 : f32
    %621 = vector.broadcast %cst_197 : f32 to vector<16x256xf32>
    %622 = arith.addf %621, %620 : vector<16x256xf32>
    %623 = arith.divf %621, %622 : vector<16x256xf32>
    %624 = vector.extract_strided_slice %623 {offsets = [0, 0], sizes = [16, 64], strides = [1, 1]} : vector<16x256xf32> to vector<16x64xf32>
    %625 = vector.extract_strided_slice %623 {offsets = [0, 64], sizes = [16, 64], strides = [1, 1]} : vector<16x256xf32> to vector<16x64xf32>
    %626 = vector.extract_strided_slice %623 {offsets = [0, 128], sizes = [16, 64], strides = [1, 1]} : vector<16x256xf32> to vector<16x64xf32>
    %627 = vector.extract_strided_slice %623 {offsets = [0, 192], sizes = [16, 64], strides = [1, 1]} : vector<16x256xf32> to vector<16x64xf32>
    %cst_198 = arith.constant 2.000000e+00 : f32
    %628 = vector.broadcast %cst_198 : f32 to vector<16x64xf32>
    %629 = arith.mulf %628, %627 : vector<16x64xf32>
    %cst_199 = arith.constant 1.000000e+00 : f32
    %630 = vector.broadcast %cst_199 : f32 to vector<16x64xf32>
    %631 = arith.subf %629, %630 : vector<16x64xf32>
    %632 = arith.mulf %624, %610 : vector<16x64xf32>
    %633 = arith.mulf %625, %631 : vector<16x64xf32>
    %634 = arith.addf %632, %633 : vector<16x64xf32>
    %635 = math.tanh %634 : vector<16x64xf32>
    %636 = arith.mulf %626, %635 : vector<16x64xf32>
    %c4_200 = arith.constant 4 : index
    %c0_201 = arith.constant 0 : index
    %c0_202 = arith.constant 0 : index
    %637 = vector.load %arg9[%c4_200, %c0_201, %c0_202] : memref<7x16x256xbf16, #tpu.memory_space<vmem>>, vector<1x16x256xbf16>
    %638 = vector.shape_cast %637 : vector<1x16x256xbf16> to vector<16x256xbf16>
    %639 = arith.extf %638 : vector<16x256xbf16> to vector<16x256xf32>
    %640 = arith.truncf %636 : vector<16x64xf32> to vector<16x64xbf16>
    %cst_203 = arith.constant dense<0.000000e+00> : vector<16x256xf32>
    %641 = tpu.matmul %640, %1, %cst_203 {dimension_numbers = #tpu.dot_dimension_numbers<[1], [0], [0], [1], [0, 0, 1, 1], [], []>} : vector<16x64xbf16>, vector<64x256xbf16>, vector<16x256xf32> -> vector<16x256xf32>
    %642 = arith.addf %639, %641 : vector<16x256xf32>
    %643 = arith.negf %642 : vector<16x256xf32>
    %644 = math.exp %643 : vector<16x256xf32>
    %cst_204 = arith.constant 1.000000e+00 : f32
    %645 = vector.broadcast %cst_204 : f32 to vector<16x256xf32>
    %646 = arith.addf %645, %644 : vector<16x256xf32>
    %647 = arith.divf %645, %646 : vector<16x256xf32>
    %648 = vector.extract_strided_slice %647 {offsets = [0, 0], sizes = [16, 64], strides = [1, 1]} : vector<16x256xf32> to vector<16x64xf32>
    %649 = vector.extract_strided_slice %647 {offsets = [0, 64], sizes = [16, 64], strides = [1, 1]} : vector<16x256xf32> to vector<16x64xf32>
    %650 = vector.extract_strided_slice %647 {offsets = [0, 128], sizes = [16, 64], strides = [1, 1]} : vector<16x256xf32> to vector<16x64xf32>
    %651 = vector.extract_strided_slice %647 {offsets = [0, 192], sizes = [16, 64], strides = [1, 1]} : vector<16x256xf32> to vector<16x64xf32>
    %cst_205 = arith.constant 2.000000e+00 : f32
    %652 = vector.broadcast %cst_205 : f32 to vector<16x64xf32>
    %653 = arith.mulf %652, %651 : vector<16x64xf32>
    %cst_206 = arith.constant 1.000000e+00 : f32
    %654 = vector.broadcast %cst_206 : f32 to vector<16x64xf32>
    %655 = arith.subf %653, %654 : vector<16x64xf32>
    %656 = arith.mulf %648, %634 : vector<16x64xf32>
    %657 = arith.mulf %649, %655 : vector<16x64xf32>
    %658 = arith.addf %656, %657 : vector<16x64xf32>
    %659 = math.tanh %658 : vector<16x64xf32>
    %660 = arith.mulf %650, %659 : vector<16x64xf32>
    %c5_207 = arith.constant 5 : index
    %c0_208 = arith.constant 0 : index
    %c0_209 = arith.constant 0 : index
    %661 = vector.load %arg9[%c5_207, %c0_208, %c0_209] : memref<7x16x256xbf16, #tpu.memory_space<vmem>>, vector<1x16x256xbf16>
    %662 = vector.shape_cast %661 : vector<1x16x256xbf16> to vector<16x256xbf16>
    %663 = arith.extf %662 : vector<16x256xbf16> to vector<16x256xf32>
    %664 = arith.truncf %660 : vector<16x64xf32> to vector<16x64xbf16>
    %cst_210 = arith.constant dense<0.000000e+00> : vector<16x256xf32>
    %665 = tpu.matmul %664, %1, %cst_210 {dimension_numbers = #tpu.dot_dimension_numbers<[1], [0], [0], [1], [0, 0, 1, 1], [], []>} : vector<16x64xbf16>, vector<64x256xbf16>, vector<16x256xf32> -> vector<16x256xf32>
    %666 = arith.addf %663, %665 : vector<16x256xf32>
    %667 = arith.negf %666 : vector<16x256xf32>
    %668 = math.exp %667 : vector<16x256xf32>
    %cst_211 = arith.constant 1.000000e+00 : f32
    %669 = vector.broadcast %cst_211 : f32 to vector<16x256xf32>
    %670 = arith.addf %669, %668 : vector<16x256xf32>
    %671 = arith.divf %669, %670 : vector<16x256xf32>
    %672 = vector.extract_strided_slice %671 {offsets = [0, 0], sizes = [16, 64], strides = [1, 1]} : vector<16x256xf32> to vector<16x64xf32>
    %673 = vector.extract_strided_slice %671 {offsets = [0, 64], sizes = [16, 64], strides = [1, 1]} : vector<16x256xf32> to vector<16x64xf32>
    %674 = vector.extract_strided_slice %671 {offsets = [0, 128], sizes = [16, 64], strides = [1, 1]} : vector<16x256xf32> to vector<16x64xf32>
    %675 = vector.extract_strided_slice %671 {offsets = [0, 192], sizes = [16, 64], strides = [1, 1]} : vector<16x256xf32> to vector<16x64xf32>
    %cst_212 = arith.constant 2.000000e+00 : f32
    %676 = vector.broadcast %cst_212 : f32 to vector<16x64xf32>
    %677 = arith.mulf %676, %675 : vector<16x64xf32>
    %cst_213 = arith.constant 1.000000e+00 : f32
    %678 = vector.broadcast %cst_213 : f32 to vector<16x64xf32>
    %679 = arith.subf %677, %678 : vector<16x64xf32>
    %680 = arith.mulf %672, %658 : vector<16x64xf32>
    %681 = arith.mulf %673, %679 : vector<16x64xf32>
    %682 = arith.addf %680, %681 : vector<16x64xf32>
    %683 = math.tanh %682 : vector<16x64xf32>
    %684 = arith.mulf %674, %683 : vector<16x64xf32>
    %c6_214 = arith.constant 6 : index
    %c0_215 = arith.constant 0 : index
    %c0_216 = arith.constant 0 : index
    %685 = vector.load %arg9[%c6_214, %c0_215, %c0_216] : memref<7x16x256xbf16, #tpu.memory_space<vmem>>, vector<1x16x256xbf16>
    %686 = vector.shape_cast %685 : vector<1x16x256xbf16> to vector<16x256xbf16>
    %687 = arith.extf %686 : vector<16x256xbf16> to vector<16x256xf32>
    %688 = arith.truncf %684 : vector<16x64xf32> to vector<16x64xbf16>
    %cst_217 = arith.constant dense<0.000000e+00> : vector<16x256xf32>
    %689 = tpu.matmul %688, %1, %cst_217 {dimension_numbers = #tpu.dot_dimension_numbers<[1], [0], [0], [1], [0, 0, 1, 1], [], []>} : vector<16x64xbf16>, vector<64x256xbf16>, vector<16x256xf32> -> vector<16x256xf32>
    %690 = arith.addf %687, %689 : vector<16x256xf32>
    %691 = arith.negf %690 : vector<16x256xf32>
    %692 = math.exp %691 : vector<16x256xf32>
    %cst_218 = arith.constant 1.000000e+00 : f32
    %693 = vector.broadcast %cst_218 : f32 to vector<16x256xf32>
    %694 = arith.addf %693, %692 : vector<16x256xf32>
    %695 = arith.divf %693, %694 : vector<16x256xf32>
    %696 = vector.extract_strided_slice %695 {offsets = [0, 0], sizes = [16, 64], strides = [1, 1]} : vector<16x256xf32> to vector<16x64xf32>
    %697 = vector.extract_strided_slice %695 {offsets = [0, 64], sizes = [16, 64], strides = [1, 1]} : vector<16x256xf32> to vector<16x64xf32>
    %698 = vector.extract_strided_slice %695 {offsets = [0, 128], sizes = [16, 64], strides = [1, 1]} : vector<16x256xf32> to vector<16x64xf32>
    %699 = vector.extract_strided_slice %695 {offsets = [0, 192], sizes = [16, 64], strides = [1, 1]} : vector<16x256xf32> to vector<16x64xf32>
    %cst_219 = arith.constant 2.000000e+00 : f32
    %700 = vector.broadcast %cst_219 : f32 to vector<16x64xf32>
    %701 = arith.mulf %700, %699 : vector<16x64xf32>
    %cst_220 = arith.constant 1.000000e+00 : f32
    %702 = vector.broadcast %cst_220 : f32 to vector<16x64xf32>
    %703 = arith.subf %701, %702 : vector<16x64xf32>
    %704 = arith.mulf %696, %682 : vector<16x64xf32>
    %705 = arith.mulf %697, %703 : vector<16x64xf32>
    %706 = arith.addf %704, %705 : vector<16x64xf32>
    %707 = math.tanh %706 : vector<16x64xf32>
    %708 = arith.mulf %698, %707 : vector<16x64xf32>
    %c0_221 = arith.constant 0 : index
    %c0_222 = arith.constant 0 : index
    %709 = vector.load %arg5[%c0_221, %c0_222] : memref<64x128xf32, #tpu.memory_space<vmem>>, vector<64x128xf32>
    %cst_223 = arith.constant dense<0.000000e+00> : vector<16x128xf32>
    %710 = tpu.matmul %708, %709, %cst_223 {dimension_numbers = #tpu.dot_dimension_numbers<[1], [0], [0], [1], [0, 0, 1, 1], [], []>} : vector<16x64xf32>, vector<64x128xf32>, vector<16x128xf32> -> vector<16x128xf32>
    %c0_224 = arith.constant 0 : index
    %c0_225 = arith.constant 0 : index
    %711 = vector.load %arg6[%c0_224, %c0_225] : memref<1x128xf32, #tpu.memory_space<vmem>>, vector<1x128xf32>
    %712 = vector.broadcast %711 : vector<1x128xf32> to vector<16x128xf32>
    %713 = arith.addf %710, %712 : vector<16x128xf32>
    %cst_226 = arith.constant dense<0xFF800000> : vector<16xf32>
    %714 = vector.multi_reduction <maximumf>, %713, %cst_226 [1] : vector<16x128xf32> to vector<16xf32>
    %715 = vector.shape_cast %714 : vector<16xf32> to vector<16x1xf32>
    %716 = vector.broadcast %715 : vector<16x1xf32> to vector<16x128xf32>
    %717 = arith.subf %713, %716 : vector<16x128xf32>
    %718 = math.exp %717 : vector<16x128xf32>
    %cst_227 = arith.constant dense<0.000000e+00> : vector<16xf32>
    %719 = vector.multi_reduction <add>, %718, %cst_227 [1] : vector<16x128xf32> to vector<16xf32>
    %720 = vector.shape_cast %719 : vector<16xf32> to vector<16x1xf32>
    %721 = vector.broadcast %720 : vector<16x1xf32> to vector<16x128xf32>
    %722 = arith.divf %718, %721 : vector<16x128xf32>
    %c0_228 = arith.constant 0 : index
    %c0_229 = arith.constant 0 : index
    %723 = vector.load %arg7[%c0_228, %c0_229] : memref<16x128xf32, #tpu.memory_space<vmem>>, vector<16x128xf32>
    tpu.vector_store %arg7[%c0_228, %c0_229], %722 {strides = array<i32>} : memref<16x128xf32, #tpu.memory_space<vmem>>, vector<16x128xf32>,
    return
  }
  func.func @transform_0(%arg0: i32) -> (i32, i32, i32) {
    %c0_i32 = arith.constant 0 : i32
    %c0_i32_0 = arith.constant 0 : i32
    %c0_i32_1 = arith.constant 0 : i32
    return %c0_i32, %arg0, %c0_i32_0 : i32, i32, i32
  }
  func.func @transform_1(%arg0: i32) -> (i32, i32) {
    %c0_i32 = arith.constant 0 : i32
    %c0_i32_0 = arith.constant 0 : i32
    %c0_i32_1 = arith.constant 0 : i32
    return %c0_i32, %c0_i32_0 : i32, i32
  }
  func.func @transform_2(%arg0: i32) -> (i32, i32) {
    %c0_i32 = arith.constant 0 : i32
    %c0_i32_0 = arith.constant 0 : i32
    %c0_i32_1 = arith.constant 0 : i32
    return %c0_i32, %c0_i32_0 : i32, i32
  }
  func.func @transform_3(%arg0: i32) -> (i32, i32) {
    %c0_i32 = arith.constant 0 : i32
    %c0_i32_0 = arith.constant 0 : i32
    %c0_i32_1 = arith.constant 0 : i32
    return %c0_i32, %c0_i32_0 : i32, i32
  }
  func.func @transform_4(%arg0: i32) -> (i32, i32) {
    %c0_i32 = arith.constant 0 : i32
    %c0_i32_0 = arith.constant 0 : i32
    %c0_i32_1 = arith.constant 0 : i32
    return %c0_i32, %c0_i32_0 : i32, i32
  }
  func.func @transform_5(%arg0: i32) -> (i32, i32) {
    %c0_i32 = arith.constant 0 : i32
    %c0_i32_0 = arith.constant 0 : i32
    %c0_i32_1 = arith.constant 0 : i32
    return %c0_i32, %c0_i32_0 : i32, i32
  }
  func.func @transform_6(%arg0: i32) -> (i32, i32) {
    %c0_i32 = arith.constant 0 : i32
    %c0_i32_0 = arith.constant 0 : i32
    return %arg0, %c0_i32 : i32, i32
  }
}

</mosaic_0001>

<llo_original>
// kernel: lstm_forward.1
$region0: #{lstm_forward.1}
  #allocation0 [shape = 'u32[]', space=smem, size = 0x4, offset = 0x4, fixed_abs, tag = 'smem constant byte address 0x4 - core index']
  #allocation1 [shape = 'u32[72,128]{1,0:T(1,128)}', space=vmem, size = 0x9000, scoped, tag = 'internal scratch']
  #allocation2 [shape = 'bf16[7,16,256]{2,1,0:T(8,128)(2,1)}', space=vmem, size = 0xe000, scoped, tag = 'scratch operand']
  #allocation3 [shape = 'bf16[7,16,256]{2,1,0:T(8,128)(2,1)}', space=vmem, size = 0xe000, scoped, tag = 'scratch operand']
  %s0 = inlined_call_operand.vmem [shape: bf16[28,16,28], index: 0, kind: input, shape index: {}]
  %s1 = inlined_call_operand.vmem [shape: bf16[28,256], index: 1, kind: input, shape index: {}]
  %s2 = inlined_call_operand.vmem [shape: bf16[64,256], index: 2, kind: input, shape index: {}]
  %s3 = inlined_call_operand.vmem [shape: f32[1,256], index: 3, kind: input, shape index: {}]
  %s4 = inlined_call_operand.vmem [shape: f32[64,128], index: 4, kind: input, shape index: {}]
  %s5 = inlined_call_operand.vmem [shape: f32[1,128], index: 5, kind: input, shape index: {}]
  %s6 = inlined_call_operand.vmem [shape: f32[16,128], index: 6, kind: output, shape index: {}]
  %s7 = sld [smem:[#allocation0]]
  $region34: #{lstm_forward.1} parent=0
    _
  %s9 = ssub.s32 1, %s7
  %s10 = scalar_select 0, %s9, %s7
  // Predicated region
  $region2: #{lstm_forward.1} parent=0 // pred_check
    _
  $region3: #{lstm_forward.1} parent=0 // pred_check_branch
    %12 = sbr.rel (0) target = $region5
  $region4: #{lstm_forward.1} parent=0 // pred_region
    _
  $region5: #{lstm_forward.1} parent=0 // pred_fallthru
    _
  // Predicated region
  $region6: #{lstm_forward.1} parent=0 // pred_check
    _
  $region7: #{lstm_forward.1} parent=0 // pred_check_branch
    %14 = sbr.rel (0) target = $region9
  $region8: #{lstm_forward.1} parent=0 // pred_region
    _
  $region9: #{lstm_forward.1} parent=0 // pred_fallthru
    _
  // Predicated region
  $region10: #{lstm_forward.1} parent=0 // pred_check
    _
  $region11: #{lstm_forward.1} parent=0 // pred_check_branch
    %16 = sbr.rel (0) target = $region13
  $region12: #{lstm_forward.1} parent=0 // pred_region
    _
  $region13: #{lstm_forward.1} parent=0 // pred_fallthru
    _
  // Predicated region
  $region14: #{lstm_forward.1} parent=0 // pred_check
    _
  $region15: #{lstm_forward.1} parent=0 // pred_check_branch
    %18 = sbr.rel (0) target = $region17
  $region16: #{lstm_forward.1} parent=0 // pred_region
    _
  $region17: #{lstm_forward.1} parent=0 // pred_fallthru
    _
  // Predicated region
  $region18: #{lstm_forward.1} parent=0 // pred_check
    _
  $region19: #{lstm_forward.1} parent=0 // pred_check_branch
    %20 = sbr.rel (0) target = $region21
  $region20: #{lstm_forward.1} parent=0 // pred_region
    _
  $region21: #{lstm_forward.1} parent=0 // pred_fallthru
    _
  // Predicated region
  $region22: #{lstm_forward.1} parent=0 // pred_check
    _
  $region23: #{lstm_forward.1} parent=0 // pred_check_branch
    %22 = sbr.rel (0) target = $region25
  $region24: #{lstm_forward.1} parent=0 // pred_region
    _
  $region25: #{lstm_forward.1} parent=0 // pred_fallthru
    _
  %v24 = vld [vmem:[%s1] sm:$0xff]
  %v25 = vld [vmem:[%s1 + $0x8] sm:$0xff]
  %v26 = vld [vmem:[%s1 + $0x10] sm:$0xff]
  %v27 = vld [vmem:[%s1 + $0x18] sm:$0x33]
  %v28 = vld [vmem:[%s2] sm:$0xff]
  %v29 = vld [vmem:[%s2 + $0x8] sm:$0xff]
  %v30 = vld [vmem:[%s2 + $0x10] sm:$0xff]
  %v31 = vld [vmem:[%s2 + $0x18] sm:$0xff]
  %v32 = vld [vmem:[%s2 + $0x20] sm:$0xff]
  %v33 = vld [vmem:[%s2 + $0x28] sm:$0xff]
  %v34 = vld [vmem:[%s2 + $0x30] sm:$0xff]
  %v35 = vld [vmem:[%s2 + $0x38] sm:$0xff]
  %v36 = vld [vmem:[%s3] sm:$0x3]
  %v37 = vld [vmem:[%s0] sm:$0xf]
  %v38 = vld [vmem:[%s0 + $0x4] sm:$0xf]
  %v39 = vld [vmem:[%s0 + $0x8] sm:$0xf]
  %v40 = vld [vmem:[%s0 + $0xc] sm:$0xf]
  %v41 = vld [vmem:[%s0 + $0x10] sm:$0xf]
  %v42 = vld [vmem:[%s0 + $0x14] sm:$0xf]
  %v43 = vld [vmem:[%s0 + $0x18] sm:$0xf]
  %v44 = vld [vmem:[%s0 + $0x1c] sm:$0xf]
  %v45 = vld [vmem:[%s0 + $0x20] sm:$0xf]
  %v46 = vld [vmem:[%s0 + $0x24] sm:$0xf]
  %v47 = vld [vmem:[%s0 + $0x28] sm:$0xf]
  %v48 = vld [vmem:[%s0 + $0x2c] sm:$0xf]
  %v49 = vld [vmem:[%s0 + $0x30] sm:$0xf]
  %v50 = vld [vmem:[%s0 + $0x34] sm:$0xf]
  %v52 = vperm.slane %v36, 0
  %v53 = vperm.slane %v36, 1
  %v70 = vunpack.c.l.b16 %v37
  %v71 = vunpack.c.l.b16 %v38
  %v72 = vunpack.c.l.b16 %v39
  %v73 = vunpack.c.l.b16 %v40
  %v74 = vunpack.c.l.b16 %v41
  %v75 = vunpack.c.l.b16 %v42
  %v76 = vunpack.c.l.b16 %v43
  %v77 = vunpack.c.l.b16 %v44
  %v78 = vunpack.c.l.b16 %v45
  %v79 = vunpack.c.l.b16 %v46
  %v80 = vunpack.c.l.b16 %v47
  %v81 = vunpack.c.l.b16 %v48
  %v82 = vunpack.c.l.b16 %v49
  %v83 = vunpack.c.l.b16 %v50
  %v84 = vpack.c.b16 %v71, %v70
  %v85 = vpack.c.b16 %v73, %v72
  %v86 = vpack.c.b16 %v75, %v74
  %v87 = vpack.c.b16 %v77, %v76
  %v88 = vpack.c.b16 %v79, %v78
  %v89 = vpack.c.b16 %v81, %v80
  %v90 = vpack.c.b16 %v83, %v82
  %v95 = vunpack.c.l.b16 %v24
  %v96 = vunpack.c.h.b16 %v24
  %v97 = vunpack.c.l.b16 %v25
  %v98 = vunpack.c.h.b16 %v25
  %v99 = vunpack.c.l.b16 %v26
  %v100 = vunpack.c.h.b16 %v26
  %v101 = vunpack.c.l.b16 %v27
  %v102 = vunpack.c.h.b16 %v27
  %v103 = vpack.c.b16 %v97, %v95
  %v104 = vpack.c.b16 %v98, %v96
  %v105 = vpack.c.b16 %v101, %v99
  %v106 = vpack.c.b16 %v102, %v100
  %vm109 = vcmask 228352
  %v111 = vsel %vm109, %v84, 0
  %v114 = vsel %vm109, %v85, 0
  %v117 = vsel %vm109, %v86, 0
  %v120 = vsel %vm109, %v87, 0
  %v123 = vsel %vm109, %v88, 0
  %v126 = vsel %vm109, %v89, 0
  %v129 = vsel %vm109, %v90, 0
  %vm131 = vcmask 1045504
  %v133 = vsel %vm131, %v105, 0
  %v136 = vsel %vm131, %v106, 0
  %138 = vmatpush.bf16.msra.mxu0 0
  %139 = vmatpush.bf16.msra.mxu0 0
  %140 = vmatpush.bf16.msra.mxu0 0
  %141 = vmatpush.bf16.msra.mxu0 0
  %142 = vmatpush.bf16.msra.mxu0 0
  %143 = vmatpush.bf16.msra.mxu0 0
  %144 = vmatpush.bf16.msra.mxu0 %v133
  %145 = vmatpush.bf16.msra.mxu0 %v103
  %146 = vmatmul.bf16.gmra.mxu0 %v111
  %v147 = vpop.f32.mrf.mxu0
  %v148 = vadd.f32 %v52, %v147
  %v149 = vpop.f32.mrf.mxu0
  %v150 = vadd.f32 %v52, %v149
  %151 = vmatmul.bf16.gmra.mxu0 %v114
  %v152 = vpop.f32.mrf.mxu0
  %v153 = vadd.f32 %v52, %v152
  %v154 = vpop.f32.mrf.mxu0
  %v155 = vadd.f32 %v52, %v154
  %156 = vmatmul.bf16.gmra.mxu0 %v117
  %v157 = vpop.f32.mrf.mxu0
  %v158 = vadd.f32 %v52, %v157
  %v159 = vpop.f32.mrf.mxu0
  %v160 = vadd.f32 %v52, %v159
  %161 = vmatmul.bf16.gmra.mxu0 %v120
  %v162 = vpop.f32.mrf.mxu0
  %v163 = vadd.f32 %v52, %v162
  %v164 = vpop.f32.mrf.mxu0
  %v165 = vadd.f32 %v52, %v164
  %166 = vmatmul.bf16.gmra.mxu0 %v123
  %v167 = vpop.f32.mrf.mxu0
  %v168 = vadd.f32 %v52, %v167
  %v169 = vpop.f32.mrf.mxu0
  %v170 = vadd.f32 %v52, %v169
  %171 = vmatmul.bf16.gmra.mxu0 %v126
  %v172 = vpop.f32.mrf.mxu0
  %v173 = vadd.f32 %v52, %v172
  %v174 = vpop.f32.mrf.mxu0
  %v175 = vadd.f32 %v52, %v174
  %176 = vmatmul.bf16.gmra.mxu0 %v129
  %v177 = vpop.f32.mrf.mxu0
  %v178 = vadd.f32 %v52, %v177
  %v179 = vpop.f32.mrf.mxu0
  %v180 = vadd.f32 %v52, %v179
  %181 = vdwg.mxu0
  %182 = vmatpush.bf16.msra.mxu0 0
  %183 = vmatpush.bf16.msra.mxu0 0
  %184 = vmatpush.bf16.msra.mxu0 0
  %185 = vmatpush.bf16.msra.mxu0 0
  %186 = vmatpush.bf16.msra.mxu0 0
  %187 = vmatpush.bf16.msra.mxu0 0
  %188 = vmatpush.bf16.msra.mxu0 %v136
  %189 = vmatpush.bf16.msra.mxu0 %v104
  %190 = vmatmul.bf16.gmra.mxu0 %v111
  %v191 = vpop.f32.mrf.mxu0
  %v192 = vadd.f32 %v53, %v191
  %v193 = vpop.f32.mrf.mxu0
  %v194 = vadd.f32 %v53, %v193
  %195 = vmatmul.bf16.gmra.mxu0 %v114
  %v196 = vpop.f32.mrf.mxu0
  %v197 = vadd.f32 %v53, %v196
  %v198 = vpop.f32.mrf.mxu0
  %v199 = vadd.f32 %v53, %v198
  %200 = vmatmul.bf16.gmra.mxu0 %v117
  %v201 = vpop.f32.mrf.mxu0
  %v202 = vadd.f32 %v53, %v201
  %v203 = vpop.f32.mrf.mxu0
  %v204 = vadd.f32 %v53, %v203
  %205 = vmatmul.bf16.gmra.mxu0 %v120
  %v206 = vpop.f32.mrf.mxu0
  %v207 = vadd.f32 %v53, %v206
  %v208 = vpop.f32.mrf.mxu0
  %v209 = vadd.f32 %v53, %v208
  %210 = vmatmul.bf16.gmra.mxu0 %v123
  %v211 = vpop.f32.mrf.mxu0
  %v212 = vadd.f32 %v53, %v211
  %v213 = vpop.f32.mrf.mxu0
  %v214 = vadd.f32 %v53, %v213
  %215 = vmatmul.bf16.gmra.mxu0 %v126
  %v216 = vpop.f32.mrf.mxu0
  %v217 = vadd.f32 %v53, %v216
  %v218 = vpop.f32.mrf.mxu0
  %v219 = vadd.f32 %v53, %v218
  %220 = vmatmul.bf16.gmra.mxu0 %v129
  %v221 = vpop.f32.mrf.mxu0
  %v222 = vadd.f32 %v53, %v221
  %v223 = vpop.f32.mrf.mxu0
  %v224 = vadd.f32 %v53, %v223
  %225 = vdwg.mxu0
  %v226 = vpack.c.bf16 %v192, %v148
  %v227 = vpack.c.bf16 %v194, %v150
  %v228 = vpack.c.bf16 %v197, %v153
  %v229 = vpack.c.bf16 %v199, %v155
  %v230 = vpack.c.bf16 %v202, %v158
  %v231 = vpack.c.bf16 %v204, %v160
  %v232 = vpack.c.bf16 %v207, %v163
  %v233 = vpack.c.bf16 %v209, %v165
  %v234 = vpack.c.bf16 %v212, %v168
  %v235 = vpack.c.bf16 %v214, %v170
  %v236 = vpack.c.bf16 %v217, %v173
  %v237 = vpack.c.bf16 %v219, %v175
  %v238 = vpack.c.bf16 %v222, %v178
  %v239 = vpack.c.bf16 %v224, %v180
  %240 = vst [vmem:[#allocation2] sm:$0xff] %v226
  %241 = vst [vmem:[#allocation2 + $0x8] sm:$0xff] %v227
  %242 = vst [vmem:[#allocation2 + $0x10] sm:$0xff] %v228
  %243 = vst [vmem:[#allocation2 + $0x18] sm:$0xff] %v229
  %244 = vst [vmem:[#allocation2 + $0x20] sm:$0xff] %v230
  %245 = vst [vmem:[#allocation2 + $0x28] sm:$0xff] %v231
  %246 = vst [vmem:[#allocation2 + $0x30] sm:$0xff] %v232
  %247 = vst [vmem:[#allocation2 + $0x38] sm:$0xff] %v233
  %248 = vst [vmem:[#allocation2 + $0x40] sm:$0xff] %v234
  %249 = vst [vmem:[#allocation2 + $0x48] sm:$0xff] %v235
  %250 = vst [vmem:[#allocation2 + $0x50] sm:$0xff] %v236
  %251 = vst [vmem:[#allocation2 + $0x58] sm:$0xff] %v237
  %252 = vst [vmem:[#allocation2 + $0x60] sm:$0xff] %v238
  %253 = vst [vmem:[#allocation2 + $0x68] sm:$0xff] %v239
  %s254 = scalar_lea.vmem %s0, 56
  %v255 = vld [vmem:[%s254] sm:$0xf]
  %v256 = vld [vmem:[%s254 + $0x4] sm:$0xf]
  %v257 = vld [vmem:[%s254 + $0x8] sm:$0xf]
  %v258 = vld [vmem:[%s254 + $0xc] sm:$0xf]
  %v259 = vld [vmem:[%s254 + $0x10] sm:$0xf]
  %v260 = vld [vmem:[%s254 + $0x14] sm:$0xf]
  %v261 = vld [vmem:[%s254 + $0x18] sm:$0xf]
  %v262 = vld [vmem:[%s254 + $0x1c] sm:$0xf]
  %v263 = vld [vmem:[%s254 + $0x20] sm:$0xf]
  %v264 = vld [vmem:[%s254 + $0x24] sm:$0xf]
  %v265 = vld [vmem:[%s254 + $0x28] sm:$0xf]
  %v266 = vld [vmem:[%s254 + $0x2c] sm:$0xf]
  %v267 = vld [vmem:[%s254 + $0x30] sm:$0xf]
  %v268 = vld [vmem:[%s254 + $0x34] sm:$0xf]
  %v283 = vunpack.c.l.b16 %v255
  %v284 = vunpack.c.l.b16 %v256
  %v285 = vunpack.c.l.b16 %v257
  %v286 = vunpack.c.l.b16 %v258
  %v287 = vunpack.c.l.b16 %v259
  %v288 = vunpack.c.l.b16 %v260
  %v289 = vunpack.c.l.b16 %v261
  %v290 = vunpack.c.l.b16 %v262
  %v291 = vunpack.c.l.b16 %v263
  %v292 = vunpack.c.l.b16 %v264
  %v293 = vunpack.c.l.b16 %v265
  %v294 = vunpack.c.l.b16 %v266
  %v295 = vunpack.c.l.b16 %v267
  %v296 = vunpack.c.l.b16 %v268
  %v297 = vpack.c.b16 %v284, %v283
  %v298 = vpack.c.b16 %v286, %v285
  %v299 = vpack.c.b16 %v288, %v287
  %v300 = vpack.c.b16 %v290, %v289
  %v301 = vpack.c.b16 %v292, %v291
  %v302 = vpack.c.b16 %v294, %v293
  %v303 = vpack.c.b16 %v296, %v295
  %v305 = vsel %vm109, %v297, 0
  %v308 = vsel %vm109, %v298, 0
  %v311 = vsel %vm109, %v299, 0
  %v314 = vsel %vm109, %v300, 0
  %v317 = vsel %vm109, %v301, 0
  %v320 = vsel %vm109, %v302, 0
  %v323 = vsel %vm109, %v303, 0
  %325 = vmatpush.bf16.msra.mxu0 0
  %326 = vmatpush.bf16.msra.mxu0 0
  %327 = vmatpush.bf16.msra.mxu0 0
  %328 = vmatpush.bf16.msra.mxu0 0
  %329 = vmatpush.bf16.msra.mxu0 0
  %330 = vmatpush.bf16.msra.mxu0 0
  %331 = vmatpush.bf16.msra.mxu0 %v133
  %332 = vmatpush.bf16.msra.mxu0 %v103
  %333 = vmatmul.bf16.gmra.mxu0 %v305
  %v334 = vpop.f32.mrf.mxu0
  %v335 = vadd.f32 %v52, %v334
  %v336 = vpop.f32.mrf.mxu0
  %v337 = vadd.f32 %v52, %v336
  %338 = vmatmul.bf16.gmra.mxu0 %v308
  %v339 = vpop.f32.mrf.mxu0
  %v340 = vadd.f32 %v52, %v339
  %v341 = vpop.f32.mrf.mxu0
  %v342 = vadd.f32 %v52, %v341
  %343 = vmatmul.bf16.gmra.mxu0 %v311
  %v344 = vpop.f32.mrf.mxu0
  %v345 = vadd.f32 %v52, %v344
  %v346 = vpop.f32.mrf.mxu0
  %v347 = vadd.f32 %v52, %v346
  %348 = vmatmul.bf16.gmra.mxu0 %v314
  %v349 = vpop.f32.mrf.mxu0
  %v350 = vadd.f32 %v52, %v349
  %v351 = vpop.f32.mrf.mxu0
  %v352 = vadd.f32 %v52, %v351
  %353 = vmatmul.bf16.gmra.mxu0 %v317
  %v354 = vpop.f32.mrf.mxu0
  %v355 = vadd.f32 %v52, %v354
  %v356 = vpop.f32.mrf.mxu0
  %v357 = vadd.f32 %v52, %v356
  %358 = vmatmul.bf16.gmra.mxu0 %v320
  %v359 = vpop.f32.mrf.mxu0
  %v360 = vadd.f32 %v52, %v359
  %v361 = vpop.f32.mrf.mxu0
  %v362 = vadd.f32 %v52, %v361
  %363 = vmatmul.bf16.gmra.mxu0 %v323
  %v364 = vpop.f32.mrf.mxu0
  %v365 = vadd.f32 %v52, %v364
  %v366 = vpop.f32.mrf.mxu0
  %v367 = vadd.f32 %v52, %v366
  %368 = vdwg.mxu0
  %369 = vmatpush.bf16.msra.mxu0 0
  %370 = vmatpush.bf16.msra.mxu0 0
  %371 = vmatpush.bf16.msra.mxu0 0
  %372 = vmatpush.bf16.msra.mxu0 0
  %373 = vmatpush.bf16.msra.mxu0 0
  %374 = vmatpush.bf16.msra.mxu0 0
  %375 = vmatpush.bf16.msra.mxu0 %v136
  %376 = vmatpush.bf16.msra.mxu0 %v104
  %377 = vmatmul.bf16.gmra.mxu0 %v305
  %v378 = vpop.f32.mrf.mxu0
  %v379 = vadd.f32 %v53, %v378
  %v380 = vpop.f32.mrf.mxu0
  %v381 = vadd.f32 %v53, %v380
  %382 = vmatmul.bf16.gmra.mxu0 %v308
  %v383 = vpop.f32.mrf.mxu0
  %v384 = vadd.f32 %v53, %v383
  %v385 = vpop.f32.mrf.mxu0
  %v386 = vadd.f32 %v53, %v385
  %387 = vmatmul.bf16.gmra.mxu0 %v311
  %v388 = vpop.f32.mrf.mxu0
  %v389 = vadd.f32 %v53, %v388
  %v390 = vpop.f32.mrf.mxu0
  %v391 = vadd.f32 %v53, %v390
  %392 = vmatmul.bf16.gmra.mxu0 %v314
  %v393 = vpop.f32.mrf.mxu0
  %v394 = vadd.f32 %v53, %v393
  %v395 = vpop.f32.mrf.mxu0
  %v396 = vadd.f32 %v53, %v395
  %397 = vmatmul.bf16.gmra.mxu0 %v317
  %v398 = vpop.f32.mrf.mxu0
  %v399 = vadd.f32 %v53, %v398
  %v400 = vpop.f32.mrf.mxu0
  %v401 = vadd.f32 %v53, %v400
  %402 = vmatmul.bf16.gmra.mxu0 %v320
  %v403 = vpop.f32.mrf.mxu0
  %v404 = vadd.f32 %v53, %v403
  %v405 = vpop.f32.mrf.mxu0
  %v406 = vadd.f32 %v53, %v405
  %407 = vmatmul.bf16.gmra.mxu0 %v323
  %v408 = vpop.f32.mrf.mxu0
  %v409 = vadd.f32 %v53, %v408
  %v410 = vpop.f32.mrf.mxu0
  %v411 = vadd.f32 %v53, %v410
  %412 = vdwg.mxu0
  %v413 = vpack.c.bf16 %v379, %v335
  %v414 = vpack.c.bf16 %v381, %v337
  %v415 = vpack.c.bf16 %v384, %v340
  %v416 = vpack.c.bf16 %v386, %v342
  %v417 = vpack.c.bf16 %v389, %v345
  %v418 = vpack.c.bf16 %v391, %v347
  %v419 = vpack.c.bf16 %v394, %v350
  %v420 = vpack.c.bf16 %v396, %v352
  %v421 = vpack.c.bf16 %v399, %v355
  %v422 = vpack.c.bf16 %v401, %v357
  %v423 = vpack.c.bf16 %v404, %v360
  %v424 = vpack.c.bf16 %v406, %v362
  %v425 = vpack.c.bf16 %v409, %v365
  %v426 = vpack.c.bf16 %v411, %v367
  %427 = vst [vmem:[#allocation3] sm:$0xff] %v413
  %428 = vst [vmem:[#allocation3 + $0x8] sm:$0xff] %v414
  %429 = vst [vmem:[#allocation3 + $0x10] sm:$0xff] %v415
  %430 = vst [vmem:[#allocation3 + $0x18] sm:$0xff] %v416
  %431 = vst [vmem:[#allocation3 + $0x20] sm:$0xff] %v417
  %432 = vst [vmem:[#allocation3 + $0x28] sm:$0xff] %v418
  %433 = vst [vmem:[#allocation3 + $0x30] sm:$0xff] %v419
  %434 = vst [vmem:[#allocation3 + $0x38] sm:$0xff] %v420
  %435 = vst [vmem:[#allocation3 + $0x40] sm:$0xff] %v421
  %436 = vst [vmem:[#allocation3 + $0x48] sm:$0xff] %v422
  %437 = vst [vmem:[#allocation3 + $0x50] sm:$0xff] %v423
  %438 = vst [vmem:[#allocation3 + $0x58] sm:$0xff] %v424
  %439 = vst [vmem:[#allocation3 + $0x60] sm:$0xff] %v425
  %440 = vst [vmem:[#allocation3 + $0x68] sm:$0xff] %v426
  %v441 = vld [vmem:[#allocation2] sm:$0xff]
  %v442 = vld [vmem:[#allocation2 + $0x8] sm:$0xff]
  %v443 = vunpack.c.l.bf16 %v441
  %v444 = vunpack.c.h.bf16 %v441
  %v445 = vunpack.c.l.bf16 %v442
  %v446 = vunpack.c.h.bf16 %v442
  %v455 = vunpack.c.l.b16 %v28
  %v456 = vunpack.c.h.b16 %v28
  %v457 = vunpack.c.l.b16 %v29
  %v458 = vunpack.c.h.b16 %v29
  %v459 = vunpack.c.l.b16 %v30
  %v460 = vunpack.c.h.b16 %v30
  %v461 = vunpack.c.l.b16 %v31
  %v462 = vunpack.c.h.b16 %v31
  %v463 = vunpack.c.l.b16 %v32
  %v464 = vunpack.c.h.b16 %v32
  %v465 = vunpack.c.l.b16 %v33
  %v466 = vunpack.c.h.b16 %v33
  %v467 = vunpack.c.l.b16 %v34
  %v468 = vunpack.c.h.b16 %v34
  %v469 = vunpack.c.l.b16 %v35
  %v470 = vunpack.c.h.b16 %v35
  %v471 = vpack.c.b16 %v457, %v455
  %v472 = vpack.c.b16 %v458, %v456
  %v473 = vpack.c.b16 %v461, %v459
  %v474 = vpack.c.b16 %v462, %v460
  %v475 = vpack.c.b16 %v465, %v463
  %v476 = vpack.c.b16 %v466, %v464
  %v477 = vpack.c.b16 %v469, %v467
  %v478 = vpack.c.b16 %v470, %v468
  %vm487 = vcmask 523264
  %v489 = vsel %vm487, 0, 0
  %491 = vmatpush.bf16.msra.mxu0 0
  %492 = vmatpush.bf16.msra.mxu0 0
  %493 = vmatpush.bf16.msra.mxu0 0
  %494 = vmatpush.bf16.msra.mxu0 0
  %495 = vmatpush.bf16.msra.mxu0 %v477
  %496 = vmatpush.bf16.msra.mxu0 %v475
  %497 = vmatpush.bf16.msra.mxu0 %v473
  %498 = vmatpush.bf16.msra.mxu0 %v471
  %499 = vmatmul.bf16.gmra.mxu0 %v489
  %v500 = vpop.f32.mrf.mxu0
  %v501 = vadd.f32 0.0, %v500
  %v502 = vpop.f32.mrf.mxu0
  %v503 = vadd.f32 0.0, %v502
  %504 = vdwg.mxu0
  %505 = vmatpush.bf16.msra.mxu0 0
  %506 = vmatpush.bf16.msra.mxu0 0
  %507 = vmatpush.bf16.msra.mxu0 0
  %508 = vmatpush.bf16.msra.mxu0 0
  %509 = vmatpush.bf16.msra.mxu0 %v478
  %510 = vmatpush.bf16.msra.mxu0 %v476
  %511 = vmatpush.bf16.msra.mxu0 %v474
  %512 = vmatpush.bf16.msra.mxu0 %v472
  %513 = vmatmul.bf16.gmra.mxu0 %v489
  %v514 = vpop.f32.mrf.mxu0
  %v515 = vadd.f32 0.0, %v514
  %v516 = vpop.f32.mrf.mxu0
  %v517 = vadd.f32 0.0, %v516
  %518 = vdwg.mxu0
  %v519 = vadd.f32 %v443, %v501
  %v520 = vadd.f32 %v444, %v515
  %v521 = vadd.f32 %v445, %v503
  %v522 = vadd.f32 %v446, %v517
  %v523 = vxor.u32 %v519, 2147483648
  %v524 = vxor.u32 %v520, 2147483648
  %v525 = vxor.u32 %v521, 2147483648
  %v526 = vxor.u32 %v522, 2147483648
  %v527 = vmul.f32 %v523, 1.442695
  %v528 = vpow.pop %v527
  %v529 = vmul.f32 %v524, 1.442695
  %v530 = vpow.pop %v529
  %v531 = vmul.f32 %v525, 1.442695
  %v532 = vpow.pop %v531
  %v533 = vmul.f32 %v526, 1.442695
  %v534 = vpow.pop %v533
  %v535 = vadd.f32 %v528, 1.0
  %v536 = vadd.f32 %v530, 1.0
  %v537 = vadd.f32 %v532, 1.0
  %v538 = vadd.f32 %v534, 1.0
  %v539 = vrcp.pop %v535
  %v540 = vmul.f32 %v535, %v539
  %v541 = vsub.f32 1.0, %v540
  %v542 = vmul.f32 %v539, %v541
  %v543 = vadd.f32 %v539, %v542
  %vm544 = vweird.f32 %v535
  %vm545 = vweird.f32 %v539
  %vm546 = vmor %vm544, %vm545
  %v547 = vsel %vm546, %v539, %v543
  %v548 = vand.u32 2147483647, %v535
  %vm549 = vcmp.eq.f32.partialorder %v548, 8.507059e+37
  %v550 = vand.u32 %v535, 2147483648
  %v551 = vor.u32 1.1754944e-38, %v550
  %v552 = vsel %vm549, %v551, %v547
  %v553 = vmul.f32 1.0, %v552
  %v554 = vrcp.pop %v536
  %v555 = vmul.f32 %v536, %v554
  %v556 = vsub.f32 1.0, %v555
  %v557 = vmul.f32 %v554, %v556
  %v558 = vadd.f32 %v554, %v557
  %vm559 = vweird.f32 %v536
  %vm560 = vweird.f32 %v554
  %vm561 = vmor %vm559, %vm560
  %v562 = vsel %vm561, %v554, %v558
  %v563 = vand.u32 2147483647, %v536
  %vm564 = vcmp.eq.f32.partialorder %v563, 8.507059e+37
  %v565 = vand.u32 %v536, 2147483648
  %v566 = vor.u32 1.1754944e-38, %v565
  %v567 = vsel %vm564, %v566, %v562
  %v568 = vmul.f32 1.0, %v567
  %v569 = vrcp.pop %v537
  %v570 = vmul.f32 %v537, %v569
  %v571 = vsub.f32 1.0, %v570
  %v572 = vmul.f32 %v569, %v571
  %v573 = vadd.f32 %v569, %v572
  %vm574 = vweird.f32 %v537
  %vm575 = vweird.f32 %v569
  %vm576 = vmor %vm574, %vm575
  %v577 = vsel %vm576, %v569, %v573
  %v578 = vand.u32 2147483647, %v537
  %vm579 = vcmp.eq.f32.partialorder %v578, 8.507059e+37
  %v580 = vand.u32 %v537, 2147483648
  %v581 = vor.u32 1.1754944e-38, %v580
  %v582 = vsel %vm579, %v581, %v577
  %v583 = vmul.f32 1.0, %v582
  %v584 = vrcp.pop %v538
  %v585 = vmul.f32 %v538, %v584
  %v586 = vsub.f32 1.0, %v585
  %v587 = vmul.f32 %v584, %v586
  %v588 = vadd.f32 %v584, %v587
  %vm589 = vweird.f32 %v538
  %vm590 = vweird.f32 %v584
  %vm591 = vmor %vm589, %vm590
  %v592 = vsel %vm591, %v584, %v588
  %v593 = vand.u32 2147483647, %v538
  %vm594 = vcmp.eq.f32.partialorder %v593, 8.507059e+37
  %v595 = vand.u32 %v538, 2147483648
  %v596 = vor.u32 1.1754944e-38, %v595
  %v597 = vsel %vm594, %v596, %v592
  %v598 = vmul.f32 1.0, %v597
  %v599 = vmul.f32 %v568, 2.0
  %v600 = vmul.f32 %v598, 2.0
  %v601 = vsub.f32 %v599, 1.0
  %v602 = vsub.f32 %v600, 1.0
  %v603 = vmul.f32 %v553, 0.0
  %v604 = vmul.f32 %v583, 0.0
  %v605 = vmul.f32 %v553, %v601
  %v606 = vmul.f32 %v583, %v602
  %609 = vrot.lane.b32.xlu0 %v605, 64
  %v610 = vpop.permute.xlu0 %609
  %611 = vrot.lane.b32.xlu0 %v606, 64
  %v612 = vpop.permute.xlu0 %611
  %v615 = vadd.f32 %v603, %v610
  %v616 = vadd.f32 %v604, %v612
  %v617 = vtanh.pop %v615
  %v618 = vtanh.pop %v616
  %v619 = vmul.f32 %v568, %v617
  %v620 = vmul.f32 %v598, %v618
  %s621 = scalar_lea.vmem [#allocation2], 16
  %v622 = vld [vmem:[%s621] sm:$0xff]
  %v623 = vld [vmem:[%s621 + $0x8] sm:$0xff]
  %v624 = vunpack.c.l.bf16 %v622
  %v625 = vunpack.c.h.bf16 %v622
  %v626 = vunpack.c.l.bf16 %v623
  %v627 = vunpack.c.h.bf16 %v623
  %v628 = vpack.c.bf16 %v620, %v619
  %v630 = vsel %vm487, %v628, 0
  %632 = vmatpush.bf16.msra.mxu0 0
  %633 = vmatpush.bf16.msra.mxu0 0
  %634 = vmatpush.bf16.msra.mxu0 0
  %635 = vmatpush.bf16.msra.mxu0 0
  %636 = vmatpush.bf16.msra.mxu0 %v477
  %637 = vmatpush.bf16.msra.mxu0 %v475
  %638 = vmatpush.bf16.msra.mxu0 %v473
  %639 = vmatpush.bf16.msra.mxu0 %v471
  %640 = vmatmul.bf16.gmra.mxu0 %v630
  %v641 = vpop.f32.mrf.mxu0
  %v642 = vadd.f32 0.0, %v641
  %v643 = vpop.f32.mrf.mxu0
  %v644 = vadd.f32 0.0, %v643
  %645 = vdwg.mxu0
  %646 = vmatpush.bf16.msra.mxu0 0
  %647 = vmatpush.bf16.msra.mxu0 0
  %648 = vmatpush.bf16.msra.mxu0 0
  %649 = vmatpush.bf16.msra.mxu0 0
  %650 = vmatpush.bf16.msra.mxu0 %v478
  %651 = vmatpush.bf16.msra.mxu0 %v476
  %652 = vmatpush.bf16.msra.mxu0 %v474
  %653 = vmatpush.bf16.msra.mxu0 %v472
  %654 = vmatmul.bf16.gmra.mxu0 %v630
  %v655 = vpop.f32.mrf.mxu0
  %v656 = vadd.f32 0.0, %v655
  %v657 = vpop.f32.mrf.mxu0
  %v658 = vadd.f32 0.0, %v657
  %659 = vdwg.mxu0
  %v660 = vadd.f32 %v624, %v642
  %v661 = vadd.f32 %v625, %v656
  %v662 = vadd.f32 %v626, %v644
  %v663 = vadd.f32 %v627, %v658
  %v664 = vxor.u32 %v660, 2147483648
  %v665 = vxor.u32 %v661, 2147483648
  %v666 = vxor.u32 %v662, 2147483648
  %v667 = vxor.u32 %v663, 2147483648
  %v668 = vmul.f32 %v664, 1.442695
  %v669 = vpow.pop %v668
  %v670 = vmul.f32 %v665, 1.442695
  %v671 = vpow.pop %v670
  %v672 = vmul.f32 %v666, 1.442695
  %v673 = vpow.pop %v672
  %v674 = vmul.f32 %v667, 1.442695
  %v675 = vpow.pop %v674
  %v676 = vadd.f32 %v669, 1.0
  %v677 = vadd.f32 %v671, 1.0
  %v678 = vadd.f32 %v673, 1.0
  %v679 = vadd.f32 %v675, 1.0
  %v680 = vrcp.pop %v676
  %v681 = vmul.f32 %v676, %v680
  %v682 = vsub.f32 1.0, %v681
  %v683 = vmul.f32 %v680, %v682
  %v684 = vadd.f32 %v680, %v683
  %vm685 = vweird.f32 %v676
  %vm686 = vweird.f32 %v680
  %vm687 = vmor %vm685, %vm686
  %v688 = vsel %vm687, %v680, %v684
  %v689 = vand.u32 2147483647, %v676
  %vm690 = vcmp.eq.f32.partialorder %v689, 8.507059e+37
  %v691 = vand.u32 %v676, 2147483648
  %v692 = vor.u32 1.1754944e-38, %v691
  %v693 = vsel %vm690, %v692, %v688
  %v694 = vmul.f32 1.0, %v693
  %v695 = vrcp.pop %v677
  %v696 = vmul.f32 %v677, %v695
  %v697 = vsub.f32 1.0, %v696
  %v698 = vmul.f32 %v695, %v697
  %v699 = vadd.f32 %v695, %v698
  %vm700 = vweird.f32 %v677
  %vm701 = vweird.f32 %v695
  %vm702 = vmor %vm700, %vm701
  %v703 = vsel %vm702, %v695, %v699
  %v704 = vand.u32 2147483647, %v677
  %vm705 = vcmp.eq.f32.partialorder %v704, 8.507059e+37
  %v706 = vand.u32 %v677, 2147483648
  %v707 = vor.u32 1.1754944e-38, %v706
  %v708 = vsel %vm705, %v707, %v703
  %v709 = vmul.f32 1.0, %v708
  %v710 = vrcp.pop %v678
  %v711 = vmul.f32 %v678, %v710
  %v712 = vsub.f32 1.0, %v711
  %v713 = vmul.f32 %v710, %v712
  %v714 = vadd.f32 %v710, %v713
  %vm715 = vweird.f32 %v678
  %vm716 = vweird.f32 %v710
  %vm717 = vmor %vm715, %vm716
  %v718 = vsel %vm717, %v710, %v714
  %v719 = vand.u32 2147483647, %v678
  %vm720 = vcmp.eq.f32.partialorder %v719, 8.507059e+37
  %v721 = vand.u32 %v678, 2147483648
  %v722 = vor.u32 1.1754944e-38, %v721
  %v723 = vsel %vm720, %v722, %v718
  %v724 = vmul.f32 1.0, %v723
  %v725 = vrcp.pop %v679
  %v726 = vmul.f32 %v679, %v725
  %v727 = vsub.f32 1.0, %v726
  %v728 = vmul.f32 %v725, %v727
  %v729 = vadd.f32 %v725, %v728
  %vm730 = vweird.f32 %v679
  %vm731 = vweird.f32 %v725
  %vm732 = vmor %vm730, %vm731
  %v733 = vsel %vm732, %v725, %v729
  %v734 = vand.u32 2147483647, %v679
  %vm735 = vcmp.eq.f32.partialorder %v734, 8.507059e+37
  %v736 = vand.u32 %v679, 2147483648
  %v737 = vor.u32 1.1754944e-38, %v736
  %v738 = vsel %vm735, %v737, %v733
  %v739 = vmul.f32 1.0, %v738
  %v740 = vmul.f32 %v709, 2.0
  %v741 = vmul.f32 %v739, 2.0
  %v742 = vsub.f32 %v740, 1.0
  %v743 = vsub.f32 %v741, 1.0
  %v744 = vmul.f32 %v694, %v615
  %v745 = vmul.f32 %v724, %v616
  %v746 = vmul.f32 %v694, %v742
  %v747 = vmul.f32 %v724, %v743
  %750 = vrot.lane.b32.xlu0 %v746, 64
  %v751 = vpop.permute.xlu0 %750
  %752 = vrot.lane.b32.xlu0 %v747, 64
  %v753 = vpop.permute.xlu0 %752
  %v756 = vadd.f32 %v744, %v751
  %v757 = vadd.f32 %v745, %v753
  %v758 = vtanh.pop %v756
  %v759 = vtanh.pop %v757
  %v760 = vmul.f32 %v709, %v758
  %v761 = vmul.f32 %v739, %v759
  %s762 = scalar_lea.vmem [#allocation2], 32
  %v763 = vld [vmem:[%s762] sm:$0xff]
  %v764 = vld [vmem:[%s762 + $0x8] sm:$0xff]
  %v765 = vunpack.c.l.bf16 %v763
  %v766 = vunpack.c.h.bf16 %v763
  %v767 = vunpack.c.l.bf16 %v764
  %v768 = vunpack.c.h.bf16 %v764
  %v769 = vpack.c.bf16 %v761, %v760
  %v771 = vsel %vm487, %v769, 0
  %773 = vmatpush.bf16.msra.mxu0 0
  %774 = vmatpush.bf16.msra.mxu0 0
  %775 = vmatpush.bf16.msra.mxu0 0
  %776 = vmatpush.bf16.msra.mxu0 0
  %777 = vmatpush.bf16.msra.mxu0 %v477
  %778 = vmatpush.bf16.msra.mxu0 %v475
  %779 = vmatpush.bf16.msra.mxu0 %v473
  %780 = vmatpush.bf16.msra.mxu0 %v471
  %781 = vmatmul.bf16.gmra.mxu0 %v771
  %v782 = vpop.f32.mrf.mxu0
  %v783 = vadd.f32 0.0, %v782
  %v784 = vpop.f32.mrf.mxu0
  %v785 = vadd.f32 0.0, %v784
  %786 = vdwg.mxu0
  %787 = vmatpush.bf16.msra.mxu0 0
  %788 = vmatpush.bf16.msra.mxu0 0
  %789 = vmatpush.bf16.msra.mxu0 0
  %790 = vmatpush.bf16.msra.mxu0 0
  %791 = vmatpush.bf16.msra.mxu0 %v478
  %792 = vmatpush.bf16.msra.mxu0 %v476
  %793 = vmatpush.bf16.msra.mxu0 %v474
  %794 = vmatpush.bf16.msra.mxu0 %v472
  %795 = vmatmul.bf16.gmra.mxu0 %v771
  %v796 = vpop.f32.mrf.mxu0
  %v797 = vadd.f32 0.0, %v796
  %v798 = vpop.f32.mrf.mxu0
  %v799 = vadd.f32 0.0, %v798
  %800 = vdwg.mxu0
  %v801 = vadd.f32 %v765, %v783
  %v802 = vadd.f32 %v766, %v797
  %v803 = vadd.f32 %v767, %v785
  %v804 = vadd.f32 %v768, %v799
  %v805 = vxor.u32 %v801, 2147483648
  %v806 = vxor.u32 %v802, 2147483648
  %v807 = vxor.u32 %v803, 2147483648
  %v808 = vxor.u32 %v804, 2147483648
  %v809 = vmul.f32 %v805, 1.442695
  %v810 = vpow.pop %v809
  %v811 = vmul.f32 %v806, 1.442695
  %v812 = vpow.pop %v811
  %v813 = vmul.f32 %v807, 1.442695
  %v814 = vpow.pop %v813
  %v815 = vmul.f32 %v808, 1.442695
  %v816 = vpow.pop %v815
  %v817 = vadd.f32 %v810, 1.0
  %v818 = vadd.f32 %v812, 1.0
  %v819 = vadd.f32 %v814, 1.0
  %v820 = vadd.f32 %v816, 1.0
  %v821 = vrcp.pop %v817
  %v822 = vmul.f32 %v817, %v821
  %v823 = vsub.f32 1.0, %v822
  %v824 = vmul.f32 %v821, %v823
  %v825 = vadd.f32 %v821, %v824
  %vm826 = vweird.f32 %v817
  %vm827 = vweird.f32 %v821
  %vm828 = vmor %vm826, %vm827
  %v829 = vsel %vm828, %v821, %v825
  %v830 = vand.u32 2147483647, %v817
  %vm831 = vcmp.eq.f32.partialorder %v830, 8.507059e+37
  %v832 = vand.u32 %v817, 2147483648
  %v833 = vor.u32 1.1754944e-38, %v832
  %v834 = vsel %vm831, %v833, %v829
  %v835 = vmul.f32 1.0, %v834
  %v836 = vrcp.pop %v818
  %v837 = vmul.f32 %v818, %v836
  %v838 = vsub.f32 1.0, %v837
  %v839 = vmul.f32 %v836, %v838
  %v840 = vadd.f32 %v836, %v839
  %vm841 = vweird.f32 %v818
  %vm842 = vweird.f32 %v836
  %vm843 = vmor %vm841, %vm842
  %v844 = vsel %vm843, %v836, %v840
  %v845 = vand.u32 2147483647, %v818
  %vm846 = vcmp.eq.f32.partialorder %v845, 8.507059e+37
  %v847 = vand.u32 %v818, 2147483648
  %v848 = vor.u32 1.1754944e-38, %v847
  %v849 = vsel %vm846, %v848, %v844
  %v850 = vmul.f32 1.0, %v849
  %v851 = vrcp.pop %v819
  %v852 = vmul.f32 %v819, %v851
  %v853 = vsub.f32 1.0, %v852
  %v854 = vmul.f32 %v851, %v853
  %v855 = vadd.f32 %v851, %v854
  %vm856 = vweird.f32 %v819
  %vm857 = vweird.f32 %v851
  %vm858 = vmor %vm856, %vm857
  %v859 = vsel %vm858, %v851, %v855
  %v860 = vand.u32 2147483647, %v819
  %vm861 = vcmp.eq.f32.partialorder %v860, 8.507059e+37
  %v862 = vand.u32 %v819, 2147483648
  %v863 = vor.u32 1.1754944e-38, %v862
  %v864 = vsel %vm861, %v863, %v859
  %v865 = vmul.f32 1.0, %v864
  %v866 = vrcp.pop %v820
  %v867 = vmul.f32 %v820, %v866
  %v868 = vsub.f32 1.0, %v867
  %v869 = vmul.f32 %v866, %v868
  %v870 = vadd.f32 %v866, %v869
  %vm871 = vweird.f32 %v820
  %vm872 = vweird.f32 %v866
  %vm873 = vmor %vm871, %vm872
  %v874 = vsel %vm873, %v866, %v870
  %v875 = vand.u32 2147483647, %v820
  %vm876 = vcmp.eq.f32.partialorder %v875, 8.507059e+37
  %v877 = vand.u32 %v820, 2147483648
  %v878 = vor.u32 1.1754944e-38, %v877
  %v879 = vsel %vm876, %v878, %v874
  %v880 = vmul.f32 1.0, %v879
  %v881 = vmul.f32 %v850, 2.0
  %v882 = vmul.f32 %v880, 2.0
  %v883 = vsub.f32 %v881, 1.0
  %v884 = vsub.f32 %v882, 1.0
  %v885 = vmul.f32 %v835, %v756
  %v886 = vmul.f32 %v865, %v757
  %v887 = vmul.f32 %v835, %v883
  %v888 = vmul.f32 %v865, %v884
  %891 = vrot.lane.b32.xlu0 %v887, 64
  %v892 = vpop.permute.xlu0 %891
  %893 = vrot.lane.b32.xlu0 %v888, 64
  %v894 = vpop.permute.xlu0 %893
  %v897 = vadd.f32 %v885, %v892
  %v898 = vadd.f32 %v886, %v894
  %v899 = vtanh.pop %v897
  %v900 = vtanh.pop %v898
  %v901 = vmul.f32 %v850, %v899
  %v902 = vmul.f32 %v880, %v900
  %s903 = scalar_lea.vmem [#allocation2], 48
  %v904 = vld [vmem:[%s903] sm:$0xff]
  %v905 = vld [vmem:[%s903 + $0x8] sm:$0xff]
  %v906 = vunpack.c.l.bf16 %v904
  %v907 = vunpack.c.h.bf16 %v904
  %v908 = vunpack.c.l.bf16 %v905
  %v909 = vunpack.c.h.bf16 %v905
  %v910 = vpack.c.bf16 %v902, %v901
  %v912 = vsel %vm487, %v910, 0
  %914 = vmatpush.bf16.msra.mxu0 0
  %915 = vmatpush.bf16.msra.mxu0 0
  %916 = vmatpush.bf16.msra.mxu0 0
  %917 = vmatpush.bf16.msra.mxu0 0
  %918 = vmatpush.bf16.msra.mxu0 %v477
  %919 = vmatpush.bf16.msra.mxu0 %v475
  %920 = vmatpush.bf16.msra.mxu0 %v473
  %921 = vmatpush.bf16.msra.mxu0 %v471
  %922 = vmatmul.bf16.gmra.mxu0 %v912
  %v923 = vpop.f32.mrf.mxu0
  %v924 = vadd.f32 0.0, %v923
  %v925 = vpop.f32.mrf.mxu0
  %v926 = vadd.f32 0.0, %v925
  %927 = vdwg.mxu0
  %928 = vmatpush.bf16.msra.mxu0 0
  %929 = vmatpush.bf16.msra.mxu0 0
  %930 = vmatpush.bf16.msra.mxu0 0
  %931 = vmatpush.bf16.msra.mxu0 0
  %932 = vmatpush.bf16.msra.mxu0 %v478
  %933 = vmatpush.bf16.msra.mxu0 %v476
  %934 = vmatpush.bf16.msra.mxu0 %v474
  %935 = vmatpush.bf16.msra.mxu0 %v472
  %936 = vmatmul.bf16.gmra.mxu0 %v912
  %v937 = vpop.f32.mrf.mxu0
  %v938 = vadd.f32 0.0, %v937
  %v939 = vpop.f32.mrf.mxu0
  %v940 = vadd.f32 0.0, %v939
  %941 = vdwg.mxu0
  %v942 = vadd.f32 %v906, %v924
  %v943 = vadd.f32 %v907, %v938
  %v944 = vadd.f32 %v908, %v926
  %v945 = vadd.f32 %v909, %v940
  %v946 = vxor.u32 %v942, 2147483648
  %v947 = vxor.u32 %v943, 2147483648
  %v948 = vxor.u32 %v944, 2147483648
  %v949 = vxor.u32 %v945, 2147483648
  %v950 = vmul.f32 %v946, 1.442695
  %v951 = vpow.pop %v950
  %v952 = vmul.f32 %v947, 1.442695
  %v953 = vpow.pop %v952
  %v954 = vmul.f32 %v948, 1.442695
  %v955 = vpow.pop %v954
  %v956 = vmul.f32 %v949, 1.442695
  %v957 = vpow.pop %v956
  %v958 = vadd.f32 %v951, 1.0
  %v959 = vadd.f32 %v953, 1.0
  %v960 = vadd.f32 %v955, 1.0
  %v961 = vadd.f32 %v957, 1.0
  %v962 = vrcp.pop %v958
  %v963 = vmul.f32 %v958, %v962
  %v964 = vsub.f32 1.0, %v963
  %v965 = vmul.f32 %v962, %v964
  %v966 = vadd.f32 %v962, %v965
  %vm967 = vweird.f32 %v958
  %vm968 = vweird.f32 %v962
  %vm969 = vmor %vm967, %vm968
  %v970 = vsel %vm969, %v962, %v966
  %v971 = vand.u32 2147483647, %v958
  %vm972 = vcmp.eq.f32.partialorder %v971, 8.507059e+37
  %v973 = vand.u32 %v958, 2147483648
  %v974 = vor.u32 1.1754944e-38, %v973
  %v975 = vsel %vm972, %v974, %v970
  %v976 = vmul.f32 1.0, %v975
  %v977 = vrcp.pop %v959
  %v978 = vmul.f32 %v959, %v977
  %v979 = vsub.f32 1.0, %v978
  %v980 = vmul.f32 %v977, %v979
  %v981 = vadd.f32 %v977, %v980
  %vm982 = vweird.f32 %v959
  %vm983 = vweird.f32 %v977
  %vm984 = vmor %vm982, %vm983
  %v985 = vsel %vm984, %v977, %v981
  %v986 = vand.u32 2147483647, %v959
  %vm987 = vcmp.eq.f32.partialorder %v986, 8.507059e+37
  %v988 = vand.u32 %v959, 2147483648
  %v989 = vor.u32 1.1754944e-38, %v988
  %v990 = vsel %vm987, %v989, %v985
  %v991 = vmul.f32 1.0, %v990
  %v992 = vrcp.pop %v960
  %v993 = vmul.f32 %v960, %v992
  %v994 = vsub.f32 1.0, %v993
  %v995 = vmul.f32 %v992, %v994
  %v996 = vadd.f32 %v992, %v995
  %vm997 = vweird.f32 %v960
  %vm998 = vweird.f32 %v992
  %vm999 = vmor %vm997, %vm998
  %v1000 = vsel %vm999, %v992, %v996
  %v1001 = vand.u32 2147483647, %v960
  %vm1002 = vcmp.eq.f32.partialorder %v1001, 8.507059e+37
  %v1003 = vand.u32 %v960, 2147483648
  %v1004 = vor.u32 1.1754944e-38, %v1003
  %v1005 = vsel %vm1002, %v1004, %v1000
  %v1006 = vmul.f32 1.0, %v1005
  %v1007 = vrcp.pop %v961
  %v1008 = vmul.f32 %v961, %v1007
  %v1009 = vsub.f32 1.0, %v1008
  %v1010 = vmul.f32 %v1007, %v1009
  %v1011 = vadd.f32 %v1007, %v1010
  %vm1012 = vweird.f32 %v961
  %vm1013 = vweird.f32 %v1007
  %vm1014 = vmor %vm1012, %vm1013
  %v1015 = vsel %vm1014, %v1007, %v1011
  %v1016 = vand.u32 2147483647, %v961
  %vm1017 = vcmp.eq.f32.partialorder %v1016, 8.507059e+37
  %v1018 = vand.u32 %v961, 2147483648
  %v1019 = vor.u32 1.1754944e-38, %v1018
  %v1020 = vsel %vm1017, %v1019, %v1015
  %v1021 = vmul.f32 1.0, %v1020
  %v1022 = vmul.f32 %v991, 2.0
  %v1023 = vmul.f32 %v1021, 2.0
  %v1024 = vsub.f32 %v1022, 1.0
  %v1025 = vsub.f32 %v1023, 1.0
  %v1026 = vmul.f32 %v976, %v897
  %v1027 = vmul.f32 %v1006, %v898
  %v1028 = vmul.f32 %v976, %v1024
  %v1029 = vmul.f32 %v1006, %v1025
  %1032 = vrot.lane.b32.xlu0 %v1028, 64
  %v1033 = vpop.permute.xlu0 %1032
  %1034 = vrot.lane.b32.xlu0 %v1029, 64
  %v1035 = vpop.permute.xlu0 %1034
  %v1038 = vadd.f32 %v1026, %v1033
  %v1039 = vadd.f32 %v1027, %v1035
  %v1040 = vtanh.pop %v1038
  %v1041 = vtanh.pop %v1039
  %v1042 = vmul.f32 %v991, %v1040
  %v1043 = vmul.f32 %v1021, %v1041
  %s1044 = scalar_lea.vmem [#allocation2], 64
  %v1045 = vld [vmem:[%s1044] sm:$0xff]
  %v1046 = vld [vmem:[%s1044 + $0x8] sm:$0xff]
  %v1047 = vunpack.c.l.bf16 %v1045
  %v1048 = vunpack.c.h.bf16 %v1045
  %v1049 = vunpack.c.l.bf16 %v1046
  %v1050 = vunpack.c.h.bf16 %v1046
  %v1051 = vpack.c.bf16 %v1043, %v1042
  %v1053 = vsel %vm487, %v1051, 0
  %1055 = vmatpush.bf16.msra.mxu0 0
  %1056 = vmatpush.bf16.msra.mxu0 0
  %1057 = vmatpush.bf16.msra.mxu0 0
  %1058 = vmatpush.bf16.msra.mxu0 0
  %1059 = vmatpush.bf16.msra.mxu0 %v477
  %1060 = vmatpush.bf16.msra.mxu0 %v475
  %1061 = vmatpush.bf16.msra.mxu0 %v473
  %1062 = vmatpush.bf16.msra.mxu0 %v471
  %1063 = vmatmul.bf16.gmra.mxu0 %v1053
  %v1064 = vpop.f32.mrf.mxu0
  %v1065 = vadd.f32 0.0, %v1064
  %v1066 = vpop.f32.mrf.mxu0
  %v1067 = vadd.f32 0.0, %v1066
  %1068 = vdwg.mxu0
  %1069 = vmatpush.bf16.msra.mxu0 0
  %1070 = vmatpush.bf16.msra.mxu0 0
  %1071 = vmatpush.bf16.msra.mxu0 0
  %1072 = vmatpush.bf16.msra.mxu0 0
  %1073 = vmatpush.bf16.msra.mxu0 %v478
  %1074 = vmatpush.bf16.msra.mxu0 %v476
  %1075 = vmatpush.bf16.msra.mxu0 %v474
  %1076 = vmatpush.bf16.msra.mxu0 %v472
  %1077 = vmatmul.bf16.gmra.mxu0 %v1053
  %v1078 = vpop.f32.mrf.mxu0
  %v1079 = vadd.f32 0.0, %v1078
  %v1080 = vpop.f32.mrf.mxu0
  %v1081 = vadd.f32 0.0, %v1080
  %1082 = vdwg.mxu0
  %v1083 = vadd.f32 %v1047, %v1065
  %v1084 = vadd.f32 %v1048, %v1079
  %v1085 = vadd.f32 %v1049, %v1067
  %v1086 = vadd.f32 %v1050, %v1081
  %v1087 = vxor.u32 %v1083, 2147483648
  %v1088 = vxor.u32 %v1084, 2147483648
  %v1089 = vxor.u32 %v1085, 2147483648
  %v1090 = vxor.u32 %v1086, 2147483648
  %v1091 = vmul.f32 %v1087, 1.442695
  %v1092 = vpow.pop %v1091
  %v1093 = vmul.f32 %v1088, 1.442695
  %v1094 = vpow.pop %v1093
  %v1095 = vmul.f32 %v1089, 1.442695
  %v1096 = vpow.pop %v1095
  %v1097 = vmul.f32 %v1090, 1.442695
  %v1098 = vpow.pop %v1097
  %v1099 = vadd.f32 %v1092, 1.0
  %v1100 = vadd.f32 %v1094, 1.0
  %v1101 = vadd.f32 %v1096, 1.0
  %v1102 = vadd.f32 %v1098, 1.0
  %v1103 = vrcp.pop %v1099
  %v1104 = vmul.f32 %v1099, %v1103
  %v1105 = vsub.f32 1.0, %v1104
  %v1106 = vmul.f32 %v1103, %v1105
  %v1107 = vadd.f32 %v1103, %v1106
  %vm1108 = vweird.f32 %v1099
  %vm1109 = vweird.f32 %v1103
  %vm1110 = vmor %vm1108, %vm1109
  %v1111 = vsel %vm1110, %v1103, %v1107
  %v1112 = vand.u32 2147483647, %v1099
  %vm1113 = vcmp.eq.f32.partialorder %v1112, 8.507059e+37
  %v1114 = vand.u32 %v1099, 2147483648
  %v1115 = vor.u32 1.1754944e-38, %v1114
  %v1116 = vsel %vm1113, %v1115, %v1111
  %v1117 = vmul.f32 1.0, %v1116
  %v1118 = vrcp.pop %v1100
  %v1119 = vmul.f32 %v1100, %v1118
  %v1120 = vsub.f32 1.0, %v1119
  %v1121 = vmul.f32 %v1118, %v1120
  %v1122 = vadd.f32 %v1118, %v1121
  %vm1123 = vweird.f32 %v1100
  %vm1124 = vweird.f32 %v1118
  %vm1125 = vmor %vm1123, %vm1124
  %v1126 = vsel %vm1125, %v1118, %v1122
  %v1127 = vand.u32 2147483647, %v1100
  %vm1128 = vcmp.eq.f32.partialorder %v1127, 8.507059e+37
  %v1129 = vand.u32 %v1100, 2147483648
  %v1130 = vor.u32 1.1754944e-38, %v1129
  %v1131 = vsel %vm1128, %v1130, %v1126
  %v1132 = vmul.f32 1.0, %v1131
  %v1133 = vrcp.pop %v1101
  %v1134 = vmul.f32 %v1101, %v1133
  %v1135 = vsub.f32 1.0, %v1134
  %v1136 = vmul.f32 %v1133, %v1135
  %v1137 = vadd.f32 %v1133, %v1136
  %vm1138 = vweird.f32 %v1101
  %vm1139 = vweird.f32 %v1133
  %vm1140 = vmor %vm1138, %vm1139
  %v1141 = vsel %vm1140, %v1133, %v1137
  %v1142 = vand.u32 2147483647, %v1101
  %vm1143 = vcmp.eq.f32.partialorder %v1142, 8.507059e+37
  %v1144 = vand.u32 %v1101, 2147483648
  %v1145 = vor.u32 1.1754944e-38, %v1144
  %v1146 = vsel %vm1143, %v1145, %v1141
  %v1147 = vmul.f32 1.0, %v1146
  %v1148 = vrcp.pop %v1102
  %v1149 = vmul.f32 %v1102, %v1148
  %v1150 = vsub.f32 1.0, %v1149
  %v1151 = vmul.f32 %v1148, %v1150
  %v1152 = vadd.f32 %v1148, %v1151
  %vm1153 = vweird.f32 %v1102
  %vm1154 = vweird.f32 %v1148
  %vm1155 = vmor %vm1153, %vm1154
  %v1156 = vsel %vm1155, %v1148, %v1152
  %v1157 = vand.u32 2147483647, %v1102
  %vm1158 = vcmp.eq.f32.partialorder %v1157, 8.507059e+37
  %v1159 = vand.u32 %v1102, 2147483648
  %v1160 = vor.u32 1.1754944e-38, %v1159
  %v1161 = vsel %vm1158, %v1160, %v1156
  %v1162 = vmul.f32 1.0, %v1161
  %v1163 = vmul.f32 %v1132, 2.0
  %v1164 = vmul.f32 %v1162, 2.0
  %v1165 = vsub.f32 %v1163, 1.0
  %v1166 = vsub.f32 %v1164, 1.0
  %v1167 = vmul.f32 %v1117, %v1038
  %v1168 = vmul.f32 %v1147, %v1039
  %v1169 = vmul.f32 %v1117, %v1165
  %v1170 = vmul.f32 %v1147, %v1166
  %1173 = vrot.lane.b32.xlu0 %v1169, 64
  %v1174 = vpop.permute.xlu0 %1173
  %1175 = vrot.lane.b32.xlu0 %v1170, 64
  %v1176 = vpop.permute.xlu0 %1175
  %v1179 = vadd.f32 %v1167, %v1174
  %v1180 = vadd.f32 %v1168, %v1176
  %v1181 = vtanh.pop %v1179
  %v1182 = vtanh.pop %v1180
  %v1183 = vmul.f32 %v1132, %v1181
  %v1184 = vmul.f32 %v1162, %v1182
  %s1185 = scalar_lea.vmem [#allocation2], 80
  %v1186 = vld [vmem:[%s1185] sm:$0xff]
  %v1187 = vld [vmem:[%s1185 + $0x8] sm:$0xff]
  %v1188 = vunpack.c.l.bf16 %v1186
  %v1189 = vunpack.c.h.bf16 %v1186
  %v1190 = vunpack.c.l.bf16 %v1187
  %v1191 = vunpack.c.h.bf16 %v1187
  %v1192 = vpack.c.bf16 %v1184, %v1183
  %v1194 = vsel %vm487, %v1192, 0
  %1196 = vmatpush.bf16.msra.mxu0 0
  %1197 = vmatpush.bf16.msra.mxu0 0
  %1198 = vmatpush.bf16.msra.mxu0 0
  %1199 = vmatpush.bf16.msra.mxu0 0
  %1200 = vmatpush.bf16.msra.mxu0 %v477
  %1201 = vmatpush.bf16.msra.mxu0 %v475
  %1202 = vmatpush.bf16.msra.mxu0 %v473
  %1203 = vmatpush.bf16.msra.mxu0 %v471
  %1204 = vmatmul.bf16.gmra.mxu0 %v1194
  %v1205 = vpop.f32.mrf.mxu0
  %v1206 = vadd.f32 0.0, %v1205
  %v1207 = vpop.f32.mrf.mxu0
  %v1208 = vadd.f32 0.0, %v1207
  %1209 = vdwg.mxu0
  %1210 = vmatpush.bf16.msra.mxu0 0
  %1211 = vmatpush.bf16.msra.mxu0 0
  %1212 = vmatpush.bf16.msra.mxu0 0
  %1213 = vmatpush.bf16.msra.mxu0 0
  %1214 = vmatpush.bf16.msra.mxu0 %v478
  %1215 = vmatpush.bf16.msra.mxu0 %v476
  %1216 = vmatpush.bf16.msra.mxu0 %v474
  %1217 = vmatpush.bf16.msra.mxu0 %v472
  %1218 = vmatmul.bf16.gmra.mxu0 %v1194
  %v1219 = vpop.f32.mrf.mxu0
  %v1220 = vadd.f32 0.0, %v1219
  %v1221 = vpop.f32.mrf.mxu0
  %v1222 = vadd.f32 0.0, %v1221
  %1223 = vdwg.mxu0
  %v1224 = vadd.f32 %v1188, %v1206
  %v1225 = vadd.f32 %v1189, %v1220
  %v1226 = vadd.f32 %v1190, %v1208
  %v1227 = vadd.f32 %v1191, %v1222
  %v1228 = vxor.u32 %v1224, 2147483648
  %v1229 = vxor.u32 %v1225, 2147483648
  %v1230 = vxor.u32 %v1226, 2147483648
  %v1231 = vxor.u32 %v1227, 2147483648
  %v1232 = vmul.f32 %v1228, 1.442695
  %v1233 = vpow.pop %v1232
  %v1234 = vmul.f32 %v1229, 1.442695
  %v1235 = vpow.pop %v1234
  %v1236 = vmul.f32 %v1230, 1.442695
  %v1237 = vpow.pop %v1236
  %v1238 = vmul.f32 %v1231, 1.442695
  %v1239 = vpow.pop %v1238
  %v1240 = vadd.f32 %v1233, 1.0
  %v1241 = vadd.f32 %v1235, 1.0
  %v1242 = vadd.f32 %v1237, 1.0
  %v1243 = vadd.f32 %v1239, 1.0
  %v1244 = vrcp.pop %v1240
  %v1245 = vmul.f32 %v1240, %v1244
  %v1246 = vsub.f32 1.0, %v1245
  %v1247 = vmul.f32 %v1244, %v1246
  %v1248 = vadd.f32 %v1244, %v1247
  %vm1249 = vweird.f32 %v1240
  %vm1250 = vweird.f32 %v1244
  %vm1251 = vmor %vm1249, %vm1250
  %v1252 = vsel %vm1251, %v1244, %v1248
  %v1253 = vand.u32 2147483647, %v1240
  %vm1254 = vcmp.eq.f32.partialorder %v1253, 8.507059e+37
  %v1255 = vand.u32 %v1240, 2147483648
  %v1256 = vor.u32 1.1754944e-38, %v1255
  %v1257 = vsel %vm1254, %v1256, %v1252
  %v1258 = vmul.f32 1.0, %v1257
  %v1259 = vrcp.pop %v1241
  %v1260 = vmul.f32 %v1241, %v1259
  %v1261 = vsub.f32 1.0, %v1260
  %v1262 = vmul.f32 %v1259, %v1261
  %v1263 = vadd.f32 %v1259, %v1262
  %vm1264 = vweird.f32 %v1241
  %vm1265 = vweird.f32 %v1259
  %vm1266 = vmor %vm1264, %vm1265
  %v1267 = vsel %vm1266, %v1259, %v1263
  %v1268 = vand.u32 2147483647, %v1241
  %vm1269 = vcmp.eq.f32.partialorder %v1268, 8.507059e+37
  %v1270 = vand.u32 %v1241, 2147483648
  %v1271 = vor.u32 1.1754944e-38, %v1270
  %v1272 = vsel %vm1269, %v1271, %v1267
  %v1273 = vmul.f32 1.0, %v1272
  %v1274 = vrcp.pop %v1242
  %v1275 = vmul.f32 %v1242, %v1274
  %v1276 = vsub.f32 1.0, %v1275
  %v1277 = vmul.f32 %v1274, %v1276
  %v1278 = vadd.f32 %v1274, %v1277
  %vm1279 = vweird.f32 %v1242
  %vm1280 = vweird.f32 %v1274
  %vm1281 = vmor %vm1279, %vm1280
  %v1282 = vsel %vm1281, %v1274, %v1278
  %v1283 = vand.u32 2147483647, %v1242
  %vm1284 = vcmp.eq.f32.partialorder %v1283, 8.507059e+37
  %v1285 = vand.u32 %v1242, 2147483648
  %v1286 = vor.u32 1.1754944e-38, %v1285
  %v1287 = vsel %vm1284, %v1286, %v1282
  %v1288 = vmul.f32 1.0, %v1287
  %v1289 = vrcp.pop %v1243
  %v1290 = vmul.f32 %v1243, %v1289
  %v1291 = vsub.f32 1.0, %v1290
  %v1292 = vmul.f32 %v1289, %v1291
  %v1293 = vadd.f32 %v1289, %v1292
  %vm1294 = vweird.f32 %v1243
  %vm1295 = vweird.f32 %v1289
  %vm1296 = vmor %vm1294, %vm1295
  %v1297 = vsel %vm1296, %v1289, %v1293
  %v1298 = vand.u32 2147483647, %v1243
  %vm1299 = vcmp.eq.f32.partialorder %v1298, 8.507059e+37
  %v1300 = vand.u32 %v1243, 2147483648
  %v1301 = vor.u32 1.1754944e-38, %v1300
  %v1302 = vsel %vm1299, %v1301, %v1297
  %v1303 = vmul.f32 1.0, %v1302
  %v1304 = vmul.f32 %v1273, 2.0
  %v1305 = vmul.f32 %v1303, 2.0
  %v1306 = vsub.f32 %v1304, 1.0
  %v1307 = vsub.f32 %v1305, 1.0
  %v1308 = vmul.f32 %v1258, %v1179
  %v1309 = vmul.f32 %v1288, %v1180
  %v1310 = vmul.f32 %v1258, %v1306
  %v1311 = vmul.f32 %v1288, %v1307
  %1314 = vrot.lane.b32.xlu0 %v1310, 64
  %v1315 = vpop.permute.xlu0 %1314
  %1316 = vrot.lane.b32.xlu0 %v1311, 64
  %v1317 = vpop.permute.xlu0 %1316
  %v1320 = vadd.f32 %v1308, %v1315
  %v1321 = vadd.f32 %v1309, %v1317
  %v1322 = vtanh.pop %v1320
  %v1323 = vtanh.pop %v1321
  %v1324 = vmul.f32 %v1273, %v1322
  %v1325 = vmul.f32 %v1303, %v1323
  %s1326 = scalar_lea.vmem [#allocation2], 96
  %v1327 = vld [vmem:[%s1326] sm:$0xff]
  %v1328 = vld [vmem:[%s1326 + $0x8] sm:$0xff]
  %v1329 = vunpack.c.l.bf16 %v1327
  %v1330 = vunpack.c.h.bf16 %v1327
  %v1331 = vunpack.c.l.bf16 %v1328
  %v1332 = vunpack.c.h.bf16 %v1328
  %v1333 = vpack.c.bf16 %v1325, %v1324
  %v1335 = vsel %vm487, %v1333, 0
  %1337 = vmatpush.bf16.msra.mxu0 0
  %1338 = vmatpush.bf16.msra.mxu0 0
  %1339 = vmatpush.bf16.msra.mxu0 0
  %1340 = vmatpush.bf16.msra.mxu0 0
  %1341 = vmatpush.bf16.msra.mxu0 %v477
  %1342 = vmatpush.bf16.msra.mxu0 %v475
  %1343 = vmatpush.bf16.msra.mxu0 %v473
  %1344 = vmatpush.bf16.msra.mxu0 %v471
  %1345 = vmatmul.bf16.gmra.mxu0 %v1335
  %v1346 = vpop.f32.mrf.mxu0
  %v1347 = vadd.f32 0.0, %v1346
  %v1348 = vpop.f32.mrf.mxu0
  %v1349 = vadd.f32 0.0, %v1348
  %1350 = vdwg.mxu0
  %1351 = vmatpush.bf16.msra.mxu0 0
  %1352 = vmatpush.bf16.msra.mxu0 0
  %1353 = vmatpush.bf16.msra.mxu0 0
  %1354 = vmatpush.bf16.msra.mxu0 0
  %1355 = vmatpush.bf16.msra.mxu0 %v478
  %1356 = vmatpush.bf16.msra.mxu0 %v476
  %1357 = vmatpush.bf16.msra.mxu0 %v474
  %1358 = vmatpush.bf16.msra.mxu0 %v472
  %1359 = vmatmul.bf16.gmra.mxu0 %v1335
  %v1360 = vpop.f32.mrf.mxu0
  %v1361 = vadd.f32 0.0, %v1360
  %v1362 = vpop.f32.mrf.mxu0
  %v1363 = vadd.f32 0.0, %v1362
  %1364 = vdwg.mxu0
  %v1365 = vadd.f32 %v1329, %v1347
  %v1366 = vadd.f32 %v1330, %v1361
  %v1367 = vadd.f32 %v1331, %v1349
  %v1368 = vadd.f32 %v1332, %v1363
  %v1369 = vxor.u32 %v1365, 2147483648
  %v1370 = vxor.u32 %v1366, 2147483648
  %v1371 = vxor.u32 %v1367, 2147483648
  %v1372 = vxor.u32 %v1368, 2147483648
  %v1373 = vmul.f32 %v1369, 1.442695
  %v1374 = vpow.pop %v1373
  %v1375 = vmul.f32 %v1370, 1.442695
  %v1376 = vpow.pop %v1375
  %v1377 = vmul.f32 %v1371, 1.442695
  %v1378 = vpow.pop %v1377
  %v1379 = vmul.f32 %v1372, 1.442695
  %v1380 = vpow.pop %v1379
  %v1381 = vadd.f32 %v1374, 1.0
  %v1382 = vadd.f32 %v1376, 1.0
  %v1383 = vadd.f32 %v1378, 1.0
  %v1384 = vadd.f32 %v1380, 1.0
  %v1385 = vrcp.pop %v1381
  %v1386 = vmul.f32 %v1381, %v1385
  %v1387 = vsub.f32 1.0, %v1386
  %v1388 = vmul.f32 %v1385, %v1387
  %v1389 = vadd.f32 %v1385, %v1388
  %vm1390 = vweird.f32 %v1381
  %vm1391 = vweird.f32 %v1385
  %vm1392 = vmor %vm1390, %vm1391
  %v1393 = vsel %vm1392, %v1385, %v1389
  %v1394 = vand.u32 2147483647, %v1381
  %vm1395 = vcmp.eq.f32.partialorder %v1394, 8.507059e+37
  %v1396 = vand.u32 %v1381, 2147483648
  %v1397 = vor.u32 1.1754944e-38, %v1396
  %v1398 = vsel %vm1395, %v1397, %v1393
  %v1399 = vmul.f32 1.0, %v1398
  %v1400 = vrcp.pop %v1382
  %v1401 = vmul.f32 %v1382, %v1400
  %v1402 = vsub.f32 1.0, %v1401
  %v1403 = vmul.f32 %v1400, %v1402
  %v1404 = vadd.f32 %v1400, %v1403
  %vm1405 = vweird.f32 %v1382
  %vm1406 = vweird.f32 %v1400
  %vm1407 = vmor %vm1405, %vm1406
  %v1408 = vsel %vm1407, %v1400, %v1404
  %v1409 = vand.u32 2147483647, %v1382
  %vm1410 = vcmp.eq.f32.partialorder %v1409, 8.507059e+37
  %v1411 = vand.u32 %v1382, 2147483648
  %v1412 = vor.u32 1.1754944e-38, %v1411
  %v1413 = vsel %vm1410, %v1412, %v1408
  %v1414 = vmul.f32 1.0, %v1413
  %v1415 = vrcp.pop %v1383
  %v1416 = vmul.f32 %v1383, %v1415
  %v1417 = vsub.f32 1.0, %v1416
  %v1418 = vmul.f32 %v1415, %v1417
  %v1419 = vadd.f32 %v1415, %v1418
  %vm1420 = vweird.f32 %v1383
  %vm1421 = vweird.f32 %v1415
  %vm1422 = vmor %vm1420, %vm1421
  %v1423 = vsel %vm1422, %v1415, %v1419
  %v1424 = vand.u32 2147483647, %v1383
  %vm1425 = vcmp.eq.f32.partialorder %v1424, 8.507059e+37
  %v1426 = vand.u32 %v1383, 2147483648
  %v1427 = vor.u32 1.1754944e-38, %v1426
  %v1428 = vsel %vm1425, %v1427, %v1423
  %v1429 = vmul.f32 1.0, %v1428
  %v1430 = vrcp.pop %v1384
  %v1431 = vmul.f32 %v1384, %v1430
  %v1432 = vsub.f32 1.0, %v1431
  %v1433 = vmul.f32 %v1430, %v1432
  %v1434 = vadd.f32 %v1430, %v1433
  %vm1435 = vweird.f32 %v1384
  %vm1436 = vweird.f32 %v1430
  %vm1437 = vmor %vm1435, %vm1436
  %v1438 = vsel %vm1437, %v1430, %v1434
  %v1439 = vand.u32 2147483647, %v1384
  %vm1440 = vcmp.eq.f32.partialorder %v1439, 8.507059e+37
  %v1441 = vand.u32 %v1384, 2147483648
  %v1442 = vor.u32 1.1754944e-38, %v1441
  %v1443 = vsel %vm1440, %v1442, %v1438
  %v1444 = vmul.f32 1.0, %v1443
  %v1445 = vmul.f32 %v1414, 2.0
  %v1446 = vmul.f32 %v1444, 2.0
  %v1447 = vsub.f32 %v1445, 1.0
  %v1448 = vsub.f32 %v1446, 1.0
  %v1449 = vmul.f32 %v1399, %v1320
  %v1450 = vmul.f32 %v1429, %v1321
  %v1451 = vmul.f32 %v1399, %v1447
  %v1452 = vmul.f32 %v1429, %v1448
  %1455 = vrot.lane.b32.xlu0 %v1451, 64
  %v1456 = vpop.permute.xlu0 %1455
  %1457 = vrot.lane.b32.xlu0 %v1452, 64
  %v1458 = vpop.permute.xlu0 %1457
  %v1461 = vadd.f32 %v1449, %v1456
  %v1462 = vadd.f32 %v1450, %v1458
  %v1463 = vtanh.pop %v1461
  %v1464 = vtanh.pop %v1462
  %v1465 = vmul.f32 %v1414, %v1463
  %v1466 = vmul.f32 %v1444, %v1464
  %s1467 = scalar_lea.vmem %s0, 112
  %v1468 = vld [vmem:[%s1467] sm:$0xf]
  %v1469 = vld [vmem:[%s1467 + $0x4] sm:$0xf]
  %v1470 = vld [vmem:[%s1467 + $0x8] sm:$0xf]
  %v1471 = vld [vmem:[%s1467 + $0xc] sm:$0xf]
  %v1472 = vld [vmem:[%s1467 + $0x10] sm:$0xf]
  %v1473 = vld [vmem:[%s1467 + $0x14] sm:$0xf]
  %v1474 = vld [vmem:[%s1467 + $0x18] sm:$0xf]
  %v1475 = vld [vmem:[%s1467 + $0x1c] sm:$0xf]
  %v1476 = vld [vmem:[%s1467 + $0x20] sm:$0xf]
  %v1477 = vld [vmem:[%s1467 + $0x24] sm:$0xf]
  %v1478 = vld [vmem:[%s1467 + $0x28] sm:$0xf]
  %v1479 = vld [vmem:[%s1467 + $0x2c] sm:$0xf]
  %v1480 = vld [vmem:[%s1467 + $0x30] sm:$0xf]
  %v1481 = vld [vmem:[%s1467 + $0x34] sm:$0xf]
  %v1496 = vunpack.c.l.b16 %v1468
  %v1497 = vunpack.c.l.b16 %v1469
  %v1498 = vunpack.c.l.b16 %v1470
  %v1499 = vunpack.c.l.b16 %v1471
  %v1500 = vunpack.c.l.b16 %v1472
  %v1501 = vunpack.c.l.b16 %v1473
  %v1502 = vunpack.c.l.b16 %v1474
  %v1503 = vunpack.c.l.b16 %v1475
  %v1504 = vunpack.c.l.b16 %v1476
  %v1505 = vunpack.c.l.b16 %v1477
  %v1506 = vunpack.c.l.b16 %v1478
  %v1507 = vunpack.c.l.b16 %v1479
  %v1508 = vunpack.c.l.b16 %v1480
  %v1509 = vunpack.c.l.b16 %v1481
  %v1510 = vpack.c.b16 %v1497, %v1496
  %v1511 = vpack.c.b16 %v1499, %v1498
  %v1512 = vpack.c.b16 %v1501, %v1500
  %v1513 = vpack.c.b16 %v1503, %v1502
  %v1514 = vpack.c.b16 %v1505, %v1504
  %v1515 = vpack.c.b16 %v1507, %v1506
  %v1516 = vpack.c.b16 %v1509, %v1508
  %v1518 = vsel %vm109, %v1510, 0
  %v1521 = vsel %vm109, %v1511, 0
  %v1524 = vsel %vm109, %v1512, 0
  %v1527 = vsel %vm109, %v1513, 0
  %v1530 = vsel %vm109, %v1514, 0
  %v1533 = vsel %vm109, %v1515, 0
  %v1536 = vsel %vm109, %v1516, 0
  %1538 = vmatpush.bf16.msra.mxu0 0
  %1539 = vmatpush.bf16.msra.mxu0 0
  %1540 = vmatpush.bf16.msra.mxu0 0
  %1541 = vmatpush.bf16.msra.mxu0 0
  %1542 = vmatpush.bf16.msra.mxu0 0
  %1543 = vmatpush.bf16.msra.mxu0 0
  %1544 = vmatpush.bf16.msra.mxu0 %v133
  %1545 = vmatpush.bf16.msra.mxu0 %v103
  %1546 = vmatmul.bf16.gmra.mxu0 %v1518
  %v1547 = vpop.f32.mrf.mxu0
  %v1548 = vadd.f32 %v52, %v1547
  %v1549 = vpop.f32.mrf.mxu0
  %v1550 = vadd.f32 %v52, %v1549
  %1551 = vmatmul.bf16.gmra.mxu0 %v1521
  %v1552 = vpop.f32.mrf.mxu0
  %v1553 = vadd.f32 %v52, %v1552
  %v1554 = vpop.f32.mrf.mxu0
  %v1555 = vadd.f32 %v52, %v1554
  %1556 = vmatmul.bf16.gmra.mxu0 %v1524
  %v1557 = vpop.f32.mrf.mxu0
  %v1558 = vadd.f32 %v52, %v1557
  %v1559 = vpop.f32.mrf.mxu0
  %v1560 = vadd.f32 %v52, %v1559
  %1561 = vmatmul.bf16.gmra.mxu0 %v1527
  %v1562 = vpop.f32.mrf.mxu0
  %v1563 = vadd.f32 %v52, %v1562
  %v1564 = vpop.f32.mrf.mxu0
  %v1565 = vadd.f32 %v52, %v1564
  %1566 = vmatmul.bf16.gmra.mxu0 %v1530
  %v1567 = vpop.f32.mrf.mxu0
  %v1568 = vadd.f32 %v52, %v1567
  %v1569 = vpop.f32.mrf.mxu0
  %v1570 = vadd.f32 %v52, %v1569
  %1571 = vmatmul.bf16.gmra.mxu0 %v1533
  %v1572 = vpop.f32.mrf.mxu0
  %v1573 = vadd.f32 %v52, %v1572
  %v1574 = vpop.f32.mrf.mxu0
  %v1575 = vadd.f32 %v52, %v1574
  %1576 = vmatmul.bf16.gmra.mxu0 %v1536
  %v1577 = vpop.f32.mrf.mxu0
  %v1578 = vadd.f32 %v52, %v1577
  %v1579 = vpop.f32.mrf.mxu0
  %v1580 = vadd.f32 %v52, %v1579
  %1581 = vdwg.mxu0
  %1582 = vmatpush.bf16.msra.mxu0 0
  %1583 = vmatpush.bf16.msra.mxu0 0
  %1584 = vmatpush.bf16.msra.mxu0 0
  %1585 = vmatpush.bf16.msra.mxu0 0
  %1586 = vmatpush.bf16.msra.mxu0 0
  %1587 = vmatpush.bf16.msra.mxu0 0
  %1588 = vmatpush.bf16.msra.mxu0 %v136
  %1589 = vmatpush.bf16.msra.mxu0 %v104
  %1590 = vmatmul.bf16.gmra.mxu0 %v1518
  %v1591 = vpop.f32.mrf.mxu0
  %v1592 = vadd.f32 %v53, %v1591
  %v1593 = vpop.f32.mrf.mxu0
  %v1594 = vadd.f32 %v53, %v1593
  %1595 = vmatmul.bf16.gmra.mxu0 %v1521
  %v1596 = vpop.f32.mrf.mxu0
  %v1597 = vadd.f32 %v53, %v1596
  %v1598 = vpop.f32.mrf.mxu0
  %v1599 = vadd.f32 %v53, %v1598
  %1600 = vmatmul.bf16.gmra.mxu0 %v1524
  %v1601 = vpop.f32.mrf.mxu0
  %v1602 = vadd.f32 %v53, %v1601
  %v1603 = vpop.f32.mrf.mxu0
  %v1604 = vadd.f32 %v53, %v1603
  %1605 = vmatmul.bf16.gmra.mxu0 %v1527
  %v1606 = vpop.f32.mrf.mxu0
  %v1607 = vadd.f32 %v53, %v1606
  %v1608 = vpop.f32.mrf.mxu0
  %v1609 = vadd.f32 %v53, %v1608
  %1610 = vmatmul.bf16.gmra.mxu0 %v1530
  %v1611 = vpop.f32.mrf.mxu0
  %v1612 = vadd.f32 %v53, %v1611
  %v1613 = vpop.f32.mrf.mxu0
  %v1614 = vadd.f32 %v53, %v1613
  %1615 = vmatmul.bf16.gmra.mxu0 %v1533
  %v1616 = vpop.f32.mrf.mxu0
  %v1617 = vadd.f32 %v53, %v1616
  %v1618 = vpop.f32.mrf.mxu0
  %v1619 = vadd.f32 %v53, %v1618
  %1620 = vmatmul.bf16.gmra.mxu0 %v1536
  %v1621 = vpop.f32.mrf.mxu0
  %v1622 = vadd.f32 %v53, %v1621
  %v1623 = vpop.f32.mrf.mxu0
  %v1624 = vadd.f32 %v53, %v1623
  %1625 = vdwg.mxu0
  %v1626 = vpack.c.bf16 %v1592, %v1548
  %v1627 = vpack.c.bf16 %v1594, %v1550
  %v1628 = vpack.c.bf16 %v1597, %v1553
  %v1629 = vpack.c.bf16 %v1599, %v1555
  %v1630 = vpack.c.bf16 %v1602, %v1558
  %v1631 = vpack.c.bf16 %v1604, %v1560
  %v1632 = vpack.c.bf16 %v1607, %v1563
  %v1633 = vpack.c.bf16 %v1609, %v1565
  %v1634 = vpack.c.bf16 %v1612, %v1568
  %v1635 = vpack.c.bf16 %v1614, %v1570
  %v1636 = vpack.c.bf16 %v1617, %v1573
  %v1637 = vpack.c.bf16 %v1619, %v1575
  %v1638 = vpack.c.bf16 %v1622, %v1578
  %v1639 = vpack.c.bf16 %v1624, %v1580
  %1640 = vst [vmem:[#allocation2] sm:$0xff] %v1626
  %1641 = vst [vmem:[#allocation2 + $0x8] sm:$0xff] %v1627
  %1642 = vst [vmem:[#allocation2 + $0x10] sm:$0xff] %v1628
  %1643 = vst [vmem:[#allocation2 + $0x18] sm:$0xff] %v1629
  %1644 = vst [vmem:[#allocation2 + $0x20] sm:$0xff] %v1630
  %1645 = vst [vmem:[#allocation2 + $0x28] sm:$0xff] %v1631
  %1646 = vst [vmem:[#allocation2 + $0x30] sm:$0xff] %v1632
  %1647 = vst [vmem:[#allocation2 + $0x38] sm:$0xff] %v1633
  %1648 = vst [vmem:[#allocation2 + $0x40] sm:$0xff] %v1634
  %1649 = vst [vmem:[#allocation2 + $0x48] sm:$0xff] %v1635
  %1650 = vst [vmem:[#allocation2 + $0x50] sm:$0xff] %v1636
  %1651 = vst [vmem:[#allocation2 + $0x58] sm:$0xff] %v1637
  %1652 = vst [vmem:[#allocation2 + $0x60] sm:$0xff] %v1638
  %1653 = vst [vmem:[#allocation2 + $0x68] sm:$0xff] %v1639
  %v1654 = vld [vmem:[#allocation3] sm:$0xff]
  %v1655 = vld [vmem:[#allocation3 + $0x8] sm:$0xff]
  %v1656 = vunpack.c.l.bf16 %v1654
  %v1657 = vunpack.c.h.bf16 %v1654
  %v1658 = vunpack.c.l.bf16 %v1655
  %v1659 = vunpack.c.h.bf16 %v1655
  %v1660 = vpack.c.bf16 %v1466, %v1465
  %v1662 = vsel %vm487, %v1660, 0
  %1664 = vmatpush.bf16.msra.mxu0 0
  %1665 = vmatpush.bf16.msra.mxu0 0
  %1666 = vmatpush.bf16.msra.mxu0 0
  %1667 = vmatpush.bf16.msra.mxu0 0
  %1668 = vmatpush.bf16.msra.mxu0 %v477
  %1669 = vmatpush.bf16.msra.mxu0 %v475
  %1670 = vmatpush.bf16.msra.mxu0 %v473
  %1671 = vmatpush.bf16.msra.mxu0 %v471
  %1672 = vmatmul.bf16.gmra.mxu0 %v1662
  %v1673 = vpop.f32.mrf.mxu0
  %v1674 = vadd.f32 0.0, %v1673
  %v1675 = vpop.f32.mrf.mxu0
  %v1676 = vadd.f32 0.0, %v1675
  %1677 = vdwg.mxu0
  %1678 = vmatpush.bf16.msra.mxu0 0
  %1679 = vmatpush.bf16.msra.mxu0 0
  %1680 = vmatpush.bf16.msra.mxu0 0
  %1681 = vmatpush.bf16.msra.mxu0 0
  %1682 = vmatpush.bf16.msra.mxu0 %v478
  %1683 = vmatpush.bf16.msra.mxu0 %v476
  %1684 = vmatpush.bf16.msra.mxu0 %v474
  %1685 = vmatpush.bf16.msra.mxu0 %v472
  %1686 = vmatmul.bf16.gmra.mxu0 %v1662
  %v1687 = vpop.f32.mrf.mxu0
  %v1688 = vadd.f32 0.0, %v1687
  %v1689 = vpop.f32.mrf.mxu0
  %v1690 = vadd.f32 0.0, %v1689
  %1691 = vdwg.mxu0
  %v1692 = vadd.f32 %v1656, %v1674
  %v1693 = vadd.f32 %v1657, %v1688
  %v1694 = vadd.f32 %v1658, %v1676
  %v1695 = vadd.f32 %v1659, %v1690
  %v1696 = vxor.u32 %v1692, 2147483648
  %v1697 = vxor.u32 %v1693, 2147483648
  %v1698 = vxor.u32 %v1694, 2147483648
  %v1699 = vxor.u32 %v1695, 2147483648
  %v1700 = vmul.f32 %v1696, 1.442695
  %v1701 = vpow.pop %v1700
  %v1702 = vmul.f32 %v1697, 1.442695
  %v1703 = vpow.pop %v1702
  %v1704 = vmul.f32 %v1698, 1.442695
  %v1705 = vpow.pop %v1704
  %v1706 = vmul.f32 %v1699, 1.442695
  %v1707 = vpow.pop %v1706
  %v1708 = vadd.f32 %v1701, 1.0
  %v1709 = vadd.f32 %v1703, 1.0
  %v1710 = vadd.f32 %v1705, 1.0
  %v1711 = vadd.f32 %v1707, 1.0
  %v1712 = vrcp.pop %v1708
  %v1713 = vmul.f32 %v1708, %v1712
  %v1714 = vsub.f32 1.0, %v1713
  %v1715 = vmul.f32 %v1712, %v1714
  %v1716 = vadd.f32 %v1712, %v1715
  %vm1717 = vweird.f32 %v1708
  %vm1718 = vweird.f32 %v1712
  %vm1719 = vmor %vm1717, %vm1718
  %v1720 = vsel %vm1719, %v1712, %v1716
  %v1721 = vand.u32 2147483647, %v1708
  %vm1722 = vcmp.eq.f32.partialorder %v1721, 8.507059e+37
  %v1723 = vand.u32 %v1708, 2147483648
  %v1724 = vor.u32 1.1754944e-38, %v1723
  %v1725 = vsel %vm1722, %v1724, %v1720
  %v1726 = vmul.f32 1.0, %v1725
  %v1727 = vrcp.pop %v1709
  %v1728 = vmul.f32 %v1709, %v1727
  %v1729 = vsub.f32 1.0, %v1728
  %v1730 = vmul.f32 %v1727, %v1729
  %v1731 = vadd.f32 %v1727, %v1730
  %vm1732 = vweird.f32 %v1709
  %vm1733 = vweird.f32 %v1727
  %vm1734 = vmor %vm1732, %vm1733
  %v1735 = vsel %vm1734, %v1727, %v1731
  %v1736 = vand.u32 2147483647, %v1709
  %vm1737 = vcmp.eq.f32.partialorder %v1736, 8.507059e+37
  %v1738 = vand.u32 %v1709, 2147483648
  %v1739 = vor.u32 1.1754944e-38, %v1738
  %v1740 = vsel %vm1737, %v1739, %v1735
  %v1741 = vmul.f32 1.0, %v1740
  %v1742 = vrcp.pop %v1710
  %v1743 = vmul.f32 %v1710, %v1742
  %v1744 = vsub.f32 1.0, %v1743
  %v1745 = vmul.f32 %v1742, %v1744
  %v1746 = vadd.f32 %v1742, %v1745
  %vm1747 = vweird.f32 %v1710
  %vm1748 = vweird.f32 %v1742
  %vm1749 = vmor %vm1747, %vm1748
  %v1750 = vsel %vm1749, %v1742, %v1746
  %v1751 = vand.u32 2147483647, %v1710
  %vm1752 = vcmp.eq.f32.partialorder %v1751, 8.507059e+37
  %v1753 = vand.u32 %v1710, 2147483648
  %v1754 = vor.u32 1.1754944e-38, %v1753
  %v1755 = vsel %vm1752, %v1754, %v1750
  %v1756 = vmul.f32 1.0, %v1755
  %v1757 = vrcp.pop %v1711
  %v1758 = vmul.f32 %v1711, %v1757
  %v1759 = vsub.f32 1.0, %v1758
  %v1760 = vmul.f32 %v1757, %v1759
  %v1761 = vadd.f32 %v1757, %v1760
  %vm1762 = vweird.f32 %v1711
  %vm1763 = vweird.f32 %v1757
  %vm1764 = vmor %vm1762, %vm1763
  %v1765 = vsel %vm1764, %v1757, %v1761
  %v1766 = vand.u32 2147483647, %v1711
  %vm1767 = vcmp.eq.f32.partialorder %v1766, 8.507059e+37
  %v1768 = vand.u32 %v1711, 2147483648
  %v1769 = vor.u32 1.1754944e-38, %v1768
  %v1770 = vsel %vm1767, %v1769, %v1765
  %v1771 = vmul.f32 1.0, %v1770
  %v1772 = vmul.f32 %v1741, 2.0
  %v1773 = vmul.f32 %v1771, 2.0
  %v1774 = vsub.f32 %v1772, 1.0
  %v1775 = vsub.f32 %v1773, 1.0
  %v1776 = vmul.f32 %v1726, %v1461
  %v1777 = vmul.f32 %v1756, %v1462
  %v1778 = vmul.f32 %v1726, %v1774
  %v1779 = vmul.f32 %v1756, %v1775
  %1782 = vrot.lane.b32.xlu0 %v1778, 64
  %v1783 = vpop.permute.xlu0 %1782
  %1784 = vrot.lane.b32.xlu0 %v1779, 64
  %v1785 = vpop.permute.xlu0 %1784
  %v1788 = vadd.f32 %v1776, %v1783
  %v1789 = vadd.f32 %v1777, %v1785
  %v1790 = vtanh.pop %v1788
  %v1791 = vtanh.pop %v1789
  %v1792 = vmul.f32 %v1741, %v1790
  %v1793 = vmul.f32 %v1771, %v1791
  %s1794 = scalar_lea.vmem [#allocation3], 16
  %v1795 = vld [vmem:[%s1794] sm:$0xff]
  %v1796 = vld [vmem:[%s1794 + $0x8] sm:$0xff]
  %v1797 = vunpack.c.l.bf16 %v1795
  %v1798 = vunpack.c.h.bf16 %v1795
  %v1799 = vunpack.c.l.bf16 %v1796
  %v1800 = vunpack.c.h.bf16 %v1796
  %v1801 = vpack.c.bf16 %v1793, %v1792
  %v1803 = vsel %vm487, %v1801, 0
  %1805 = vmatpush.bf16.msra.mxu0 0
  %1806 = vmatpush.bf16.msra.mxu0 0
  %1807 = vmatpush.bf16.msra.mxu0 0
  %1808 = vmatpush.bf16.msra.mxu0 0
  %1809 = vmatpush.bf16.msra.mxu0 %v477
  %1810 = vmatpush.bf16.msra.mxu0 %v475
  %1811 = vmatpush.bf16.msra.mxu0 %v473
  %1812 = vmatpush.bf16.msra.mxu0 %v471
  %1813 = vmatmul.bf16.gmra.mxu0 %v1803
  %v1814 = vpop.f32.mrf.mxu0
  %v1815 = vadd.f32 0.0, %v1814
  %v1816 = vpop.f32.mrf.mxu0
  %v1817 = vadd.f32 0.0, %v1816
  %1818 = vdwg.mxu0
  %1819 = vmatpush.bf16.msra.mxu0 0
  %1820 = vmatpush.bf16.msra.mxu0 0
  %1821 = vmatpush.bf16.msra.mxu0 0
  %1822 = vmatpush.bf16.msra.mxu0 0
  %1823 = vmatpush.bf16.msra.mxu0 %v478
  %1824 = vmatpush.bf16.msra.mxu0 %v476
  %1825 = vmatpush.bf16.msra.mxu0 %v474
  %1826 = vmatpush.bf16.msra.mxu0 %v472
  %1827 = vmatmul.bf16.gmra.mxu0 %v1803
  %v1828 = vpop.f32.mrf.mxu0
  %v1829 = vadd.f32 0.0, %v1828
  %v1830 = vpop.f32.mrf.mxu0
  %v1831 = vadd.f32 0.0, %v1830
  %1832 = vdwg.mxu0
  %v1833 = vadd.f32 %v1797, %v1815
  %v1834 = vadd.f32 %v1798, %v1829
  %v1835 = vadd.f32 %v1799, %v1817
  %v1836 = vadd.f32 %v1800, %v1831
  %v1837 = vxor.u32 %v1833, 2147483648
  %v1838 = vxor.u32 %v1834, 2147483648
  %v1839 = vxor.u32 %v1835, 2147483648
  %v1840 = vxor.u32 %v1836, 2147483648
  %v1841 = vmul.f32 %v1837, 1.442695
  %v1842 = vpow.pop %v1841
  %v1843 = vmul.f32 %v1838, 1.442695
  %v1844 = vpow.pop %v1843
  %v1845 = vmul.f32 %v1839, 1.442695
  %v1846 = vpow.pop %v1845
  %v1847 = vmul.f32 %v1840, 1.442695
  %v1848 = vpow.pop %v1847
  %v1849 = vadd.f32 %v1842, 1.0
  %v1850 = vadd.f32 %v1844, 1.0
  %v1851 = vadd.f32 %v1846, 1.0
  %v1852 = vadd.f32 %v1848, 1.0
  %v1853 = vrcp.pop %v1849
  %v1854 = vmul.f32 %v1849, %v1853
  %v1855 = vsub.f32 1.0, %v1854
  %v1856 = vmul.f32 %v1853, %v1855
  %v1857 = vadd.f32 %v1853, %v1856
  %vm1858 = vweird.f32 %v1849
  %vm1859 = vweird.f32 %v1853
  %vm1860 = vmor %vm1858, %vm1859
  %v1861 = vsel %vm1860, %v1853, %v1857
  %v1862 = vand.u32 2147483647, %v1849
  %vm1863 = vcmp.eq.f32.partialorder %v1862, 8.507059e+37
  %v1864 = vand.u32 %v1849, 2147483648
  %v1865 = vor.u32 1.1754944e-38, %v1864
  %v1866 = vsel %vm1863, %v1865, %v1861
  %v1867 = vmul.f32 1.0, %v1866
  %v1868 = vrcp.pop %v1850
  %v1869 = vmul.f32 %v1850, %v1868
  %v1870 = vsub.f32 1.0, %v1869
  %v1871 = vmul.f32 %v1868, %v1870
  %v1872 = vadd.f32 %v1868, %v1871
  %vm1873 = vweird.f32 %v1850
  %vm1874 = vweird.f32 %v1868
  %vm1875 = vmor %vm1873, %vm1874
  %v1876 = vsel %vm1875, %v1868, %v1872
  %v1877 = vand.u32 2147483647, %v1850
  %vm1878 = vcmp.eq.f32.partialorder %v1877, 8.507059e+37
  %v1879 = vand.u32 %v1850, 2147483648
  %v1880 = vor.u32 1.1754944e-38, %v1879
  %v1881 = vsel %vm1878, %v1880, %v1876
  %v1882 = vmul.f32 1.0, %v1881
  %v1883 = vrcp.pop %v1851
  %v1884 = vmul.f32 %v1851, %v1883
  %v1885 = vsub.f32 1.0, %v1884
  %v1886 = vmul.f32 %v1883, %v1885
  %v1887 = vadd.f32 %v1883, %v1886
  %vm1888 = vweird.f32 %v1851
  %vm1889 = vweird.f32 %v1883
  %vm1890 = vmor %vm1888, %vm1889
  %v1891 = vsel %vm1890, %v1883, %v1887
  %v1892 = vand.u32 2147483647, %v1851
  %vm1893 = vcmp.eq.f32.partialorder %v1892, 8.507059e+37
  %v1894 = vand.u32 %v1851, 2147483648
  %v1895 = vor.u32 1.1754944e-38, %v1894
  %v1896 = vsel %vm1893, %v1895, %v1891
  %v1897 = vmul.f32 1.0, %v1896
  %v1898 = vrcp.pop %v1852
  %v1899 = vmul.f32 %v1852, %v1898
  %v1900 = vsub.f32 1.0, %v1899
  %v1901 = vmul.f32 %v1898, %v1900
  %v1902 = vadd.f32 %v1898, %v1901
  %vm1903 = vweird.f32 %v1852
  %vm1904 = vweird.f32 %v1898
  %vm1905 = vmor %vm1903, %vm1904
  %v1906 = vsel %vm1905, %v1898, %v1902
  %v1907 = vand.u32 2147483647, %v1852
  %vm1908 = vcmp.eq.f32.partialorder %v1907, 8.507059e+37
  %v1909 = vand.u32 %v1852, 2147483648
  %v1910 = vor.u32 1.1754944e-38, %v1909
  %v1911 = vsel %vm1908, %v1910, %v1906
  %v1912 = vmul.f32 1.0, %v1911
  %v1913 = vmul.f32 %v1882, 2.0
  %v1914 = vmul.f32 %v1912, 2.0
  %v1915 = vsub.f32 %v1913, 1.0
  %v1916 = vsub.f32 %v1914, 1.0
  %v1917 = vmul.f32 %v1867, %v1788
  %v1918 = vmul.f32 %v1897, %v1789
  %v1919 = vmul.f32 %v1867, %v1915
  %v1920 = vmul.f32 %v1897, %v1916
  %1923 = vrot.lane.b32.xlu0 %v1919, 64
  %v1924 = vpop.permute.xlu0 %1923
  %1925 = vrot.lane.b32.xlu0 %v1920, 64
  %v1926 = vpop.permute.xlu0 %1925
  %v1929 = vadd.f32 %v1917, %v1924
  %v1930 = vadd.f32 %v1918, %v1926
  %v1931 = vtanh.pop %v1929
  %v1932 = vtanh.pop %v1930
  %v1933 = vmul.f32 %v1882, %v1931
  %v1934 = vmul.f32 %v1912, %v1932
  %s1935 = scalar_lea.vmem [#allocation3], 32
  %v1936 = vld [vmem:[%s1935] sm:$0xff]
  %v1937 = vld [vmem:[%s1935 + $0x8] sm:$0xff]
  %v1938 = vunpack.c.l.bf16 %v1936
  %v1939 = vunpack.c.h.bf16 %v1936
  %v1940 = vunpack.c.l.bf16 %v1937
  %v1941 = vunpack.c.h.bf16 %v1937
  %v1942 = vpack.c.bf16 %v1934, %v1933
  %v1944 = vsel %vm487, %v1942, 0
  %1946 = vmatpush.bf16.msra.mxu0 0
  %1947 = vmatpush.bf16.msra.mxu0 0
  %1948 = vmatpush.bf16.msra.mxu0 0
  %1949 = vmatpush.bf16.msra.mxu0 0
  %1950 = vmatpush.bf16.msra.mxu0 %v477
  %1951 = vmatpush.bf16.msra.mxu0 %v475
  %1952 = vmatpush.bf16.msra.mxu0 %v473
  %1953 = vmatpush.bf16.msra.mxu0 %v471
  %1954 = vmatmul.bf16.gmra.mxu0 %v1944
  %v1955 = vpop.f32.mrf.mxu0
  %v1956 = vadd.f32 0.0, %v1955
  %v1957 = vpop.f32.mrf.mxu0
  %v1958 = vadd.f32 0.0, %v1957
  %1959 = vdwg.mxu0
  %1960 = vmatpush.bf16.msra.mxu0 0
  %1961 = vmatpush.bf16.msra.mxu0 0
  %1962 = vmatpush.bf16.msra.mxu0 0
  %1963 = vmatpush.bf16.msra.mxu0 0
  %1964 = vmatpush.bf16.msra.mxu0 %v478
  %1965 = vmatpush.bf16.msra.mxu0 %v476
  %1966 = vmatpush.bf16.msra.mxu0 %v474
  %1967 = vmatpush.bf16.msra.mxu0 %v472
  %1968 = vmatmul.bf16.gmra.mxu0 %v1944
  %v1969 = vpop.f32.mrf.mxu0
  %v1970 = vadd.f32 0.0, %v1969
  %v1971 = vpop.f32.mrf.mxu0
  %v1972 = vadd.f32 0.0, %v1971
  %1973 = vdwg.mxu0
  %v1974 = vadd.f32 %v1938, %v1956
  %v1975 = vadd.f32 %v1939, %v1970
  %v1976 = vadd.f32 %v1940, %v1958
  %v1977 = vadd.f32 %v1941, %v1972
  %v1978 = vxor.u32 %v1974, 2147483648
  %v1979 = vxor.u32 %v1975, 2147483648
  %v1980 = vxor.u32 %v1976, 2147483648
  %v1981 = vxor.u32 %v1977, 2147483648
  %v1982 = vmul.f32 %v1978, 1.442695
  %v1983 = vpow.pop %v1982
  %v1984 = vmul.f32 %v1979, 1.442695
  %v1985 = vpow.pop %v1984
  %v1986 = vmul.f32 %v1980, 1.442695
  %v1987 = vpow.pop %v1986
  %v1988 = vmul.f32 %v1981, 1.442695
  %v1989 = vpow.pop %v1988
  %v1990 = vadd.f32 %v1983, 1.0
  %v1991 = vadd.f32 %v1985, 1.0
  %v1992 = vadd.f32 %v1987, 1.0
  %v1993 = vadd.f32 %v1989, 1.0
  %v1994 = vrcp.pop %v1990
  %v1995 = vmul.f32 %v1990, %v1994
  %v1996 = vsub.f32 1.0, %v1995
  %v1997 = vmul.f32 %v1994, %v1996
  %v1998 = vadd.f32 %v1994, %v1997
  %vm1999 = vweird.f32 %v1990
  %vm2000 = vweird.f32 %v1994
  %vm2001 = vmor %vm1999, %vm2000
  %v2002 = vsel %vm2001, %v1994, %v1998
  %v2003 = vand.u32 2147483647, %v1990
  %vm2004 = vcmp.eq.f32.partialorder %v2003, 8.507059e+37
  %v2005 = vand.u32 %v1990, 2147483648
  %v2006 = vor.u32 1.1754944e-38, %v2005
  %v2007 = vsel %vm2004, %v2006, %v2002
  %v2008 = vmul.f32 1.0, %v2007
  %v2009 = vrcp.pop %v1991
  %v2010 = vmul.f32 %v1991, %v2009
  %v2011 = vsub.f32 1.0, %v2010
  %v2012 = vmul.f32 %v2009, %v2011
  %v2013 = vadd.f32 %v2009, %v2012
  %vm2014 = vweird.f32 %v1991
  %vm2015 = vweird.f32 %v2009
  %vm2016 = vmor %vm2014, %vm2015
  %v2017 = vsel %vm2016, %v2009, %v2013
  %v2018 = vand.u32 2147483647, %v1991
  %vm2019 = vcmp.eq.f32.partialorder %v2018, 8.507059e+37
  %v2020 = vand.u32 %v1991, 2147483648
  %v2021 = vor.u32 1.1754944e-38, %v2020
  %v2022 = vsel %vm2019, %v2021, %v2017
  %v2023 = vmul.f32 1.0, %v2022
  %v2024 = vrcp.pop %v1992
  %v2025 = vmul.f32 %v1992, %v2024
  %v2026 = vsub.f32 1.0, %v2025
  %v2027 = vmul.f32 %v2024, %v2026
  %v2028 = vadd.f32 %v2024, %v2027
  %vm2029 = vweird.f32 %v1992
  %vm2030 = vweird.f32 %v2024
  %vm2031 = vmor %vm2029, %vm2030
  %v2032 = vsel %vm2031, %v2024, %v2028
  %v2033 = vand.u32 2147483647, %v1992
  %vm2034 = vcmp.eq.f32.partialorder %v2033, 8.507059e+37
  %v2035 = vand.u32 %v1992, 2147483648
  %v2036 = vor.u32 1.1754944e-38, %v2035
  %v2037 = vsel %vm2034, %v2036, %v2032
  %v2038 = vmul.f32 1.0, %v2037
  %v2039 = vrcp.pop %v1993
  %v2040 = vmul.f32 %v1993, %v2039
  %v2041 = vsub.f32 1.0, %v2040
  %v2042 = vmul.f32 %v2039, %v2041
  %v2043 = vadd.f32 %v2039, %v2042
  %vm2044 = vweird.f32 %v1993
  %vm2045 = vweird.f32 %v2039
  %vm2046 = vmor %vm2044, %vm2045
  %v2047 = vsel %vm2046, %v2039, %v2043
  %v2048 = vand.u32 2147483647, %v1993
  %vm2049 = vcmp.eq.f32.partialorder %v2048, 8.507059e+37
  %v2050 = vand.u32 %v1993, 2147483648
  %v2051 = vor.u32 1.1754944e-38, %v2050
  %v2052 = vsel %vm2049, %v2051, %v2047
  %v2053 = vmul.f32 1.0, %v2052
  %v2054 = vmul.f32 %v2023, 2.0
  %v2055 = vmul.f32 %v2053, 2.0
  %v2056 = vsub.f32 %v2054, 1.0
  %v2057 = vsub.f32 %v2055, 1.0
  %v2058 = vmul.f32 %v2008, %v1929
  %v2059 = vmul.f32 %v2038, %v1930
  %v2060 = vmul.f32 %v2008, %v2056
  %v2061 = vmul.f32 %v2038, %v2057
  %2064 = vrot.lane.b32.xlu0 %v2060, 64
  %v2065 = vpop.permute.xlu0 %2064
  %2066 = vrot.lane.b32.xlu0 %v2061, 64
  %v2067 = vpop.permute.xlu0 %2066
  %v2070 = vadd.f32 %v2058, %v2065
  %v2071 = vadd.f32 %v2059, %v2067
  %v2072 = vtanh.pop %v2070
  %v2073 = vtanh.pop %v2071
  %v2074 = vmul.f32 %v2023, %v2072
  %v2075 = vmul.f32 %v2053, %v2073
  %s2076 = scalar_lea.vmem [#allocation3], 48
  %v2077 = vld [vmem:[%s2076] sm:$0xff]
  %v2078 = vld [vmem:[%s2076 + $0x8] sm:$0xff]
  %v2079 = vunpack.c.l.bf16 %v2077
  %v2080 = vunpack.c.h.bf16 %v2077
  %v2081 = vunpack.c.l.bf16 %v2078
  %v2082 = vunpack.c.h.bf16 %v2078
  %v2083 = vpack.c.bf16 %v2075, %v2074
  %v2085 = vsel %vm487, %v2083, 0
  %2087 = vmatpush.bf16.msra.mxu0 0
  %2088 = vmatpush.bf16.msra.mxu0 0
  %2089 = vmatpush.bf16.msra.mxu0 0
  %2090 = vmatpush.bf16.msra.mxu0 0
  %2091 = vmatpush.bf16.msra.mxu0 %v477
  %2092 = vmatpush.bf16.msra.mxu0 %v475
  %2093 = vmatpush.bf16.msra.mxu0 %v473
  %2094 = vmatpush.bf16.msra.mxu0 %v471
  %2095 = vmatmul.bf16.gmra.mxu0 %v2085
  %v2096 = vpop.f32.mrf.mxu0
  %v2097 = vadd.f32 0.0, %v2096
  %v2098 = vpop.f32.mrf.mxu0
  %v2099 = vadd.f32 0.0, %v2098
  %2100 = vdwg.mxu0
  %2101 = vmatpush.bf16.msra.mxu0 0
  %2102 = vmatpush.bf16.msra.mxu0 0
  %2103 = vmatpush.bf16.msra.mxu0 0
  %2104 = vmatpush.bf16.msra.mxu0 0
  %2105 = vmatpush.bf16.msra.mxu0 %v478
  %2106 = vmatpush.bf16.msra.mxu0 %v476
  %2107 = vmatpush.bf16.msra.mxu0 %v474
  %2108 = vmatpush.bf16.msra.mxu0 %v472
  %2109 = vmatmul.bf16.gmra.mxu0 %v2085
  %v2110 = vpop.f32.mrf.mxu0
  %v2111 = vadd.f32 0.0, %v2110
  %v2112 = vpop.f32.mrf.mxu0
  %v2113 = vadd.f32 0.0, %v2112
  %2114 = vdwg.mxu0
  %v2115 = vadd.f32 %v2079, %v2097
  %v2116 = vadd.f32 %v2080, %v2111
  %v2117 = vadd.f32 %v2081, %v2099
  %v2118 = vadd.f32 %v2082, %v2113
  %v2119 = vxor.u32 %v2115, 2147483648
  %v2120 = vxor.u32 %v2116, 2147483648
  %v2121 = vxor.u32 %v2117, 2147483648
  %v2122 = vxor.u32 %v2118, 2147483648
  %v2123 = vmul.f32 %v2119, 1.442695
  %v2124 = vpow.pop %v2123
  %v2125 = vmul.f32 %v2120, 1.442695
  %v2126 = vpow.pop %v2125
  %v2127 = vmul.f32 %v2121, 1.442695
  %v2128 = vpow.pop %v2127
  %v2129 = vmul.f32 %v2122, 1.442695
  %v2130 = vpow.pop %v2129
  %v2131 = vadd.f32 %v2124, 1.0
  %v2132 = vadd.f32 %v2126, 1.0
  %v2133 = vadd.f32 %v2128, 1.0
  %v2134 = vadd.f32 %v2130, 1.0
  %v2135 = vrcp.pop %v2131
  %v2136 = vmul.f32 %v2131, %v2135
  %v2137 = vsub.f32 1.0, %v2136
  %v2138 = vmul.f32 %v2135, %v2137
  %v2139 = vadd.f32 %v2135, %v2138
  %vm2140 = vweird.f32 %v2131
  %vm2141 = vweird.f32 %v2135
  %vm2142 = vmor %vm2140, %vm2141
  %v2143 = vsel %vm2142, %v2135, %v2139
  %v2144 = vand.u32 2147483647, %v2131
  %vm2145 = vcmp.eq.f32.partialorder %v2144, 8.507059e+37
  %v2146 = vand.u32 %v2131, 2147483648
  %v2147 = vor.u32 1.1754944e-38, %v2146
  %v2148 = vsel %vm2145, %v2147, %v2143
  %v2149 = vmul.f32 1.0, %v2148
  %v2150 = vrcp.pop %v2132
  %v2151 = vmul.f32 %v2132, %v2150
  %v2152 = vsub.f32 1.0, %v2151
  %v2153 = vmul.f32 %v2150, %v2152
  %v2154 = vadd.f32 %v2150, %v2153
  %vm2155 = vweird.f32 %v2132
  %vm2156 = vweird.f32 %v2150
  %vm2157 = vmor %vm2155, %vm2156
  %v2158 = vsel %vm2157, %v2150, %v2154
  %v2159 = vand.u32 2147483647, %v2132
  %vm2160 = vcmp.eq.f32.partialorder %v2159, 8.507059e+37
  %v2161 = vand.u32 %v2132, 2147483648
  %v2162 = vor.u32 1.1754944e-38, %v2161
  %v2163 = vsel %vm2160, %v2162, %v2158
  %v2164 = vmul.f32 1.0, %v2163
  %v2165 = vrcp.pop %v2133
  %v2166 = vmul.f32 %v2133, %v2165
  %v2167 = vsub.f32 1.0, %v2166
  %v2168 = vmul.f32 %v2165, %v2167
  %v2169 = vadd.f32 %v2165, %v2168
  %vm2170 = vweird.f32 %v2133
  %vm2171 = vweird.f32 %v2165
  %vm2172 = vmor %vm2170, %vm2171
  %v2173 = vsel %vm2172, %v2165, %v2169
  %v2174 = vand.u32 2147483647, %v2133
  %vm2175 = vcmp.eq.f32.partialorder %v2174, 8.507059e+37
  %v2176 = vand.u32 %v2133, 2147483648
  %v2177 = vor.u32 1.1754944e-38, %v2176
  %v2178 = vsel %vm2175, %v2177, %v2173
  %v2179 = vmul.f32 1.0, %v2178
  %v2180 = vrcp.pop %v2134
  %v2181 = vmul.f32 %v2134, %v2180
  %v2182 = vsub.f32 1.0, %v2181
  %v2183 = vmul.f32 %v2180, %v2182
  %v2184 = vadd.f32 %v2180, %v2183
  %vm2185 = vweird.f32 %v2134
  %vm2186 = vweird.f32 %v2180
  %vm2187 = vmor %vm2185, %vm2186
  %v2188 = vsel %vm2187, %v2180, %v2184
  %v2189 = vand.u32 2147483647, %v2134
  %vm2190 = vcmp.eq.f32.partialorder %v2189, 8.507059e+37
  %v2191 = vand.u32 %v2134, 2147483648
  %v2192 = vor.u32 1.1754944e-38, %v2191
  %v2193 = vsel %vm2190, %v2192, %v2188
  %v2194 = vmul.f32 1.0, %v2193
  %v2195 = vmul.f32 %v2164, 2.0
  %v2196 = vmul.f32 %v2194, 2.0
  %v2197 = vsub.f32 %v2195, 1.0
  %v2198 = vsub.f32 %v2196, 1.0
  %v2199 = vmul.f32 %v2149, %v2070
  %v2200 = vmul.f32 %v2179, %v2071
  %v2201 = vmul.f32 %v2149, %v2197
  %v2202 = vmul.f32 %v2179, %v2198
  %2205 = vrot.lane.b32.xlu0 %v2201, 64
  %v2206 = vpop.permute.xlu0 %2205
  %2207 = vrot.lane.b32.xlu0 %v2202, 64
  %v2208 = vpop.permute.xlu0 %2207
  %v2211 = vadd.f32 %v2199, %v2206
  %v2212 = vadd.f32 %v2200, %v2208
  %v2213 = vtanh.pop %v2211
  %v2214 = vtanh.pop %v2212
  %v2215 = vmul.f32 %v2164, %v2213
  %v2216 = vmul.f32 %v2194, %v2214
  %s2217 = scalar_lea.vmem [#allocation3], 64
  %v2218 = vld [vmem:[%s2217] sm:$0xff]
  %v2219 = vld [vmem:[%s2217 + $0x8] sm:$0xff]
  %v2220 = vunpack.c.l.bf16 %v2218
  %v2221 = vunpack.c.h.bf16 %v2218
  %v2222 = vunpack.c.l.bf16 %v2219
  %v2223 = vunpack.c.h.bf16 %v2219
  %v2224 = vpack.c.bf16 %v2216, %v2215
  %v2226 = vsel %vm487, %v2224, 0
  %2228 = vmatpush.bf16.msra.mxu0 0
  %2229 = vmatpush.bf16.msra.mxu0 0
  %2230 = vmatpush.bf16.msra.mxu0 0
  %2231 = vmatpush.bf16.msra.mxu0 0
  %2232 = vmatpush.bf16.msra.mxu0 %v477
  %2233 = vmatpush.bf16.msra.mxu0 %v475
  %2234 = vmatpush.bf16.msra.mxu0 %v473
  %2235 = vmatpush.bf16.msra.mxu0 %v471
  %2236 = vmatmul.bf16.gmra.mxu0 %v2226
  %v2237 = vpop.f32.mrf.mxu0
  %v2238 = vadd.f32 0.0, %v2237
  %v2239 = vpop.f32.mrf.mxu0
  %v2240 = vadd.f32 0.0, %v2239
  %2241 = vdwg.mxu0
  %2242 = vmatpush.bf16.msra.mxu0 0
  %2243 = vmatpush.bf16.msra.mxu0 0
  %2244 = vmatpush.bf16.msra.mxu0 0
  %2245 = vmatpush.bf16.msra.mxu0 0
  %2246 = vmatpush.bf16.msra.mxu0 %v478
  %2247 = vmatpush.bf16.msra.mxu0 %v476
  %2248 = vmatpush.bf16.msra.mxu0 %v474
  %2249 = vmatpush.bf16.msra.mxu0 %v472
  %2250 = vmatmul.bf16.gmra.mxu0 %v2226
  %v2251 = vpop.f32.mrf.mxu0
  %v2252 = vadd.f32 0.0, %v2251
  %v2253 = vpop.f32.mrf.mxu0
  %v2254 = vadd.f32 0.0, %v2253
  %2255 = vdwg.mxu0
  %v2256 = vadd.f32 %v2220, %v2238
  %v2257 = vadd.f32 %v2221, %v2252
  %v2258 = vadd.f32 %v2222, %v2240
  %v2259 = vadd.f32 %v2223, %v2254
  %v2260 = vxor.u32 %v2256, 2147483648
  %v2261 = vxor.u32 %v2257, 2147483648
  %v2262 = vxor.u32 %v2258, 2147483648
  %v2263 = vxor.u32 %v2259, 2147483648
  %v2264 = vmul.f32 %v2260, 1.442695
  %v2265 = vpow.pop %v2264
  %v2266 = vmul.f32 %v2261, 1.442695
  %v2267 = vpow.pop %v2266
  %v2268 = vmul.f32 %v2262, 1.442695
  %v2269 = vpow.pop %v2268
  %v2270 = vmul.f32 %v2263, 1.442695
  %v2271 = vpow.pop %v2270
  %v2272 = vadd.f32 %v2265, 1.0
  %v2273 = vadd.f32 %v2267, 1.0
  %v2274 = vadd.f32 %v2269, 1.0
  %v2275 = vadd.f32 %v2271, 1.0
  %v2276 = vrcp.pop %v2272
  %v2277 = vmul.f32 %v2272, %v2276
  %v2278 = vsub.f32 1.0, %v2277
  %v2279 = vmul.f32 %v2276, %v2278
  %v2280 = vadd.f32 %v2276, %v2279
  %vm2281 = vweird.f32 %v2272
  %vm2282 = vweird.f32 %v2276
  %vm2283 = vmor %vm2281, %vm2282
  %v2284 = vsel %vm2283, %v2276, %v2280
  %v2285 = vand.u32 2147483647, %v2272
  %vm2286 = vcmp.eq.f32.partialorder %v2285, 8.507059e+37
  %v2287 = vand.u32 %v2272, 2147483648
  %v2288 = vor.u32 1.1754944e-38, %v2287
  %v2289 = vsel %vm2286, %v2288, %v2284
  %v2290 = vmul.f32 1.0, %v2289
  %v2291 = vrcp.pop %v2273
  %v2292 = vmul.f32 %v2273, %v2291
  %v2293 = vsub.f32 1.0, %v2292
  %v2294 = vmul.f32 %v2291, %v2293
  %v2295 = vadd.f32 %v2291, %v2294
  %vm2296 = vweird.f32 %v2273
  %vm2297 = vweird.f32 %v2291
  %vm2298 = vmor %vm2296, %vm2297
  %v2299 = vsel %vm2298, %v2291, %v2295
  %v2300 = vand.u32 2147483647, %v2273
  %vm2301 = vcmp.eq.f32.partialorder %v2300, 8.507059e+37
  %v2302 = vand.u32 %v2273, 2147483648
  %v2303 = vor.u32 1.1754944e-38, %v2302
  %v2304 = vsel %vm2301, %v2303, %v2299
  %v2305 = vmul.f32 1.0, %v2304
  %v2306 = vrcp.pop %v2274
  %v2307 = vmul.f32 %v2274, %v2306
  %v2308 = vsub.f32 1.0, %v2307
  %v2309 = vmul.f32 %v2306, %v2308
  %v2310 = vadd.f32 %v2306, %v2309
  %vm2311 = vweird.f32 %v2274
  %vm2312 = vweird.f32 %v2306
  %vm2313 = vmor %vm2311, %vm2312
  %v2314 = vsel %vm2313, %v2306, %v2310
  %v2315 = vand.u32 2147483647, %v2274
  %vm2316 = vcmp.eq.f32.partialorder %v2315, 8.507059e+37
  %v2317 = vand.u32 %v2274, 2147483648
  %v2318 = vor.u32 1.1754944e-38, %v2317
  %v2319 = vsel %vm2316, %v2318, %v2314
  %v2320 = vmul.f32 1.0, %v2319
  %v2321 = vrcp.pop %v2275
  %v2322 = vmul.f32 %v2275, %v2321
  %v2323 = vsub.f32 1.0, %v2322
  %v2324 = vmul.f32 %v2321, %v2323
  %v2325 = vadd.f32 %v2321, %v2324
  %vm2326 = vweird.f32 %v2275
  %vm2327 = vweird.f32 %v2321
  %vm2328 = vmor %vm2326, %vm2327
  %v2329 = vsel %vm2328, %v2321, %v2325
  %v2330 = vand.u32 2147483647, %v2275
  %vm2331 = vcmp.eq.f32.partialorder %v2330, 8.507059e+37
  %v2332 = vand.u32 %v2275, 2147483648
  %v2333 = vor.u32 1.1754944e-38, %v2332
  %v2334 = vsel %vm2331, %v2333, %v2329
  %v2335 = vmul.f32 1.0, %v2334
  %v2336 = vmul.f32 %v2305, 2.0
  %v2337 = vmul.f32 %v2335, 2.0
  %v2338 = vsub.f32 %v2336, 1.0
  %v2339 = vsub.f32 %v2337, 1.0
  %v2340 = vmul.f32 %v2290, %v2211
  %v2341 = vmul.f32 %v2320, %v2212
  %v2342 = vmul.f32 %v2290, %v2338
  %v2343 = vmul.f32 %v2320, %v2339
  %2346 = vrot.lane.b32.xlu0 %v2342, 64
  %v2347 = vpop.permute.xlu0 %2346
  %2348 = vrot.lane.b32.xlu0 %v2343, 64
  %v2349 = vpop.permute.xlu0 %2348
  %v2352 = vadd.f32 %v2340, %v2347
  %v2353 = vadd.f32 %v2341, %v2349
  %v2354 = vtanh.pop %v2352
  %v2355 = vtanh.pop %v2353
  %v2356 = vmul.f32 %v2305, %v2354
  %v2357 = vmul.f32 %v2335, %v2355
  %s2358 = scalar_lea.vmem [#allocation3], 80
  %v2359 = vld [vmem:[%s2358] sm:$0xff]
  %v2360 = vld [vmem:[%s2358 + $0x8] sm:$0xff]
  %v2361 = vunpack.c.l.bf16 %v2359
  %v2362 = vunpack.c.h.bf16 %v2359
  %v2363 = vunpack.c.l.bf16 %v2360
  %v2364 = vunpack.c.h.bf16 %v2360
  %v2365 = vpack.c.bf16 %v2357, %v2356
  %v2367 = vsel %vm487, %v2365, 0
  %2369 = vmatpush.bf16.msra.mxu0 0
  %2370 = vmatpush.bf16.msra.mxu0 0
  %2371 = vmatpush.bf16.msra.mxu0 0
  %2372 = vmatpush.bf16.msra.mxu0 0
  %2373 = vmatpush.bf16.msra.mxu0 %v477
  %2374 = vmatpush.bf16.msra.mxu0 %v475
  %2375 = vmatpush.bf16.msra.mxu0 %v473
  %2376 = vmatpush.bf16.msra.mxu0 %v471
  %2377 = vmatmul.bf16.gmra.mxu0 %v2367
  %v2378 = vpop.f32.mrf.mxu0
  %v2379 = vadd.f32 0.0, %v2378
  %v2380 = vpop.f32.mrf.mxu0
  %v2381 = vadd.f32 0.0, %v2380
  %2382 = vdwg.mxu0
  %2383 = vmatpush.bf16.msra.mxu0 0
  %2384 = vmatpush.bf16.msra.mxu0 0
  %2385 = vmatpush.bf16.msra.mxu0 0
  %2386 = vmatpush.bf16.msra.mxu0 0
  %2387 = vmatpush.bf16.msra.mxu0 %v478
  %2388 = vmatpush.bf16.msra.mxu0 %v476
  %2389 = vmatpush.bf16.msra.mxu0 %v474
  %2390 = vmatpush.bf16.msra.mxu0 %v472
  %2391 = vmatmul.bf16.gmra.mxu0 %v2367
  %v2392 = vpop.f32.mrf.mxu0
  %v2393 = vadd.f32 0.0, %v2392
  %v2394 = vpop.f32.mrf.mxu0
  %v2395 = vadd.f32 0.0, %v2394
  %2396 = vdwg.mxu0
  %v2397 = vadd.f32 %v2361, %v2379
  %v2398 = vadd.f32 %v2362, %v2393
  %v2399 = vadd.f32 %v2363, %v2381
  %v2400 = vadd.f32 %v2364, %v2395
  %v2401 = vxor.u32 %v2397, 2147483648
  %v2402 = vxor.u32 %v2398, 2147483648
  %v2403 = vxor.u32 %v2399, 2147483648
  %v2404 = vxor.u32 %v2400, 2147483648
  %v2405 = vmul.f32 %v2401, 1.442695
  %v2406 = vpow.pop %v2405
  %v2407 = vmul.f32 %v2402, 1.442695
  %v2408 = vpow.pop %v2407
  %v2409 = vmul.f32 %v2403, 1.442695
  %v2410 = vpow.pop %v2409
  %v2411 = vmul.f32 %v2404, 1.442695
  %v2412 = vpow.pop %v2411
  %v2413 = vadd.f32 %v2406, 1.0
  %v2414 = vadd.f32 %v2408, 1.0
  %v2415 = vadd.f32 %v2410, 1.0
  %v2416 = vadd.f32 %v2412, 1.0
  %v2417 = vrcp.pop %v2413
  %v2418 = vmul.f32 %v2413, %v2417
  %v2419 = vsub.f32 1.0, %v2418
  %v2420 = vmul.f32 %v2417, %v2419
  %v2421 = vadd.f32 %v2417, %v2420
  %vm2422 = vweird.f32 %v2413
  %vm2423 = vweird.f32 %v2417
  %vm2424 = vmor %vm2422, %vm2423
  %v2425 = vsel %vm2424, %v2417, %v2421
  %v2426 = vand.u32 2147483647, %v2413
  %vm2427 = vcmp.eq.f32.partialorder %v2426, 8.507059e+37
  %v2428 = vand.u32 %v2413, 2147483648
  %v2429 = vor.u32 1.1754944e-38, %v2428
  %v2430 = vsel %vm2427, %v2429, %v2425
  %v2431 = vmul.f32 1.0, %v2430
  %v2432 = vrcp.pop %v2414
  %v2433 = vmul.f32 %v2414, %v2432
  %v2434 = vsub.f32 1.0, %v2433
  %v2435 = vmul.f32 %v2432, %v2434
  %v2436 = vadd.f32 %v2432, %v2435
  %vm2437 = vweird.f32 %v2414
  %vm2438 = vweird.f32 %v2432
  %vm2439 = vmor %vm2437, %vm2438
  %v2440 = vsel %vm2439, %v2432, %v2436
  %v2441 = vand.u32 2147483647, %v2414
  %vm2442 = vcmp.eq.f32.partialorder %v2441, 8.507059e+37
  %v2443 = vand.u32 %v2414, 2147483648
  %v2444 = vor.u32 1.1754944e-38, %v2443
  %v2445 = vsel %vm2442, %v2444, %v2440
  %v2446 = vmul.f32 1.0, %v2445
  %v2447 = vrcp.pop %v2415
  %v2448 = vmul.f32 %v2415, %v2447
  %v2449 = vsub.f32 1.0, %v2448
  %v2450 = vmul.f32 %v2447, %v2449
  %v2451 = vadd.f32 %v2447, %v2450
  %vm2452 = vweird.f32 %v2415
  %vm2453 = vweird.f32 %v2447
  %vm2454 = vmor %vm2452, %vm2453
  %v2455 = vsel %vm2454, %v2447, %v2451
  %v2456 = vand.u32 2147483647, %v2415
  %vm2457 = vcmp.eq.f32.partialorder %v2456, 8.507059e+37
  %v2458 = vand.u32 %v2415, 2147483648
  %v2459 = vor.u32 1.1754944e-38, %v2458
  %v2460 = vsel %vm2457, %v2459, %v2455
  %v2461 = vmul.f32 1.0, %v2460
  %v2462 = vrcp.pop %v2416
  %v2463 = vmul.f32 %v2416, %v2462
  %v2464 = vsub.f32 1.0, %v2463
  %v2465 = vmul.f32 %v2462, %v2464
  %v2466 = vadd.f32 %v2462, %v2465
  %vm2467 = vweird.f32 %v2416
  %vm2468 = vweird.f32 %v2462
  %vm2469 = vmor %vm2467, %vm2468
  %v2470 = vsel %vm2469, %v2462, %v2466
  %v2471 = vand.u32 2147483647, %v2416
  %vm2472 = vcmp.eq.f32.partialorder %v2471, 8.507059e+37
  %v2473 = vand.u32 %v2416, 2147483648
  %v2474 = vor.u32 1.1754944e-38, %v2473
  %v2475 = vsel %vm2472, %v2474, %v2470
  %v2476 = vmul.f32 1.0, %v2475
  %v2477 = vmul.f32 %v2446, 2.0
  %v2478 = vmul.f32 %v2476, 2.0
  %v2479 = vsub.f32 %v2477, 1.0
  %v2480 = vsub.f32 %v2478, 1.0
  %v2481 = vmul.f32 %v2431, %v2352
  %v2482 = vmul.f32 %v2461, %v2353
  %v2483 = vmul.f32 %v2431, %v2479
  %v2484 = vmul.f32 %v2461, %v2480
  %2487 = vrot.lane.b32.xlu0 %v2483, 64
  %v2488 = vpop.permute.xlu0 %2487
  %2489 = vrot.lane.b32.xlu0 %v2484, 64
  %v2490 = vpop.permute.xlu0 %2489
  %v2493 = vadd.f32 %v2481, %v2488
  %v2494 = vadd.f32 %v2482, %v2490
  %v2495 = vtanh.pop %v2493
  %v2496 = vtanh.pop %v2494
  %v2497 = vmul.f32 %v2446, %v2495
  %v2498 = vmul.f32 %v2476, %v2496
  %s2499 = scalar_lea.vmem [#allocation3], 96
  %v2500 = vld [vmem:[%s2499] sm:$0xff]
  %v2501 = vld [vmem:[%s2499 + $0x8] sm:$0xff]
  %v2502 = vunpack.c.l.bf16 %v2500
  %v2503 = vunpack.c.h.bf16 %v2500
  %v2504 = vunpack.c.l.bf16 %v2501
  %v2505 = vunpack.c.h.bf16 %v2501
  %v2506 = vpack.c.bf16 %v2498, %v2497
  %v2508 = vsel %vm487, %v2506, 0
  %2510 = vmatpush.bf16.msra.mxu0 0
  %2511 = vmatpush.bf16.msra.mxu0 0
  %2512 = vmatpush.bf16.msra.mxu0 0
  %2513 = vmatpush.bf16.msra.mxu0 0
  %2514 = vmatpush.bf16.msra.mxu0 %v477
  %2515 = vmatpush.bf16.msra.mxu0 %v475
  %2516 = vmatpush.bf16.msra.mxu0 %v473
  %2517 = vmatpush.bf16.msra.mxu0 %v471
  %2518 = vmatmul.bf16.gmra.mxu0 %v2508
  %v2519 = vpop.f32.mrf.mxu0
  %v2520 = vadd.f32 0.0, %v2519
  %v2521 = vpop.f32.mrf.mxu0
  %v2522 = vadd.f32 0.0, %v2521
  %2523 = vdwg.mxu0
  %2524 = vmatpush.bf16.msra.mxu0 0
  %2525 = vmatpush.bf16.msra.mxu0 0
  %2526 = vmatpush.bf16.msra.mxu0 0
  %2527 = vmatpush.bf16.msra.mxu0 0
  %2528 = vmatpush.bf16.msra.mxu0 %v478
  %2529 = vmatpush.bf16.msra.mxu0 %v476
  %2530 = vmatpush.bf16.msra.mxu0 %v474
  %2531 = vmatpush.bf16.msra.mxu0 %v472
  %2532 = vmatmul.bf16.gmra.mxu0 %v2508
  %v2533 = vpop.f32.mrf.mxu0
  %v2534 = vadd.f32 0.0, %v2533
  %v2535 = vpop.f32.mrf.mxu0
  %v2536 = vadd.f32 0.0, %v2535
  %2537 = vdwg.mxu0
  %v2538 = vadd.f32 %v2502, %v2520
  %v2539 = vadd.f32 %v2503, %v2534
  %v2540 = vadd.f32 %v2504, %v2522
  %v2541 = vadd.f32 %v2505, %v2536
  %v2542 = vxor.u32 %v2538, 2147483648
  %v2543 = vxor.u32 %v2539, 2147483648
  %v2544 = vxor.u32 %v2540, 2147483648
  %v2545 = vxor.u32 %v2541, 2147483648
  %v2546 = vmul.f32 %v2542, 1.442695
  %v2547 = vpow.pop %v2546
  %v2548 = vmul.f32 %v2543, 1.442695
  %v2549 = vpow.pop %v2548
  %v2550 = vmul.f32 %v2544, 1.442695
  %v2551 = vpow.pop %v2550
  %v2552 = vmul.f32 %v2545, 1.442695
  %v2553 = vpow.pop %v2552
  %v2554 = vadd.f32 %v2547, 1.0
  %v2555 = vadd.f32 %v2549, 1.0
  %v2556 = vadd.f32 %v2551, 1.0
  %v2557 = vadd.f32 %v2553, 1.0
  %v2558 = vrcp.pop %v2554
  %v2559 = vmul.f32 %v2554, %v2558
  %v2560 = vsub.f32 1.0, %v2559
  %v2561 = vmul.f32 %v2558, %v2560
  %v2562 = vadd.f32 %v2558, %v2561
  %vm2563 = vweird.f32 %v2554
  %vm2564 = vweird.f32 %v2558
  %vm2565 = vmor %vm2563, %vm2564
  %v2566 = vsel %vm2565, %v2558, %v2562
  %v2567 = vand.u32 2147483647, %v2554
  %vm2568 = vcmp.eq.f32.partialorder %v2567, 8.507059e+37
  %v2569 = vand.u32 %v2554, 2147483648
  %v2570 = vor.u32 1.1754944e-38, %v2569
  %v2571 = vsel %vm2568, %v2570, %v2566
  %v2572 = vmul.f32 1.0, %v2571
  %v2573 = vrcp.pop %v2555
  %v2574 = vmul.f32 %v2555, %v2573
  %v2575 = vsub.f32 1.0, %v2574
  %v2576 = vmul.f32 %v2573, %v2575
  %v2577 = vadd.f32 %v2573, %v2576
  %vm2578 = vweird.f32 %v2555
  %vm2579 = vweird.f32 %v2573
  %vm2580 = vmor %vm2578, %vm2579
  %v2581 = vsel %vm2580, %v2573, %v2577
  %v2582 = vand.u32 2147483647, %v2555
  %vm2583 = vcmp.eq.f32.partialorder %v2582, 8.507059e+37
  %v2584 = vand.u32 %v2555, 2147483648
  %v2585 = vor.u32 1.1754944e-38, %v2584
  %v2586 = vsel %vm2583, %v2585, %v2581
  %v2587 = vmul.f32 1.0, %v2586
  %v2588 = vrcp.pop %v2556
  %v2589 = vmul.f32 %v2556, %v2588
  %v2590 = vsub.f32 1.0, %v2589
  %v2591 = vmul.f32 %v2588, %v2590
  %v2592 = vadd.f32 %v2588, %v2591
  %vm2593 = vweird.f32 %v2556
  %vm2594 = vweird.f32 %v2588
  %vm2595 = vmor %vm2593, %vm2594
  %v2596 = vsel %vm2595, %v2588, %v2592
  %v2597 = vand.u32 2147483647, %v2556
  %vm2598 = vcmp.eq.f32.partialorder %v2597, 8.507059e+37
  %v2599 = vand.u32 %v2556, 2147483648
  %v2600 = vor.u32 1.1754944e-38, %v2599
  %v2601 = vsel %vm2598, %v2600, %v2596
  %v2602 = vmul.f32 1.0, %v2601
  %v2603 = vrcp.pop %v2557
  %v2604 = vmul.f32 %v2557, %v2603
  %v2605 = vsub.f32 1.0, %v2604
  %v2606 = vmul.f32 %v2603, %v2605
  %v2607 = vadd.f32 %v2603, %v2606
  %vm2608 = vweird.f32 %v2557
  %vm2609 = vweird.f32 %v2603
  %vm2610 = vmor %vm2608, %vm2609
  %v2611 = vsel %vm2610, %v2603, %v2607
  %v2612 = vand.u32 2147483647, %v2557
  %vm2613 = vcmp.eq.f32.partialorder %v2612, 8.507059e+37
  %v2614 = vand.u32 %v2557, 2147483648
  %v2615 = vor.u32 1.1754944e-38, %v2614
  %v2616 = vsel %vm2613, %v2615, %v2611
  %v2617 = vmul.f32 1.0, %v2616
  %v2618 = vmul.f32 %v2587, 2.0
  %v2619 = vmul.f32 %v2617, 2.0
  %v2620 = vsub.f32 %v2618, 1.0
  %v2621 = vsub.f32 %v2619, 1.0
  %v2622 = vmul.f32 %v2572, %v2493
  %v2623 = vmul.f32 %v2602, %v2494
  %v2624 = vmul.f32 %v2572, %v2620
  %v2625 = vmul.f32 %v2602, %v2621
  %2628 = vrot.lane.b32.xlu0 %v2624, 64
  %v2629 = vpop.permute.xlu0 %2628
  %2630 = vrot.lane.b32.xlu0 %v2625, 64
  %v2631 = vpop.permute.xlu0 %2630
  %v2634 = vadd.f32 %v2622, %v2629
  %v2635 = vadd.f32 %v2623, %v2631
  %v2636 = vtanh.pop %v2634
  %v2637 = vtanh.pop %v2635
  %v2638 = vmul.f32 %v2587, %v2636
  %v2639 = vmul.f32 %v2617, %v2637
  %s2640 = scalar_lea.vmem %s0, 168
  %v2641 = vld [vmem:[%s2640] sm:$0xf]
  %v2642 = vld [vmem:[%s2640 + $0x4] sm:$0xf]
  %v2643 = vld [vmem:[%s2640 + $0x8] sm:$0xf]
  %v2644 = vld [vmem:[%s2640 + $0xc] sm:$0xf]
  %v2645 = vld [vmem:[%s2640 + $0x10] sm:$0xf]
  %v2646 = vld [vmem:[%s2640 + $0x14] sm:$0xf]
  %v2647 = vld [vmem:[%s2640 + $0x18] sm:$0xf]
  %v2648 = vld [vmem:[%s2640 + $0x1c] sm:$0xf]
  %v2649 = vld [vmem:[%s2640 + $0x20] sm:$0xf]
  %v2650 = vld [vmem:[%s2640 + $0x24] sm:$0xf]
  %v2651 = vld [vmem:[%s2640 + $0x28] sm:$0xf]
  %v2652 = vld [vmem:[%s2640 + $0x2c] sm:$0xf]
  %v2653 = vld [vmem:[%s2640 + $0x30] sm:$0xf]
  %v2654 = vld [vmem:[%s2640 + $0x34] sm:$0xf]
  %v2669 = vunpack.c.l.b16 %v2641
  %v2670 = vunpack.c.l.b16 %v2642
  %v2671 = vunpack.c.l.b16 %v2643
  %v2672 = vunpack.c.l.b16 %v2644
  %v2673 = vunpack.c.l.b16 %v2645
  %v2674 = vunpack.c.l.b16 %v2646
  %v2675 = vunpack.c.l.b16 %v2647
  %v2676 = vunpack.c.l.b16 %v2648
  %v2677 = vunpack.c.l.b16 %v2649
  %v2678 = vunpack.c.l.b16 %v2650
  %v2679 = vunpack.c.l.b16 %v2651
  %v2680 = vunpack.c.l.b16 %v2652
  %v2681 = vunpack.c.l.b16 %v2653
  %v2682 = vunpack.c.l.b16 %v2654
  %v2683 = vpack.c.b16 %v2670, %v2669
  %v2684 = vpack.c.b16 %v2672, %v2671
  %v2685 = vpack.c.b16 %v2674, %v2673
  %v2686 = vpack.c.b16 %v2676, %v2675
  %v2687 = vpack.c.b16 %v2678, %v2677
  %v2688 = vpack.c.b16 %v2680, %v2679
  %v2689 = vpack.c.b16 %v2682, %v2681
  %v2691 = vsel %vm109, %v2683, 0
  %v2694 = vsel %vm109, %v2684, 0
  %v2697 = vsel %vm109, %v2685, 0
  %v2700 = vsel %vm109, %v2686, 0
  %v2703 = vsel %vm109, %v2687, 0
  %v2706 = vsel %vm109, %v2688, 0
  %v2709 = vsel %vm109, %v2689, 0
  %2711 = vmatpush.bf16.msra.mxu0 0
  %2712 = vmatpush.bf16.msra.mxu0 0
  %2713 = vmatpush.bf16.msra.mxu0 0
  %2714 = vmatpush.bf16.msra.mxu0 0
  %2715 = vmatpush.bf16.msra.mxu0 0
  %2716 = vmatpush.bf16.msra.mxu0 0
  %2717 = vmatpush.bf16.msra.mxu0 %v133
  %2718 = vmatpush.bf16.msra.mxu0 %v103
  %2719 = vmatmul.bf16.gmra.mxu0 %v2691
  %v2720 = vpop.f32.mrf.mxu0
  %v2721 = vadd.f32 %v52, %v2720
  %v2722 = vpop.f32.mrf.mxu0
  %v2723 = vadd.f32 %v52, %v2722
  %2724 = vmatmul.bf16.gmra.mxu0 %v2694
  %v2725 = vpop.f32.mrf.mxu0
  %v2726 = vadd.f32 %v52, %v2725
  %v2727 = vpop.f32.mrf.mxu0
  %v2728 = vadd.f32 %v52, %v2727
  %2729 = vmatmul.bf16.gmra.mxu0 %v2697
  %v2730 = vpop.f32.mrf.mxu0
  %v2731 = vadd.f32 %v52, %v2730
  %v2732 = vpop.f32.mrf.mxu0
  %v2733 = vadd.f32 %v52, %v2732
  %2734 = vmatmul.bf16.gmra.mxu0 %v2700
  %v2735 = vpop.f32.mrf.mxu0
  %v2736 = vadd.f32 %v52, %v2735
  %v2737 = vpop.f32.mrf.mxu0
  %v2738 = vadd.f32 %v52, %v2737
  %2739 = vmatmul.bf16.gmra.mxu0 %v2703
  %v2740 = vpop.f32.mrf.mxu0
  %v2741 = vadd.f32 %v52, %v2740
  %v2742 = vpop.f32.mrf.mxu0
  %v2743 = vadd.f32 %v52, %v2742
  %2744 = vmatmul.bf16.gmra.mxu0 %v2706
  %v2745 = vpop.f32.mrf.mxu0
  %v2746 = vadd.f32 %v52, %v2745
  %v2747 = vpop.f32.mrf.mxu0
  %v2748 = vadd.f32 %v52, %v2747
  %2749 = vmatmul.bf16.gmra.mxu0 %v2709
  %v2750 = vpop.f32.mrf.mxu0
  %v2751 = vadd.f32 %v52, %v2750
  %v2752 = vpop.f32.mrf.mxu0
  %v2753 = vadd.f32 %v52, %v2752
  %2754 = vdwg.mxu0
  %2755 = vmatpush.bf16.msra.mxu0 0
  %2756 = vmatpush.bf16.msra.mxu0 0
  %2757 = vmatpush.bf16.msra.mxu0 0
  %2758 = vmatpush.bf16.msra.mxu0 0
  %2759 = vmatpush.bf16.msra.mxu0 0
  %2760 = vmatpush.bf16.msra.mxu0 0
  %2761 = vmatpush.bf16.msra.mxu0 %v136
  %2762 = vmatpush.bf16.msra.mxu0 %v104
  %2763 = vmatmul.bf16.gmra.mxu0 %v2691
  %v2764 = vpop.f32.mrf.mxu0
  %v2765 = vadd.f32 %v53, %v2764
  %v2766 = vpop.f32.mrf.mxu0
  %v2767 = vadd.f32 %v53, %v2766
  %2768 = vmatmul.bf16.gmra.mxu0 %v2694
  %v2769 = vpop.f32.mrf.mxu0
  %v2770 = vadd.f32 %v53, %v2769
  %v2771 = vpop.f32.mrf.mxu0
  %v2772 = vadd.f32 %v53, %v2771
  %2773 = vmatmul.bf16.gmra.mxu0 %v2697
  %v2774 = vpop.f32.mrf.mxu0
  %v2775 = vadd.f32 %v53, %v2774
  %v2776 = vpop.f32.mrf.mxu0
  %v2777 = vadd.f32 %v53, %v2776
  %2778 = vmatmul.bf16.gmra.mxu0 %v2700
  %v2779 = vpop.f32.mrf.mxu0
  %v2780 = vadd.f32 %v53, %v2779
  %v2781 = vpop.f32.mrf.mxu0
  %v2782 = vadd.f32 %v53, %v2781
  %2783 = vmatmul.bf16.gmra.mxu0 %v2703
  %v2784 = vpop.f32.mrf.mxu0
  %v2785 = vadd.f32 %v53, %v2784
  %v2786 = vpop.f32.mrf.mxu0
  %v2787 = vadd.f32 %v53, %v2786
  %2788 = vmatmul.bf16.gmra.mxu0 %v2706
  %v2789 = vpop.f32.mrf.mxu0
  %v2790 = vadd.f32 %v53, %v2789
  %v2791 = vpop.f32.mrf.mxu0
  %v2792 = vadd.f32 %v53, %v2791
  %2793 = vmatmul.bf16.gmra.mxu0 %v2709
  %v2794 = vpop.f32.mrf.mxu0
  %v2795 = vadd.f32 %v53, %v2794
  %v2796 = vpop.f32.mrf.mxu0
  %v2797 = vadd.f32 %v53, %v2796
  %2798 = vdwg.mxu0
  %v2799 = vpack.c.bf16 %v2765, %v2721
  %v2800 = vpack.c.bf16 %v2767, %v2723
  %v2801 = vpack.c.bf16 %v2770, %v2726
  %v2802 = vpack.c.bf16 %v2772, %v2728
  %v2803 = vpack.c.bf16 %v2775, %v2731
  %v2804 = vpack.c.bf16 %v2777, %v2733
  %v2805 = vpack.c.bf16 %v2780, %v2736
  %v2806 = vpack.c.bf16 %v2782, %v2738
  %v2807 = vpack.c.bf16 %v2785, %v2741
  %v2808 = vpack.c.bf16 %v2787, %v2743
  %v2809 = vpack.c.bf16 %v2790, %v2746
  %v2810 = vpack.c.bf16 %v2792, %v2748
  %v2811 = vpack.c.bf16 %v2795, %v2751
  %v2812 = vpack.c.bf16 %v2797, %v2753
  %2813 = vst [vmem:[#allocation3] sm:$0xff] %v2799
  %2814 = vst [vmem:[#allocation3 + $0x8] sm:$0xff] %v2800
  %2815 = vst [vmem:[#allocation3 + $0x10] sm:$0xff] %v2801
  %2816 = vst [vmem:[#allocation3 + $0x18] sm:$0xff] %v2802
  %2817 = vst [vmem:[#allocation3 + $0x20] sm:$0xff] %v2803
  %2818 = vst [vmem:[#allocation3 + $0x28] sm:$0xff] %v2804
  %2819 = vst [vmem:[#allocation3 + $0x30] sm:$0xff] %v2805
  %2820 = vst [vmem:[#allocation3 + $0x38] sm:$0xff] %v2806
  %2821 = vst [vmem:[#allocation3 + $0x40] sm:$0xff] %v2807
  %2822 = vst [vmem:[#allocation3 + $0x48] sm:$0xff] %v2808
  %2823 = vst [vmem:[#allocation3 + $0x50] sm:$0xff] %v2809
  %2824 = vst [vmem:[#allocation3 + $0x58] sm:$0xff] %v2810
  %2825 = vst [vmem:[#allocation3 + $0x60] sm:$0xff] %v2811
  %2826 = vst [vmem:[#allocation3 + $0x68] sm:$0xff] %v2812
  %v2827 = vld [vmem:[#allocation2] sm:$0xff]
  %v2828 = vld [vmem:[#allocation2 + $0x8] sm:$0xff]
  %v2829 = vunpack.c.l.bf16 %v2827
  %v2830 = vunpack.c.h.bf16 %v2827
  %v2831 = vunpack.c.l.bf16 %v2828
  %v2832 = vunpack.c.h.bf16 %v2828
  %v2833 = vpack.c.bf16 %v2639, %v2638
  %v2835 = vsel %vm487, %v2833, 0
  %2837 = vmatpush.bf16.msra.mxu0 0
  %2838 = vmatpush.bf16.msra.mxu0 0
  %2839 = vmatpush.bf16.msra.mxu0 0
  %2840 = vmatpush.bf16.msra.mxu0 0
  %2841 = vmatpush.bf16.msra.mxu0 %v477
  %2842 = vmatpush.bf16.msra.mxu0 %v475
  %2843 = vmatpush.bf16.msra.mxu0 %v473
  %2844 = vmatpush.bf16.msra.mxu0 %v471
  %2845 = vmatmul.bf16.gmra.mxu0 %v2835
  %v2846 = vpop.f32.mrf.mxu0
  %v2847 = vadd.f32 0.0, %v2846
  %v2848 = vpop.f32.mrf.mxu0
  %v2849 = vadd.f32 0.0, %v2848
  %2850 = vdwg.mxu0
  %2851 = vmatpush.bf16.msra.mxu0 0
  %2852 = vmatpush.bf16.msra.mxu0 0
  %2853 = vmatpush.bf16.msra.mxu0 0
  %2854 = vmatpush.bf16.msra.mxu0 0
  %2855 = vmatpush.bf16.msra.mxu0 %v478
  %2856 = vmatpush.bf16.msra.mxu0 %v476
  %2857 = vmatpush.bf16.msra.mxu0 %v474
  %2858 = vmatpush.bf16.msra.mxu0 %v472
  %2859 = vmatmul.bf16.gmra.mxu0 %v2835
  %v2860 = vpop.f32.mrf.mxu0
  %v2861 = vadd.f32 0.0, %v2860
  %v2862 = vpop.f32.mrf.mxu0
  %v2863 = vadd.f32 0.0, %v2862
  %2864 = vdwg.mxu0
  %v2865 = vadd.f32 %v2829, %v2847
  %v2866 = vadd.f32 %v2830, %v2861
  %v2867 = vadd.f32 %v2831, %v2849
  %v2868 = vadd.f32 %v2832, %v2863
  %v2869 = vxor.u32 %v2865, 2147483648
  %v2870 = vxor.u32 %v2866, 2147483648
  %v2871 = vxor.u32 %v2867, 2147483648
  %v2872 = vxor.u32 %v2868, 2147483648
  %v2873 = vmul.f32 %v2869, 1.442695
  %v2874 = vpow.pop %v2873
  %v2875 = vmul.f32 %v2870, 1.442695
  %v2876 = vpow.pop %v2875
  %v2877 = vmul.f32 %v2871, 1.442695
  %v2878 = vpow.pop %v2877
  %v2879 = vmul.f32 %v2872, 1.442695
  %v2880 = vpow.pop %v2879
  %v2881 = vadd.f32 %v2874, 1.0
  %v2882 = vadd.f32 %v2876, 1.0
  %v2883 = vadd.f32 %v2878, 1.0
  %v2884 = vadd.f32 %v2880, 1.0
  %v2885 = vrcp.pop %v2881
  %v2886 = vmul.f32 %v2881, %v2885
  %v2887 = vsub.f32 1.0, %v2886
  %v2888 = vmul.f32 %v2885, %v2887
  %v2889 = vadd.f32 %v2885, %v2888
  %vm2890 = vweird.f32 %v2881
  %vm2891 = vweird.f32 %v2885
  %vm2892 = vmor %vm2890, %vm2891
  %v2893 = vsel %vm2892, %v2885, %v2889
  %v2894 = vand.u32 2147483647, %v2881
  %vm2895 = vcmp.eq.f32.partialorder %v2894, 8.507059e+37
  %v2896 = vand.u32 %v2881, 2147483648
  %v2897 = vor.u32 1.1754944e-38, %v2896
  %v2898 = vsel %vm2895, %v2897, %v2893
  %v2899 = vmul.f32 1.0, %v2898
  %v2900 = vrcp.pop %v2882
  %v2901 = vmul.f32 %v2882, %v2900
  %v2902 = vsub.f32 1.0, %v2901
  %v2903 = vmul.f32 %v2900, %v2902
  %v2904 = vadd.f32 %v2900, %v2903
  %vm2905 = vweird.f32 %v2882
  %vm2906 = vweird.f32 %v2900
  %vm2907 = vmor %vm2905, %vm2906
  %v2908 = vsel %vm2907, %v2900, %v2904
  %v2909 = vand.u32 2147483647, %v2882
  %vm2910 = vcmp.eq.f32.partialorder %v2909, 8.507059e+37
  %v2911 = vand.u32 %v2882, 2147483648
  %v2912 = vor.u32 1.1754944e-38, %v2911
  %v2913 = vsel %vm2910, %v2912, %v2908
  %v2914 = vmul.f32 1.0, %v2913
  %v2915 = vrcp.pop %v2883
  %v2916 = vmul.f32 %v2883, %v2915
  %v2917 = vsub.f32 1.0, %v2916
  %v2918 = vmul.f32 %v2915, %v2917
  %v2919 = vadd.f32 %v2915, %v2918
  %vm2920 = vweird.f32 %v2883
  %vm2921 = vweird.f32 %v2915
  %vm2922 = vmor %vm2920, %vm2921
  %v2923 = vsel %vm2922, %v2915, %v2919
  %v2924 = vand.u32 2147483647, %v2883
  %vm2925 = vcmp.eq.f32.partialorder %v2924, 8.507059e+37
  %v2926 = vand.u32 %v2883, 2147483648
  %v2927 = vor.u32 1.1754944e-38, %v2926
  %v2928 = vsel %vm2925, %v2927, %v2923
  %v2929 = vmul.f32 1.0, %v2928
  %v2930 = vrcp.pop %v2884
  %v2931 = vmul.f32 %v2884, %v2930
  %v2932 = vsub.f32 1.0, %v2931
  %v2933 = vmul.f32 %v2930, %v2932
  %v2934 = vadd.f32 %v2930, %v2933
  %vm2935 = vweird.f32 %v2884
  %vm2936 = vweird.f32 %v2930
  %vm2937 = vmor %vm2935, %vm2936
  %v2938 = vsel %vm2937, %v2930, %v2934
  %v2939 = vand.u32 2147483647, %v2884
  %vm2940 = vcmp.eq.f32.partialorder %v2939, 8.507059e+37
  %v2941 = vand.u32 %v2884, 2147483648
  %v2942 = vor.u32 1.1754944e-38, %v2941
  %v2943 = vsel %vm2940, %v2942, %v2938
  %v2944 = vmul.f32 1.0, %v2943
  %v2945 = vmul.f32 %v2914, 2.0
  %v2946 = vmul.f32 %v2944, 2.0
  %v2947 = vsub.f32 %v2945, 1.0
  %v2948 = vsub.f32 %v2946, 1.0
  %v2949 = vmul.f32 %v2899, %v2634
  %v2950 = vmul.f32 %v2929, %v2635
  %v2951 = vmul.f32 %v2899, %v2947
  %v2952 = vmul.f32 %v2929, %v2948
  %2955 = vrot.lane.b32.xlu0 %v2951, 64
  %v2956 = vpop.permute.xlu0 %2955
  %2957 = vrot.lane.b32.xlu0 %v2952, 64
  %v2958 = vpop.permute.xlu0 %2957
  %v2961 = vadd.f32 %v2949, %v2956
  %v2962 = vadd.f32 %v2950, %v2958
  %v2963 = vtanh.pop %v2961
  %v2964 = vtanh.pop %v2962
  %v2965 = vmul.f32 %v2914, %v2963
  %v2966 = vmul.f32 %v2944, %v2964
  %v2967 = vld [vmem:[%s621] sm:$0xff]
  %v2968 = vld [vmem:[%s621 + $0x8] sm:$0xff]
  %v2969 = vunpack.c.l.bf16 %v2967
  %v2970 = vunpack.c.h.bf16 %v2967
  %v2971 = vunpack.c.l.bf16 %v2968
  %v2972 = vunpack.c.h.bf16 %v2968
  %v2973 = vpack.c.bf16 %v2966, %v2965
  %v2975 = vsel %vm487, %v2973, 0
  %2977 = vmatpush.bf16.msra.mxu0 0
  %2978 = vmatpush.bf16.msra.mxu0 0
  %2979 = vmatpush.bf16.msra.mxu0 0
  %2980 = vmatpush.bf16.msra.mxu0 0
  %2981 = vmatpush.bf16.msra.mxu0 %v477
  %2982 = vmatpush.bf16.msra.mxu0 %v475
  %2983 = vmatpush.bf16.msra.mxu0 %v473
  %2984 = vmatpush.bf16.msra.mxu0 %v471
  %2985 = vmatmul.bf16.gmra.mxu0 %v2975
  %v2986 = vpop.f32.mrf.mxu0
  %v2987 = vadd.f32 0.0, %v2986
  %v2988 = vpop.f32.mrf.mxu0
  %v2989 = vadd.f32 0.0, %v2988
  %2990 = vdwg.mxu0
  %2991 = vmatpush.bf16.msra.mxu0 0
  %2992 = vmatpush.bf16.msra.mxu0 0
  %2993 = vmatpush.bf16.msra.mxu0 0
  %2994 = vmatpush.bf16.msra.mxu0 0
  %2995 = vmatpush.bf16.msra.mxu0 %v478
  %2996 = vmatpush.bf16.msra.mxu0 %v476
  %2997 = vmatpush.bf16.msra.mxu0 %v474
  %2998 = vmatpush.bf16.msra.mxu0 %v472
  %2999 = vmatmul.bf16.gmra.mxu0 %v2975
  %v3000 = vpop.f32.mrf.mxu0
  %v3001 = vadd.f32 0.0, %v3000
  %v3002 = vpop.f32.mrf.mxu0
  %v3003 = vadd.f32 0.0, %v3002
  %3004 = vdwg.mxu0
  %v3005 = vadd.f32 %v2969, %v2987
  %v3006 = vadd.f32 %v2970, %v3001
  %v3007 = vadd.f32 %v2971, %v2989
  %v3008 = vadd.f32 %v2972, %v3003
  %v3009 = vxor.u32 %v3005, 2147483648
  %v3010 = vxor.u32 %v3006, 2147483648
  %v3011 = vxor.u32 %v3007, 2147483648
  %v3012 = vxor.u32 %v3008, 2147483648
  %v3013 = vmul.f32 %v3009, 1.442695
  %v3014 = vpow.pop %v3013
  %v3015 = vmul.f32 %v3010, 1.442695
  %v3016 = vpow.pop %v3015
  %v3017 = vmul.f32 %v3011, 1.442695
  %v3018 = vpow.pop %v3017
  %v3019 = vmul.f32 %v3012, 1.442695
  %v3020 = vpow.pop %v3019
  %v3021 = vadd.f32 %v3014, 1.0
  %v3022 = vadd.f32 %v3016, 1.0
  %v3023 = vadd.f32 %v3018, 1.0
  %v3024 = vadd.f32 %v3020, 1.0
  %v3025 = vrcp.pop %v3021
  %v3026 = vmul.f32 %v3021, %v3025
  %v3027 = vsub.f32 1.0, %v3026
  %v3028 = vmul.f32 %v3025, %v3027
  %v3029 = vadd.f32 %v3025, %v3028
  %vm3030 = vweird.f32 %v3021
  %vm3031 = vweird.f32 %v3025
  %vm3032 = vmor %vm3030, %vm3031
  %v3033 = vsel %vm3032, %v3025, %v3029
  %v3034 = vand.u32 2147483647, %v3021
  %vm3035 = vcmp.eq.f32.partialorder %v3034, 8.507059e+37
  %v3036 = vand.u32 %v3021, 2147483648
  %v3037 = vor.u32 1.1754944e-38, %v3036
  %v3038 = vsel %vm3035, %v3037, %v3033
  %v3039 = vmul.f32 1.0, %v3038
  %v3040 = vrcp.pop %v3022
  %v3041 = vmul.f32 %v3022, %v3040
  %v3042 = vsub.f32 1.0, %v3041
  %v3043 = vmul.f32 %v3040, %v3042
  %v3044 = vadd.f32 %v3040, %v3043
  %vm3045 = vweird.f32 %v3022
  %vm3046 = vweird.f32 %v3040
  %vm3047 = vmor %vm3045, %vm3046
  %v3048 = vsel %vm3047, %v3040, %v3044
  %v3049 = vand.u32 2147483647, %v3022
  %vm3050 = vcmp.eq.f32.partialorder %v3049, 8.507059e+37
  %v3051 = vand.u32 %v3022, 2147483648
  %v3052 = vor.u32 1.1754944e-38, %v3051
  %v3053 = vsel %vm3050, %v3052, %v3048
  %v3054 = vmul.f32 1.0, %v3053
  %v3055 = vrcp.pop %v3023
  %v3056 = vmul.f32 %v3023, %v3055
  %v3057 = vsub.f32 1.0, %v3056
  %v3058 = vmul.f32 %v3055, %v3057
  %v3059 = vadd.f32 %v3055, %v3058
  %vm3060 = vweird.f32 %v3023
  %vm3061 = vweird.f32 %v3055
  %vm3062 = vmor %vm3060, %vm3061
  %v3063 = vsel %vm3062, %v3055, %v3059
  %v3064 = vand.u32 2147483647, %v3023
  %vm3065 = vcmp.eq.f32.partialorder %v3064, 8.507059e+37
  %v3066 = vand.u32 %v3023, 2147483648
  %v3067 = vor.u32 1.1754944e-38, %v3066
  %v3068 = vsel %vm3065, %v3067, %v3063
  %v3069 = vmul.f32 1.0, %v3068
  %v3070 = vrcp.pop %v3024
  %v3071 = vmul.f32 %v3024, %v3070
  %v3072 = vsub.f32 1.0, %v3071
  %v3073 = vmul.f32 %v3070, %v3072
  %v3074 = vadd.f32 %v3070, %v3073
  %vm3075 = vweird.f32 %v3024
  %vm3076 = vweird.f32 %v3070
  %vm3077 = vmor %vm3075, %vm3076
  %v3078 = vsel %vm3077, %v3070, %v3074
  %v3079 = vand.u32 2147483647, %v3024
  %vm3080 = vcmp.eq.f32.partialorder %v3079, 8.507059e+37
  %v3081 = vand.u32 %v3024, 2147483648
  %v3082 = vor.u32 1.1754944e-38, %v3081
  %v3083 = vsel %vm3080, %v3082, %v3078
  %v3084 = vmul.f32 1.0, %v3083
  %v3085 = vmul.f32 %v3054, 2.0
  %v3086 = vmul.f32 %v3084, 2.0
  %v3087 = vsub.f32 %v3085, 1.0
  %v3088 = vsub.f32 %v3086, 1.0
  %v3089 = vmul.f32 %v3039, %v2961
  %v3090 = vmul.f32 %v3069, %v2962
  %v3091 = vmul.f32 %v3039, %v3087
  %v3092 = vmul.f32 %v3069, %v3088
  %3095 = vrot.lane.b32.xlu0 %v3091, 64
  %v3096 = vpop.permute.xlu0 %3095
  %3097 = vrot.lane.b32.xlu0 %v3092, 64
  %v3098 = vpop.permute.xlu0 %3097
  %v3101 = vadd.f32 %v3089, %v3096
  %v3102 = vadd.f32 %v3090, %v3098
  %v3103 = vtanh.pop %v3101
  %v3104 = vtanh.pop %v3102
  %v3105 = vmul.f32 %v3054, %v3103
  %v3106 = vmul.f32 %v3084, %v3104
  %v3107 = vld [vmem:[%s762] sm:$0xff]
  %v3108 = vld [vmem:[%s762 + $0x8] sm:$0xff]
  %v3109 = vunpack.c.l.bf16 %v3107
  %v3110 = vunpack.c.h.bf16 %v3107
  %v3111 = vunpack.c.l.bf16 %v3108
  %v3112 = vunpack.c.h.bf16 %v3108
  %v3113 = vpack.c.bf16 %v3106, %v3105
  %v3115 = vsel %vm487, %v3113, 0
  %3117 = vmatpush.bf16.msra.mxu0 0
  %3118 = vmatpush.bf16.msra.mxu0 0
  %3119 = vmatpush.bf16.msra.mxu0 0
  %3120 = vmatpush.bf16.msra.mxu0 0
  %3121 = vmatpush.bf16.msra.mxu0 %v477
  %3122 = vmatpush.bf16.msra.mxu0 %v475
  %3123 = vmatpush.bf16.msra.mxu0 %v473
  %3124 = vmatpush.bf16.msra.mxu0 %v471
  %3125 = vmatmul.bf16.gmra.mxu0 %v3115
  %v3126 = vpop.f32.mrf.mxu0
  %v3127 = vadd.f32 0.0, %v3126
  %v3128 = vpop.f32.mrf.mxu0
  %v3129 = vadd.f32 0.0, %v3128
  %3130 = vdwg.mxu0
  %3131 = vmatpush.bf16.msra.mxu0 0
  %3132 = vmatpush.bf16.msra.mxu0 0
  %3133 = vmatpush.bf16.msra.mxu0 0
  %3134 = vmatpush.bf16.msra.mxu0 0
  %3135 = vmatpush.bf16.msra.mxu0 %v478
  %3136 = vmatpush.bf16.msra.mxu0 %v476
  %3137 = vmatpush.bf16.msra.mxu0 %v474
  %3138 = vmatpush.bf16.msra.mxu0 %v472
  %3139 = vmatmul.bf16.gmra.mxu0 %v3115
  %v3140 = vpop.f32.mrf.mxu0
  %v3141 = vadd.f32 0.0, %v3140
  %v3142 = vpop.f32.mrf.mxu0
  %v3143 = vadd.f32 0.0, %v3142
  %3144 = vdwg.mxu0
  %v3145 = vadd.f32 %v3109, %v3127
  %v3146 = vadd.f32 %v3110, %v3141
  %v3147 = vadd.f32 %v3111, %v3129
  %v3148 = vadd.f32 %v3112, %v3143
  %v3149 = vxor.u32 %v3145, 2147483648
  %v3150 = vxor.u32 %v3146, 2147483648
  %v3151 = vxor.u32 %v3147, 2147483648
  %v3152 = vxor.u32 %v3148, 2147483648
  %v3153 = vmul.f32 %v3149, 1.442695
  %v3154 = vpow.pop %v3153
  %v3155 = vmul.f32 %v3150, 1.442695
  %v3156 = vpow.pop %v3155
  %v3157 = vmul.f32 %v3151, 1.442695
  %v3158 = vpow.pop %v3157
  %v3159 = vmul.f32 %v3152, 1.442695
  %v3160 = vpow.pop %v3159
  %v3161 = vadd.f32 %v3154, 1.0
  %v3162 = vadd.f32 %v3156, 1.0
  %v3163 = vadd.f32 %v3158, 1.0
  %v3164 = vadd.f32 %v3160, 1.0
  %v3165 = vrcp.pop %v3161
  %v3166 = vmul.f32 %v3161, %v3165
  %v3167 = vsub.f32 1.0, %v3166
  %v3168 = vmul.f32 %v3165, %v3167
  %v3169 = vadd.f32 %v3165, %v3168
  %vm3170 = vweird.f32 %v3161
  %vm3171 = vweird.f32 %v3165
  %vm3172 = vmor %vm3170, %vm3171
  %v3173 = vsel %vm3172, %v3165, %v3169
  %v3174 = vand.u32 2147483647, %v3161
  %vm3175 = vcmp.eq.f32.partialorder %v3174, 8.507059e+37
  %v3176 = vand.u32 %v3161, 2147483648
  %v3177 = vor.u32 1.1754944e-38, %v3176
  %v3178 = vsel %vm3175, %v3177, %v3173
  %v3179 = vmul.f32 1.0, %v3178
  %v3180 = vrcp.pop %v3162
  %v3181 = vmul.f32 %v3162, %v3180
  %v3182 = vsub.f32 1.0, %v3181
  %v3183 = vmul.f32 %v3180, %v3182
  %v3184 = vadd.f32 %v3180, %v3183
  %vm3185 = vweird.f32 %v3162
  %vm3186 = vweird.f32 %v3180
  %vm3187 = vmor %vm3185, %vm3186
  %v3188 = vsel %vm3187, %v3180, %v3184
  %v3189 = vand.u32 2147483647, %v3162
  %vm3190 = vcmp.eq.f32.partialorder %v3189, 8.507059e+37
  %v3191 = vand.u32 %v3162, 2147483648
  %v3192 = vor.u32 1.1754944e-38, %v3191
  %v3193 = vsel %vm3190, %v3192, %v3188
  %v3194 = vmul.f32 1.0, %v3193
  %v3195 = vrcp.pop %v3163
  %v3196 = vmul.f32 %v3163, %v3195
  %v3197 = vsub.f32 1.0, %v3196
  %v3198 = vmul.f32 %v3195, %v3197
  %v3199 = vadd.f32 %v3195, %v3198
  %vm3200 = vweird.f32 %v3163
  %vm3201 = vweird.f32 %v3195
  %vm3202 = vmor %vm3200, %vm3201
  %v3203 = vsel %vm3202, %v3195, %v3199
  %v3204 = vand.u32 2147483647, %v3163
  %vm3205 = vcmp.eq.f32.partialorder %v3204, 8.507059e+37
  %v3206 = vand.u32 %v3163, 2147483648
  %v3207 = vor.u32 1.1754944e-38, %v3206
  %v3208 = vsel %vm3205, %v3207, %v3203
  %v3209 = vmul.f32 1.0, %v3208
  %v3210 = vrcp.pop %v3164
  %v3211 = vmul.f32 %v3164, %v3210
  %v3212 = vsub.f32 1.0, %v3211
  %v3213 = vmul.f32 %v3210, %v3212
  %v3214 = vadd.f32 %v3210, %v3213
  %vm3215 = vweird.f32 %v3164
  %vm3216 = vweird.f32 %v3210
  %vm3217 = vmor %vm3215, %vm3216
  %v3218 = vsel %vm3217, %v3210, %v3214
  %v3219 = vand.u32 2147483647, %v3164
  %vm3220 = vcmp.eq.f32.partialorder %v3219, 8.507059e+37
  %v3221 = vand.u32 %v3164, 2147483648
  %v3222 = vor.u32 1.1754944e-38, %v3221
  %v3223 = vsel %vm3220, %v3222, %v3218
  %v3224 = vmul.f32 1.0, %v3223
  %v3225 = vmul.f32 %v3194, 2.0
  %v3226 = vmul.f32 %v3224, 2.0
  %v3227 = vsub.f32 %v3225, 1.0
  %v3228 = vsub.f32 %v3226, 1.0
  %v3229 = vmul.f32 %v3179, %v3101
  %v3230 = vmul.f32 %v3209, %v3102
  %v3231 = vmul.f32 %v3179, %v3227
  %v3232 = vmul.f32 %v3209, %v3228
  %3235 = vrot.lane.b32.xlu0 %v3231, 64
  %v3236 = vpop.permute.xlu0 %3235
  %3237 = vrot.lane.b32.xlu0 %v3232, 64
  %v3238 = vpop.permute.xlu0 %3237
  %v3241 = vadd.f32 %v3229, %v3236
  %v3242 = vadd.f32 %v3230, %v3238
  %v3243 = vtanh.pop %v3241
  %v3244 = vtanh.pop %v3242
  %v3245 = vmul.f32 %v3194, %v3243
  %v3246 = vmul.f32 %v3224, %v3244
  %v3247 = vld [vmem:[%s903] sm:$0xff]
  %v3248 = vld [vmem:[%s903 + $0x8] sm:$0xff]
  %v3249 = vunpack.c.l.bf16 %v3247
  %v3250 = vunpack.c.h.bf16 %v3247
  %v3251 = vunpack.c.l.bf16 %v3248
  %v3252 = vunpack.c.h.bf16 %v3248
  %v3253 = vpack.c.bf16 %v3246, %v3245
  %v3255 = vsel %vm487, %v3253, 0
  %3257 = vmatpush.bf16.msra.mxu0 0
  %3258 = vmatpush.bf16.msra.mxu0 0
  %3259 = vmatpush.bf16.msra.mxu0 0
  %3260 = vmatpush.bf16.msra.mxu0 0
  %3261 = vmatpush.bf16.msra.mxu0 %v477
  %3262 = vmatpush.bf16.msra.mxu0 %v475
  %3263 = vmatpush.bf16.msra.mxu0 %v473
  %3264 = vmatpush.bf16.msra.mxu0 %v471
  %3265 = vmatmul.bf16.gmra.mxu0 %v3255
  %v3266 = vpop.f32.mrf.mxu0
  %v3267 = vadd.f32 0.0, %v3266
  %v3268 = vpop.f32.mrf.mxu0
  %v3269 = vadd.f32 0.0, %v3268
  %3270 = vdwg.mxu0
  %3271 = vmatpush.bf16.msra.mxu0 0
  %3272 = vmatpush.bf16.msra.mxu0 0
  %3273 = vmatpush.bf16.msra.mxu0 0
  %3274 = vmatpush.bf16.msra.mxu0 0
  %3275 = vmatpush.bf16.msra.mxu0 %v478
  %3276 = vmatpush.bf16.msra.mxu0 %v476
  %3277 = vmatpush.bf16.msra.mxu0 %v474
  %3278 = vmatpush.bf16.msra.mxu0 %v472
  %3279 = vmatmul.bf16.gmra.mxu0 %v3255
  %v3280 = vpop.f32.mrf.mxu0
  %v3281 = vadd.f32 0.0, %v3280
  %v3282 = vpop.f32.mrf.mxu0
  %v3283 = vadd.f32 0.0, %v3282
  %3284 = vdwg.mxu0
  %v3285 = vadd.f32 %v3249, %v3267
  %v3286 = vadd.f32 %v3250, %v3281
  %v3287 = vadd.f32 %v3251, %v3269
  %v3288 = vadd.f32 %v3252, %v3283
  %v3289 = vxor.u32 %v3285, 2147483648
  %v3290 = vxor.u32 %v3286, 2147483648
  %v3291 = vxor.u32 %v3287, 2147483648
  %v3292 = vxor.u32 %v3288, 2147483648
  %v3293 = vmul.f32 %v3289, 1.442695
  %v3294 = vpow.pop %v3293
  %v3295 = vmul.f32 %v3290, 1.442695
  %v3296 = vpow.pop %v3295
  %v3297 = vmul.f32 %v3291, 1.442695
  %v3298 = vpow.pop %v3297
  %v3299 = vmul.f32 %v3292, 1.442695
  %v3300 = vpow.pop %v3299
  %v3301 = vadd.f32 %v3294, 1.0
  %v3302 = vadd.f32 %v3296, 1.0
  %v3303 = vadd.f32 %v3298, 1.0
  %v3304 = vadd.f32 %v3300, 1.0
  %v3305 = vrcp.pop %v3301
  %v3306 = vmul.f32 %v3301, %v3305
  %v3307 = vsub.f32 1.0, %v3306
  %v3308 = vmul.f32 %v3305, %v3307
  %v3309 = vadd.f32 %v3305, %v3308
  %vm3310 = vweird.f32 %v3301
  %vm3311 = vweird.f32 %v3305
  %vm3312 = vmor %vm3310, %vm3311
  %v3313 = vsel %vm3312, %v3305, %v3309
  %v3314 = vand.u32 2147483647, %v3301
  %vm3315 = vcmp.eq.f32.partialorder %v3314, 8.507059e+37
  %v3316 = vand.u32 %v3301, 2147483648
  %v3317 = vor.u32 1.1754944e-38, %v3316
  %v3318 = vsel %vm3315, %v3317, %v3313
  %v3319 = vmul.f32 1.0, %v3318
  %v3320 = vrcp.pop %v3302
  %v3321 = vmul.f32 %v3302, %v3320
  %v3322 = vsub.f32 1.0, %v3321
  %v3323 = vmul.f32 %v3320, %v3322
  %v3324 = vadd.f32 %v3320, %v3323
  %vm3325 = vweird.f32 %v3302
  %vm3326 = vweird.f32 %v3320
  %vm3327 = vmor %vm3325, %vm3326
  %v3328 = vsel %vm3327, %v3320, %v3324
  %v3329 = vand.u32 2147483647, %v3302
  %vm3330 = vcmp.eq.f32.partialorder %v3329, 8.507059e+37
  %v3331 = vand.u32 %v3302, 2147483648
  %v3332 = vor.u32 1.1754944e-38, %v3331
  %v3333 = vsel %vm3330, %v3332, %v3328
  %v3334 = vmul.f32 1.0, %v3333
  %v3335 = vrcp.pop %v3303
  %v3336 = vmul.f32 %v3303, %v3335
  %v3337 = vsub.f32 1.0, %v3336
  %v3338 = vmul.f32 %v3335, %v3337
  %v3339 = vadd.f32 %v3335, %v3338
  %vm3340 = vweird.f32 %v3303
  %vm3341 = vweird.f32 %v3335
  %vm3342 = vmor %vm3340, %vm3341
  %v3343 = vsel %vm3342, %v3335, %v3339
  %v3344 = vand.u32 2147483647, %v3303
  %vm3345 = vcmp.eq.f32.partialorder %v3344, 8.507059e+37
  %v3346 = vand.u32 %v3303, 2147483648
  %v3347 = vor.u32 1.1754944e-38, %v3346
  %v3348 = vsel %vm3345, %v3347, %v3343
  %v3349 = vmul.f32 1.0, %v3348
  %v3350 = vrcp.pop %v3304
  %v3351 = vmul.f32 %v3304, %v3350
  %v3352 = vsub.f32 1.0, %v3351
  %v3353 = vmul.f32 %v3350, %v3352
  %v3354 = vadd.f32 %v3350, %v3353
  %vm3355 = vweird.f32 %v3304
  %vm3356 = vweird.f32 %v3350
  %vm3357 = vmor %vm3355, %vm3356
  %v3358 = vsel %vm3357, %v3350, %v3354
  %v3359 = vand.u32 2147483647, %v3304
  %vm3360 = vcmp.eq.f32.partialorder %v3359, 8.507059e+37
  %v3361 = vand.u32 %v3304, 2147483648
  %v3362 = vor.u32 1.1754944e-38, %v3361
  %v3363 = vsel %vm3360, %v3362, %v3358
  %v3364 = vmul.f32 1.0, %v3363
  %v3365 = vmul.f32 %v3334, 2.0
  %v3366 = vmul.f32 %v3364, 2.0
  %v3367 = vsub.f32 %v3365, 1.0
  %v3368 = vsub.f32 %v3366, 1.0
  %v3369 = vmul.f32 %v3319, %v3241
  %v3370 = vmul.f32 %v3349, %v3242
  %v3371 = vmul.f32 %v3319, %v3367
  %v3372 = vmul.f32 %v3349, %v3368
  %3375 = vrot.lane.b32.xlu0 %v3371, 64
  %v3376 = vpop.permute.xlu0 %3375
  %3377 = vrot.lane.b32.xlu0 %v3372, 64
  %v3378 = vpop.permute.xlu0 %3377
  %v3381 = vadd.f32 %v3369, %v3376
  %v3382 = vadd.f32 %v3370, %v3378
  %v3383 = vtanh.pop %v3381
  %v3384 = vtanh.pop %v3382
  %v3385 = vmul.f32 %v3334, %v3383
  %v3386 = vmul.f32 %v3364, %v3384
  %v3387 = vld [vmem:[%s1044] sm:$0xff]
  %v3388 = vld [vmem:[%s1044 + $0x8] sm:$0xff]
  %v3389 = vunpack.c.l.bf16 %v3387
  %v3390 = vunpack.c.h.bf16 %v3387
  %v3391 = vunpack.c.l.bf16 %v3388
  %v3392 = vunpack.c.h.bf16 %v3388
  %v3393 = vpack.c.bf16 %v3386, %v3385
  %v3395 = vsel %vm487, %v3393, 0
  %3397 = vmatpush.bf16.msra.mxu0 0
  %3398 = vmatpush.bf16.msra.mxu0 0
  %3399 = vmatpush.bf16.msra.mxu0 0
  %3400 = vmatpush.bf16.msra.mxu0 0
  %3401 = vmatpush.bf16.msra.mxu0 %v477
  %3402 = vmatpush.bf16.msra.mxu0 %v475
  %3403 = vmatpush.bf16.msra.mxu0 %v473
  %3404 = vmatpush.bf16.msra.mxu0 %v471
  %3405 = vmatmul.bf16.gmra.mxu0 %v3395
  %v3406 = vpop.f32.mrf.mxu0
  %v3407 = vadd.f32 0.0, %v3406
  %v3408 = vpop.f32.mrf.mxu0
  %v3409 = vadd.f32 0.0, %v3408
  %3410 = vdwg.mxu0
  %3411 = vmatpush.bf16.msra.mxu0 0
  %3412 = vmatpush.bf16.msra.mxu0 0
  %3413 = vmatpush.bf16.msra.mxu0 0
  %3414 = vmatpush.bf16.msra.mxu0 0
  %3415 = vmatpush.bf16.msra.mxu0 %v478
  %3416 = vmatpush.bf16.msra.mxu0 %v476
  %3417 = vmatpush.bf16.msra.mxu0 %v474
  %3418 = vmatpush.bf16.msra.mxu0 %v472
  %3419 = vmatmul.bf16.gmra.mxu0 %v3395
  %v3420 = vpop.f32.mrf.mxu0
  %v3421 = vadd.f32 0.0, %v3420
  %v3422 = vpop.f32.mrf.mxu0
  %v3423 = vadd.f32 0.0, %v3422
  %3424 = vdwg.mxu0
  %v3425 = vadd.f32 %v3389, %v3407
  %v3426 = vadd.f32 %v3390, %v3421
  %v3427 = vadd.f32 %v3391, %v3409
  %v3428 = vadd.f32 %v3392, %v3423
  %v3429 = vxor.u32 %v3425, 2147483648
  %v3430 = vxor.u32 %v3426, 2147483648
  %v3431 = vxor.u32 %v3427, 2147483648
  %v3432 = vxor.u32 %v3428, 2147483648
  %v3433 = vmul.f32 %v3429, 1.442695
  %v3434 = vpow.pop %v3433
  %v3435 = vmul.f32 %v3430, 1.442695
  %v3436 = vpow.pop %v3435
  %v3437 = vmul.f32 %v3431, 1.442695
  %v3438 = vpow.pop %v3437
  %v3439 = vmul.f32 %v3432, 1.442695
  %v3440 = vpow.pop %v3439
  %v3441 = vadd.f32 %v3434, 1.0
  %v3442 = vadd.f32 %v3436, 1.0
  %v3443 = vadd.f32 %v3438, 1.0
  %v3444 = vadd.f32 %v3440, 1.0
  %v3445 = vrcp.pop %v3441
  %v3446 = vmul.f32 %v3441, %v3445
  %v3447 = vsub.f32 1.0, %v3446
  %v3448 = vmul.f32 %v3445, %v3447
  %v3449 = vadd.f32 %v3445, %v3448
  %vm3450 = vweird.f32 %v3441
  %vm3451 = vweird.f32 %v3445
  %vm3452 = vmor %vm3450, %vm3451
  %v3453 = vsel %vm3452, %v3445, %v3449
  %v3454 = vand.u32 2147483647, %v3441
  %vm3455 = vcmp.eq.f32.partialorder %v3454, 8.507059e+37
  %v3456 = vand.u32 %v3441, 2147483648
  %v3457 = vor.u32 1.1754944e-38, %v3456
  %v3458 = vsel %vm3455, %v3457, %v3453
  %v3459 = vmul.f32 1.0, %v3458
  %v3460 = vrcp.pop %v3442
  %v3461 = vmul.f32 %v3442, %v3460
  %v3462 = vsub.f32 1.0, %v3461
  %v3463 = vmul.f32 %v3460, %v3462
  %v3464 = vadd.f32 %v3460, %v3463
  %vm3465 = vweird.f32 %v3442
  %vm3466 = vweird.f32 %v3460
  %vm3467 = vmor %vm3465, %vm3466
  %v3468 = vsel %vm3467, %v3460, %v3464
  %v3469 = vand.u32 2147483647, %v3442
  %vm3470 = vcmp.eq.f32.partialorder %v3469, 8.507059e+37
  %v3471 = vand.u32 %v3442, 2147483648
  %v3472 = vor.u32 1.1754944e-38, %v3471
  %v3473 = vsel %vm3470, %v3472, %v3468
  %v3474 = vmul.f32 1.0, %v3473
  %v3475 = vrcp.pop %v3443
  %v3476 = vmul.f32 %v3443, %v3475
  %v3477 = vsub.f32 1.0, %v3476
  %v3478 = vmul.f32 %v3475, %v3477
  %v3479 = vadd.f32 %v3475, %v3478
  %vm3480 = vweird.f32 %v3443
  %vm3481 = vweird.f32 %v3475
  %vm3482 = vmor %vm3480, %vm3481
  %v3483 = vsel %vm3482, %v3475, %v3479
  %v3484 = vand.u32 2147483647, %v3443
  %vm3485 = vcmp.eq.f32.partialorder %v3484, 8.507059e+37
  %v3486 = vand.u32 %v3443, 2147483648
  %v3487 = vor.u32 1.1754944e-38, %v3486
  %v3488 = vsel %vm3485, %v3487, %v3483
  %v3489 = vmul.f32 1.0, %v3488
  %v3490 = vrcp.pop %v3444
  %v3491 = vmul.f32 %v3444, %v3490
  %v3492 = vsub.f32 1.0, %v3491
  %v3493 = vmul.f32 %v3490, %v3492
  %v3494 = vadd.f32 %v3490, %v3493
  %vm3495 = vweird.f32 %v3444
  %vm3496 = vweird.f32 %v3490
  %vm3497 = vmor %vm3495, %vm3496
  %v3498 = vsel %vm3497, %v3490, %v3494
  %v3499 = vand.u32 2147483647, %v3444
  %vm3500 = vcmp.eq.f32.partialorder %v3499, 8.507059e+37
  %v3501 = vand.u32 %v3444, 2147483648
  %v3502 = vor.u32 1.1754944e-38, %v3501
  %v3503 = vsel %vm3500, %v3502, %v3498
  %v3504 = vmul.f32 1.0, %v3503
  %v3505 = vmul.f32 %v3474, 2.0
  %v3506 = vmul.f32 %v3504, 2.0
  %v3507 = vsub.f32 %v3505, 1.0
  %v3508 = vsub.f32 %v3506, 1.0
  %v3509 = vmul.f32 %v3459, %v3381
  %v3510 = vmul.f32 %v3489, %v3382
  %v3511 = vmul.f32 %v3459, %v3507
  %v3512 = vmul.f32 %v3489, %v3508
  %3515 = vrot.lane.b32.xlu0 %v3511, 64
  %v3516 = vpop.permute.xlu0 %3515
  %3517 = vrot.lane.b32.xlu0 %v3512, 64
  %v3518 = vpop.permute.xlu0 %3517
  %v3521 = vadd.f32 %v3509, %v3516
  %v3522 = vadd.f32 %v3510, %v3518
  %v3523 = vtanh.pop %v3521
  %v3524 = vtanh.pop %v3522
  %v3525 = vmul.f32 %v3474, %v3523
  %v3526 = vmul.f32 %v3504, %v3524
  %v3527 = vld [vmem:[%s1185] sm:$0xff]
  %v3528 = vld [vmem:[%s1185 + $0x8] sm:$0xff]
  %v3529 = vunpack.c.l.bf16 %v3527
  %v3530 = vunpack.c.h.bf16 %v3527
  %v3531 = vunpack.c.l.bf16 %v3528
  %v3532 = vunpack.c.h.bf16 %v3528
  %v3533 = vpack.c.bf16 %v3526, %v3525
  %v3535 = vsel %vm487, %v3533, 0
  %3537 = vmatpush.bf16.msra.mxu0 0
  %3538 = vmatpush.bf16.msra.mxu0 0
  %3539 = vmatpush.bf16.msra.mxu0 0
  %3540 = vmatpush.bf16.msra.mxu0 0
  %3541 = vmatpush.bf16.msra.mxu0 %v477
  %3542 = vmatpush.bf16.msra.mxu0 %v475
  %3543 = vmatpush.bf16.msra.mxu0 %v473
  %3544 = vmatpush.bf16.msra.mxu0 %v471
  %3545 = vmatmul.bf16.gmra.mxu0 %v3535
  %v3546 = vpop.f32.mrf.mxu0
  %v3547 = vadd.f32 0.0, %v3546
  %v3548 = vpop.f32.mrf.mxu0
  %v3549 = vadd.f32 0.0, %v3548
  %3550 = vdwg.mxu0
  %3551 = vmatpush.bf16.msra.mxu0 0
  %3552 = vmatpush.bf16.msra.mxu0 0
  %3553 = vmatpush.bf16.msra.mxu0 0
  %3554 = vmatpush.bf16.msra.mxu0 0
  %3555 = vmatpush.bf16.msra.mxu0 %v478
  %3556 = vmatpush.bf16.msra.mxu0 %v476
  %3557 = vmatpush.bf16.msra.mxu0 %v474
  %3558 = vmatpush.bf16.msra.mxu0 %v472
  %3559 = vmatmul.bf16.gmra.mxu0 %v3535
  %v3560 = vpop.f32.mrf.mxu0
  %v3561 = vadd.f32 0.0, %v3560
  %v3562 = vpop.f32.mrf.mxu0
  %v3563 = vadd.f32 0.0, %v3562
  %3564 = vdwg.mxu0
  %v3565 = vadd.f32 %v3529, %v3547
  %v3566 = vadd.f32 %v3530, %v3561
  %v3567 = vadd.f32 %v3531, %v3549
  %v3568 = vadd.f32 %v3532, %v3563
  %v3569 = vxor.u32 %v3565, 2147483648
  %v3570 = vxor.u32 %v3566, 2147483648
  %v3571 = vxor.u32 %v3567, 2147483648
  %v3572 = vxor.u32 %v3568, 2147483648
  %v3573 = vmul.f32 %v3569, 1.442695
  %v3574 = vpow.pop %v3573
  %v3575 = vmul.f32 %v3570, 1.442695
  %v3576 = vpow.pop %v3575
  %v3577 = vmul.f32 %v3571, 1.442695
  %v3578 = vpow.pop %v3577
  %v3579 = vmul.f32 %v3572, 1.442695
  %v3580 = vpow.pop %v3579
  %v3581 = vadd.f32 %v3574, 1.0
  %v3582 = vadd.f32 %v3576, 1.0
  %v3583 = vadd.f32 %v3578, 1.0
  %v3584 = vadd.f32 %v3580, 1.0
  %v3585 = vrcp.pop %v3581
  %v3586 = vmul.f32 %v3581, %v3585
  %v3587 = vsub.f32 1.0, %v3586
  %v3588 = vmul.f32 %v3585, %v3587
  %v3589 = vadd.f32 %v3585, %v3588
  %vm3590 = vweird.f32 %v3581
  %vm3591 = vweird.f32 %v3585
  %vm3592 = vmor %vm3590, %vm3591
  %v3593 = vsel %vm3592, %v3585, %v3589
  %v3594 = vand.u32 2147483647, %v3581
  %vm3595 = vcmp.eq.f32.partialorder %v3594, 8.507059e+37
  %v3596 = vand.u32 %v3581, 2147483648
  %v3597 = vor.u32 1.1754944e-38, %v3596
  %v3598 = vsel %vm3595, %v3597, %v3593
  %v3599 = vmul.f32 1.0, %v3598
  %v3600 = vrcp.pop %v3582
  %v3601 = vmul.f32 %v3582, %v3600
  %v3602 = vsub.f32 1.0, %v3601
  %v3603 = vmul.f32 %v3600, %v3602
  %v3604 = vadd.f32 %v3600, %v3603
  %vm3605 = vweird.f32 %v3582
  %vm3606 = vweird.f32 %v3600
  %vm3607 = vmor %vm3605, %vm3606
  %v3608 = vsel %vm3607, %v3600, %v3604
  %v3609 = vand.u32 2147483647, %v3582
  %vm3610 = vcmp.eq.f32.partialorder %v3609, 8.507059e+37
  %v3611 = vand.u32 %v3582, 2147483648
  %v3612 = vor.u32 1.1754944e-38, %v3611
  %v3613 = vsel %vm3610, %v3612, %v3608
  %v3614 = vmul.f32 1.0, %v3613
  %v3615 = vrcp.pop %v3583
  %v3616 = vmul.f32 %v3583, %v3615
  %v3617 = vsub.f32 1.0, %v3616
  %v3618 = vmul.f32 %v3615, %v3617
  %v3619 = vadd.f32 %v3615, %v3618
  %vm3620 = vweird.f32 %v3583
  %vm3621 = vweird.f32 %v3615
  %vm3622 = vmor %vm3620, %vm3621
  %v3623 = vsel %vm3622, %v3615, %v3619
  %v3624 = vand.u32 2147483647, %v3583
  %vm3625 = vcmp.eq.f32.partialorder %v3624, 8.507059e+37
  %v3626 = vand.u32 %v3583, 2147483648
  %v3627 = vor.u32 1.1754944e-38, %v3626
  %v3628 = vsel %vm3625, %v3627, %v3623
  %v3629 = vmul.f32 1.0, %v3628
  %v3630 = vrcp.pop %v3584
  %v3631 = vmul.f32 %v3584, %v3630
  %v3632 = vsub.f32 1.0, %v3631
  %v3633 = vmul.f32 %v3630, %v3632
  %v3634 = vadd.f32 %v3630, %v3633
  %vm3635 = vweird.f32 %v3584
  %vm3636 = vweird.f32 %v3630
  %vm3637 = vmor %vm3635, %vm3636
  %v3638 = vsel %vm3637, %v3630, %v3634
  %v3639 = vand.u32 2147483647, %v3584
  %vm3640 = vcmp.eq.f32.partialorder %v3639, 8.507059e+37
  %v3641 = vand.u32 %v3584, 2147483648
  %v3642 = vor.u32 1.1754944e-38, %v3641
  %v3643 = vsel %vm3640, %v3642, %v3638
  %v3644 = vmul.f32 1.0, %v3643
  %v3645 = vmul.f32 %v3614, 2.0
  %v3646 = vmul.f32 %v3644, 2.0
  %v3647 = vsub.f32 %v3645, 1.0
  %v3648 = vsub.f32 %v3646, 1.0
  %v3649 = vmul.f32 %v3599, %v3521
  %v3650 = vmul.f32 %v3629, %v3522
  %v3651 = vmul.f32 %v3599, %v3647
  %v3652 = vmul.f32 %v3629, %v3648
  %3655 = vrot.lane.b32.xlu0 %v3651, 64
  %v3656 = vpop.permute.xlu0 %3655
  %3657 = vrot.lane.b32.xlu0 %v3652, 64
  %v3658 = vpop.permute.xlu0 %3657
  %v3661 = vadd.f32 %v3649, %v3656
  %v3662 = vadd.f32 %v3650, %v3658
  %v3663 = vtanh.pop %v3661
  %v3664 = vtanh.pop %v3662
  %v3665 = vmul.f32 %v3614, %v3663
  %v3666 = vmul.f32 %v3644, %v3664
  %v3667 = vld [vmem:[%s1326] sm:$0xff]
  %v3668 = vld [vmem:[%s1326 + $0x8] sm:$0xff]
  %v3669 = vunpack.c.l.bf16 %v3667
  %v3670 = vunpack.c.h.bf16 %v3667
  %v3671 = vunpack.c.l.bf16 %v3668
  %v3672 = vunpack.c.h.bf16 %v3668
  %v3673 = vpack.c.bf16 %v3666, %v3665
  %v3675 = vsel %vm487, %v3673, 0
  %3677 = vmatpush.bf16.msra.mxu0 0
  %3678 = vmatpush.bf16.msra.mxu0 0
  %3679 = vmatpush.bf16.msra.mxu0 0
  %3680 = vmatpush.bf16.msra.mxu0 0
  %3681 = vmatpush.bf16.msra.mxu0 %v477
  %3682 = vmatpush.bf16.msra.mxu0 %v475
  %3683 = vmatpush.bf16.msra.mxu0 %v473
  %3684 = vmatpush.bf16.msra.mxu0 %v471
  %3685 = vmatmul.bf16.gmra.mxu0 %v3675
  %v3686 = vpop.f32.mrf.mxu0
  %v3687 = vadd.f32 0.0, %v3686
  %v3688 = vpop.f32.mrf.mxu0
  %v3689 = vadd.f32 0.0, %v3688
  %3690 = vdwg.mxu0
  %3691 = vmatpush.bf16.msra.mxu0 0
  %3692 = vmatpush.bf16.msra.mxu0 0
  %3693 = vmatpush.bf16.msra.mxu0 0
  %3694 = vmatpush.bf16.msra.mxu0 0
  %3695 = vmatpush.bf16.msra.mxu0 %v478
  %3696 = vmatpush.bf16.msra.mxu0 %v476
  %3697 = vmatpush.bf16.msra.mxu0 %v474
  %3698 = vmatpush.bf16.msra.mxu0 %v472
  %3699 = vmatmul.bf16.gmra.mxu0 %v3675
  %v3700 = vpop.f32.mrf.mxu0
  %v3701 = vadd.f32 0.0, %v3700
  %v3702 = vpop.f32.mrf.mxu0
  %v3703 = vadd.f32 0.0, %v3702
  %3704 = vdwg.mxu0
  %v3705 = vadd.f32 %v3669, %v3687
  %v3706 = vadd.f32 %v3670, %v3701
  %v3707 = vadd.f32 %v3671, %v3689
  %v3708 = vadd.f32 %v3672, %v3703
  %v3709 = vxor.u32 %v3705, 2147483648
  %v3710 = vxor.u32 %v3706, 2147483648
  %v3711 = vxor.u32 %v3707, 2147483648
  %v3712 = vxor.u32 %v3708, 2147483648
  %v3713 = vmul.f32 %v3709, 1.442695
  %v3714 = vpow.pop %v3713
  %v3715 = vmul.f32 %v3710, 1.442695
  %v3716 = vpow.pop %v3715
  %v3717 = vmul.f32 %v3711, 1.442695
  %v3718 = vpow.pop %v3717
  %v3719 = vmul.f32 %v3712, 1.442695
  %v3720 = vpow.pop %v3719
  %v3721 = vadd.f32 %v3714, 1.0
  %v3722 = vadd.f32 %v3716, 1.0
  %v3723 = vadd.f32 %v3718, 1.0
  %v3724 = vadd.f32 %v3720, 1.0
  %v3725 = vrcp.pop %v3721
  %v3726 = vmul.f32 %v3721, %v3725
  %v3727 = vsub.f32 1.0, %v3726
  %v3728 = vmul.f32 %v3725, %v3727
  %v3729 = vadd.f32 %v3725, %v3728
  %vm3730 = vweird.f32 %v3721
  %vm3731 = vweird.f32 %v3725
  %vm3732 = vmor %vm3730, %vm3731
  %v3733 = vsel %vm3732, %v3725, %v3729
  %v3734 = vand.u32 2147483647, %v3721
  %vm3735 = vcmp.eq.f32.partialorder %v3734, 8.507059e+37
  %v3736 = vand.u32 %v3721, 2147483648
  %v3737 = vor.u32 1.1754944e-38, %v3736
  %v3738 = vsel %vm3735, %v3737, %v3733
  %v3739 = vmul.f32 1.0, %v3738
  %v3740 = vrcp.pop %v3722
  %v3741 = vmul.f32 %v3722, %v3740
  %v3742 = vsub.f32 1.0, %v3741
  %v3743 = vmul.f32 %v3740, %v3742
  %v3744 = vadd.f32 %v3740, %v3743
  %vm3745 = vweird.f32 %v3722
  %vm3746 = vweird.f32 %v3740
  %vm3747 = vmor %vm3745, %vm3746
  %v3748 = vsel %vm3747, %v3740, %v3744
  %v3749 = vand.u32 2147483647, %v3722
  %vm3750 = vcmp.eq.f32.partialorder %v3749, 8.507059e+37
  %v3751 = vand.u32 %v3722, 2147483648
  %v3752 = vor.u32 1.1754944e-38, %v3751
  %v3753 = vsel %vm3750, %v3752, %v3748
  %v3754 = vmul.f32 1.0, %v3753
  %v3755 = vrcp.pop %v3723
  %v3756 = vmul.f32 %v3723, %v3755
  %v3757 = vsub.f32 1.0, %v3756
  %v3758 = vmul.f32 %v3755, %v3757
  %v3759 = vadd.f32 %v3755, %v3758
  %vm3760 = vweird.f32 %v3723
  %vm3761 = vweird.f32 %v3755
  %vm3762 = vmor %vm3760, %vm3761
  %v3763 = vsel %vm3762, %v3755, %v3759
  %v3764 = vand.u32 2147483647, %v3723
  %vm3765 = vcmp.eq.f32.partialorder %v3764, 8.507059e+37
  %v3766 = vand.u32 %v3723, 2147483648
  %v3767 = vor.u32 1.1754944e-38, %v3766
  %v3768 = vsel %vm3765, %v3767, %v3763
  %v3769 = vmul.f32 1.0, %v3768
  %v3770 = vrcp.pop %v3724
  %v3771 = vmul.f32 %v3724, %v3770
  %v3772 = vsub.f32 1.0, %v3771
  %v3773 = vmul.f32 %v3770, %v3772
  %v3774 = vadd.f32 %v3770, %v3773
  %vm3775 = vweird.f32 %v3724
  %vm3776 = vweird.f32 %v3770
  %vm3777 = vmor %vm3775, %vm3776
  %v3778 = vsel %vm3777, %v3770, %v3774
  %v3779 = vand.u32 2147483647, %v3724
  %vm3780 = vcmp.eq.f32.partialorder %v3779, 8.507059e+37
  %v3781 = vand.u32 %v3724, 2147483648
  %v3782 = vor.u32 1.1754944e-38, %v3781
  %v3783 = vsel %vm3780, %v3782, %v3778
  %v3784 = vmul.f32 1.0, %v3783
  %v3785 = vmul.f32 %v3754, 2.0
  %v3786 = vmul.f32 %v3784, 2.0
  %v3787 = vsub.f32 %v3785, 1.0
  %v3788 = vsub.f32 %v3786, 1.0
  %v3789 = vmul.f32 %v3739, %v3661
  %v3790 = vmul.f32 %v3769, %v3662
  %v3791 = vmul.f32 %v3739, %v3787
  %v3792 = vmul.f32 %v3769, %v3788
  %3795 = vrot.lane.b32.xlu0 %v3791, 64
  %v3796 = vpop.permute.xlu0 %3795
  %3797 = vrot.lane.b32.xlu0 %v3792, 64
  %v3798 = vpop.permute.xlu0 %3797
  %v3801 = vadd.f32 %v3789, %v3796
  %v3802 = vadd.f32 %v3790, %v3798
  %v3803 = vtanh.pop %v3801
  %v3804 = vtanh.pop %v3802
  %v3805 = vmul.f32 %v3754, %v3803
  %v3806 = vmul.f32 %v3784, %v3804
  %v3807 = vld [vmem:[#allocation3] sm:$0xff]
  %v3808 = vld [vmem:[#allocation3 + $0x8] sm:$0xff]
  %v3809 = vunpack.c.l.bf16 %v3807
  %v3810 = vunpack.c.h.bf16 %v3807
  %v3811 = vunpack.c.l.bf16 %v3808
  %v3812 = vunpack.c.h.bf16 %v3808
  %v3813 = vpack.c.bf16 %v3806, %v3805
  %v3815 = vsel %vm487, %v3813, 0
  %3817 = vmatpush.bf16.msra.mxu0 0
  %3818 = vmatpush.bf16.msra.mxu0 0
  %3819 = vmatpush.bf16.msra.mxu0 0
  %3820 = vmatpush.bf16.msra.mxu0 0
  %3821 = vmatpush.bf16.msra.mxu0 %v477
  %3822 = vmatpush.bf16.msra.mxu0 %v475
  %3823 = vmatpush.bf16.msra.mxu0 %v473
  %3824 = vmatpush.bf16.msra.mxu0 %v471
  %3825 = vmatmul.bf16.gmra.mxu0 %v3815
  %v3826 = vpop.f32.mrf.mxu0
  %v3827 = vadd.f32 0.0, %v3826
  %v3828 = vpop.f32.mrf.mxu0
  %v3829 = vadd.f32 0.0, %v3828
  %3830 = vdwg.mxu0
  %3831 = vmatpush.bf16.msra.mxu0 0
  %3832 = vmatpush.bf16.msra.mxu0 0
  %3833 = vmatpush.bf16.msra.mxu0 0
  %3834 = vmatpush.bf16.msra.mxu0 0
  %3835 = vmatpush.bf16.msra.mxu0 %v478
  %3836 = vmatpush.bf16.msra.mxu0 %v476
  %3837 = vmatpush.bf16.msra.mxu0 %v474
  %3838 = vmatpush.bf16.msra.mxu0 %v472
  %3839 = vmatmul.bf16.gmra.mxu0 %v3815
  %v3840 = vpop.f32.mrf.mxu0
  %v3841 = vadd.f32 0.0, %v3840
  %v3842 = vpop.f32.mrf.mxu0
  %v3843 = vadd.f32 0.0, %v3842
  %3844 = vdwg.mxu0
  %v3845 = vadd.f32 %v3809, %v3827
  %v3846 = vadd.f32 %v3810, %v3841
  %v3847 = vadd.f32 %v3811, %v3829
  %v3848 = vadd.f32 %v3812, %v3843
  %v3849 = vxor.u32 %v3845, 2147483648
  %v3850 = vxor.u32 %v3846, 2147483648
  %v3851 = vxor.u32 %v3847, 2147483648
  %v3852 = vxor.u32 %v3848, 2147483648
  %v3853 = vmul.f32 %v3849, 1.442695
  %v3854 = vpow.pop %v3853
  %v3855 = vmul.f32 %v3850, 1.442695
  %v3856 = vpow.pop %v3855
  %v3857 = vmul.f32 %v3851, 1.442695
  %v3858 = vpow.pop %v3857
  %v3859 = vmul.f32 %v3852, 1.442695
  %v3860 = vpow.pop %v3859
  %v3861 = vadd.f32 %v3854, 1.0
  %v3862 = vadd.f32 %v3856, 1.0
  %v3863 = vadd.f32 %v3858, 1.0
  %v3864 = vadd.f32 %v3860, 1.0
  %v3865 = vrcp.pop %v3861
  %v3866 = vmul.f32 %v3861, %v3865
  %v3867 = vsub.f32 1.0, %v3866
  %v3868 = vmul.f32 %v3865, %v3867
  %v3869 = vadd.f32 %v3865, %v3868
  %vm3870 = vweird.f32 %v3861
  %vm3871 = vweird.f32 %v3865
  %vm3872 = vmor %vm3870, %vm3871
  %v3873 = vsel %vm3872, %v3865, %v3869
  %v3874 = vand.u32 2147483647, %v3861
  %vm3875 = vcmp.eq.f32.partialorder %v3874, 8.507059e+37
  %v3876 = vand.u32 %v3861, 2147483648
  %v3877 = vor.u32 1.1754944e-38, %v3876
  %v3878 = vsel %vm3875, %v3877, %v3873
  %v3879 = vmul.f32 1.0, %v3878
  %v3880 = vrcp.pop %v3862
  %v3881 = vmul.f32 %v3862, %v3880
  %v3882 = vsub.f32 1.0, %v3881
  %v3883 = vmul.f32 %v3880, %v3882
  %v3884 = vadd.f32 %v3880, %v3883
  %vm3885 = vweird.f32 %v3862
  %vm3886 = vweird.f32 %v3880
  %vm3887 = vmor %vm3885, %vm3886
  %v3888 = vsel %vm3887, %v3880, %v3884
  %v3889 = vand.u32 2147483647, %v3862
  %vm3890 = vcmp.eq.f32.partialorder %v3889, 8.507059e+37
  %v3891 = vand.u32 %v3862, 2147483648
  %v3892 = vor.u32 1.1754944e-38, %v3891
  %v3893 = vsel %vm3890, %v3892, %v3888
  %v3894 = vmul.f32 1.0, %v3893
  %v3895 = vrcp.pop %v3863
  %v3896 = vmul.f32 %v3863, %v3895
  %v3897 = vsub.f32 1.0, %v3896
  %v3898 = vmul.f32 %v3895, %v3897
  %v3899 = vadd.f32 %v3895, %v3898
  %vm3900 = vweird.f32 %v3863
  %vm3901 = vweird.f32 %v3895
  %vm3902 = vmor %vm3900, %vm3901
  %v3903 = vsel %vm3902, %v3895, %v3899
  %v3904 = vand.u32 2147483647, %v3863
  %vm3905 = vcmp.eq.f32.partialorder %v3904, 8.507059e+37
  %v3906 = vand.u32 %v3863, 2147483648
  %v3907 = vor.u32 1.1754944e-38, %v3906
  %v3908 = vsel %vm3905, %v3907, %v3903
  %v3909 = vmul.f32 1.0, %v3908
  %v3910 = vrcp.pop %v3864
  %v3911 = vmul.f32 %v3864, %v3910
  %v3912 = vsub.f32 1.0, %v3911
  %v3913 = vmul.f32 %v3910, %v3912
  %v3914 = vadd.f32 %v3910, %v3913
  %vm3915 = vweird.f32 %v3864
  %vm3916 = vweird.f32 %v3910
  %vm3917 = vmor %vm3915, %vm3916
  %v3918 = vsel %vm3917, %v3910, %v3914
  %v3919 = vand.u32 2147483647, %v3864
  %vm3920 = vcmp.eq.f32.partialorder %v3919, 8.507059e+37
  %v3921 = vand.u32 %v3864, 2147483648
  %v3922 = vor.u32 1.1754944e-38, %v3921
  %v3923 = vsel %vm3920, %v3922, %v3918
  %v3924 = vmul.f32 1.0, %v3923
  %v3925 = vmul.f32 %v3894, 2.0
  %v3926 = vmul.f32 %v3924, 2.0
  %v3927 = vsub.f32 %v3925, 1.0
  %v3928 = vsub.f32 %v3926, 1.0
  %v3929 = vmul.f32 %v3879, %v3801
  %v3930 = vmul.f32 %v3909, %v3802
  %v3931 = vmul.f32 %v3879, %v3927
  %v3932 = vmul.f32 %v3909, %v3928
  %3935 = vrot.lane.b32.xlu0 %v3931, 64
  %v3936 = vpop.permute.xlu0 %3935
  %3937 = vrot.lane.b32.xlu0 %v3932, 64
  %v3938 = vpop.permute.xlu0 %3937
  %v3941 = vadd.f32 %v3929, %v3936
  %v3942 = vadd.f32 %v3930, %v3938
  %v3943 = vtanh.pop %v3941
  %v3944 = vtanh.pop %v3942
  %v3945 = vmul.f32 %v3894, %v3943
  %v3946 = vmul.f32 %v3924, %v3944
  %v3947 = vld [vmem:[%s1794] sm:$0xff]
  %v3948 = vld [vmem:[%s1794 + $0x8] sm:$0xff]
  %v3949 = vunpack.c.l.bf16 %v3947
  %v3950 = vunpack.c.h.bf16 %v3947
  %v3951 = vunpack.c.l.bf16 %v3948
  %v3952 = vunpack.c.h.bf16 %v3948
  %v3953 = vpack.c.bf16 %v3946, %v3945
  %v3955 = vsel %vm487, %v3953, 0
  %3957 = vmatpush.bf16.msra.mxu0 0
  %3958 = vmatpush.bf16.msra.mxu0 0
  %3959 = vmatpush.bf16.msra.mxu0 0
  %3960 = vmatpush.bf16.msra.mxu0 0
  %3961 = vmatpush.bf16.msra.mxu0 %v477
  %3962 = vmatpush.bf16.msra.mxu0 %v475
  %3963 = vmatpush.bf16.msra.mxu0 %v473
  %3964 = vmatpush.bf16.msra.mxu0 %v471
  %3965 = vmatmul.bf16.gmra.mxu0 %v3955
  %v3966 = vpop.f32.mrf.mxu0
  %v3967 = vadd.f32 0.0, %v3966
  %v3968 = vpop.f32.mrf.mxu0
  %v3969 = vadd.f32 0.0, %v3968
  %3970 = vdwg.mxu0
  %3971 = vmatpush.bf16.msra.mxu0 0
  %3972 = vmatpush.bf16.msra.mxu0 0
  %3973 = vmatpush.bf16.msra.mxu0 0
  %3974 = vmatpush.bf16.msra.mxu0 0
  %3975 = vmatpush.bf16.msra.mxu0 %v478
  %3976 = vmatpush.bf16.msra.mxu0 %v476
  %3977 = vmatpush.bf16.msra.mxu0 %v474
  %3978 = vmatpush.bf16.msra.mxu0 %v472
  %3979 = vmatmul.bf16.gmra.mxu0 %v3955
  %v3980 = vpop.f32.mrf.mxu0
  %v3981 = vadd.f32 0.0, %v3980
  %v3982 = vpop.f32.mrf.mxu0
  %v3983 = vadd.f32 0.0, %v3982
  %3984 = vdwg.mxu0
  %v3985 = vadd.f32 %v3949, %v3967
  %v3986 = vadd.f32 %v3950, %v3981
  %v3987 = vadd.f32 %v3951, %v3969
  %v3988 = vadd.f32 %v3952, %v3983
  %v3989 = vxor.u32 %v3985, 2147483648
  %v3990 = vxor.u32 %v3986, 2147483648
  %v3991 = vxor.u32 %v3987, 2147483648
  %v3992 = vxor.u32 %v3988, 2147483648
  %v3993 = vmul.f32 %v3989, 1.442695
  %v3994 = vpow.pop %v3993
  %v3995 = vmul.f32 %v3990, 1.442695
  %v3996 = vpow.pop %v3995
  %v3997 = vmul.f32 %v3991, 1.442695
  %v3998 = vpow.pop %v3997
  %v3999 = vmul.f32 %v3992, 1.442695
  %v4000 = vpow.pop %v3999
  %v4001 = vadd.f32 %v3994, 1.0
  %v4002 = vadd.f32 %v3996, 1.0
  %v4003 = vadd.f32 %v3998, 1.0
  %v4004 = vadd.f32 %v4000, 1.0
  %v4005 = vrcp.pop %v4001
  %v4006 = vmul.f32 %v4001, %v4005
  %v4007 = vsub.f32 1.0, %v4006
  %v4008 = vmul.f32 %v4005, %v4007
  %v4009 = vadd.f32 %v4005, %v4008
  %vm4010 = vweird.f32 %v4001
  %vm4011 = vweird.f32 %v4005
  %vm4012 = vmor %vm4010, %vm4011
  %v4013 = vsel %vm4012, %v4005, %v4009
  %v4014 = vand.u32 2147483647, %v4001
  %vm4015 = vcmp.eq.f32.partialorder %v4014, 8.507059e+37
  %v4016 = vand.u32 %v4001, 2147483648
  %v4017 = vor.u32 1.1754944e-38, %v4016
  %v4018 = vsel %vm4015, %v4017, %v4013
  %v4019 = vmul.f32 1.0, %v4018
  %v4020 = vrcp.pop %v4002
  %v4021 = vmul.f32 %v4002, %v4020
  %v4022 = vsub.f32 1.0, %v4021
  %v4023 = vmul.f32 %v4020, %v4022
  %v4024 = vadd.f32 %v4020, %v4023
  %vm4025 = vweird.f32 %v4002
  %vm4026 = vweird.f32 %v4020
  %vm4027 = vmor %vm4025, %vm4026
  %v4028 = vsel %vm4027, %v4020, %v4024
  %v4029 = vand.u32 2147483647, %v4002
  %vm4030 = vcmp.eq.f32.partialorder %v4029, 8.507059e+37
  %v4031 = vand.u32 %v4002, 2147483648
  %v4032 = vor.u32 1.1754944e-38, %v4031
  %v4033 = vsel %vm4030, %v4032, %v4028
  %v4034 = vmul.f32 1.0, %v4033
  %v4035 = vrcp.pop %v4003
  %v4036 = vmul.f32 %v4003, %v4035
  %v4037 = vsub.f32 1.0, %v4036
  %v4038 = vmul.f32 %v4035, %v4037
  %v4039 = vadd.f32 %v4035, %v4038
  %vm4040 = vweird.f32 %v4003
  %vm4041 = vweird.f32 %v4035
  %vm4042 = vmor %vm4040, %vm4041
  %v4043 = vsel %vm4042, %v4035, %v4039
  %v4044 = vand.u32 2147483647, %v4003
  %vm4045 = vcmp.eq.f32.partialorder %v4044, 8.507059e+37
  %v4046 = vand.u32 %v4003, 2147483648
  %v4047 = vor.u32 1.1754944e-38, %v4046
  %v4048 = vsel %vm4045, %v4047, %v4043
  %v4049 = vmul.f32 1.0, %v4048
  %v4050 = vrcp.pop %v4004
  %v4051 = vmul.f32 %v4004, %v4050
  %v4052 = vsub.f32 1.0, %v4051
  %v4053 = vmul.f32 %v4050, %v4052
  %v4054 = vadd.f32 %v4050, %v4053
  %vm4055 = vweird.f32 %v4004
  %vm4056 = vweird.f32 %v4050
  %vm4057 = vmor %vm4055, %vm4056
  %v4058 = vsel %vm4057, %v4050, %v4054
  %v4059 = vand.u32 2147483647, %v4004
  %vm4060 = vcmp.eq.f32.partialorder %v4059, 8.507059e+37
  %v4061 = vand.u32 %v4004, 2147483648
  %v4062 = vor.u32 1.1754944e-38, %v4061
  %v4063 = vsel %vm4060, %v4062, %v4058
  %v4064 = vmul.f32 1.0, %v4063
  %v4065 = vmul.f32 %v4034, 2.0
  %v4066 = vmul.f32 %v4064, 2.0
  %v4067 = vsub.f32 %v4065, 1.0
  %v4068 = vsub.f32 %v4066, 1.0
  %v4069 = vmul.f32 %v4019, %v3941
  %v4070 = vmul.f32 %v4049, %v3942
  %v4071 = vmul.f32 %v4019, %v4067
  %v4072 = vmul.f32 %v4049, %v4068
  %4075 = vrot.lane.b32.xlu0 %v4071, 64
  %v4076 = vpop.permute.xlu0 %4075
  %4077 = vrot.lane.b32.xlu0 %v4072, 64
  %v4078 = vpop.permute.xlu0 %4077
  %v4081 = vadd.f32 %v4069, %v4076
  %v4082 = vadd.f32 %v4070, %v4078
  %v4083 = vtanh.pop %v4081
  %v4084 = vtanh.pop %v4082
  %v4085 = vmul.f32 %v4034, %v4083
  %v4086 = vmul.f32 %v4064, %v4084
  %v4087 = vld [vmem:[%s1935] sm:$0xff]
  %v4088 = vld [vmem:[%s1935 + $0x8] sm:$0xff]
  %v4089 = vunpack.c.l.bf16 %v4087
  %v4090 = vunpack.c.h.bf16 %v4087
  %v4091 = vunpack.c.l.bf16 %v4088
  %v4092 = vunpack.c.h.bf16 %v4088
  %v4093 = vpack.c.bf16 %v4086, %v4085
  %v4095 = vsel %vm487, %v4093, 0
  %4097 = vmatpush.bf16.msra.mxu0 0
  %4098 = vmatpush.bf16.msra.mxu0 0
  %4099 = vmatpush.bf16.msra.mxu0 0
  %4100 = vmatpush.bf16.msra.mxu0 0
  %4101 = vmatpush.bf16.msra.mxu0 %v477
  %4102 = vmatpush.bf16.msra.mxu0 %v475
  %4103 = vmatpush.bf16.msra.mxu0 %v473
  %4104 = vmatpush.bf16.msra.mxu0 %v471
  %4105 = vmatmul.bf16.gmra.mxu0 %v4095
  %v4106 = vpop.f32.mrf.mxu0
  %v4107 = vadd.f32 0.0, %v4106
  %v4108 = vpop.f32.mrf.mxu0
  %v4109 = vadd.f32 0.0, %v4108
  %4110 = vdwg.mxu0
  %4111 = vmatpush.bf16.msra.mxu0 0
  %4112 = vmatpush.bf16.msra.mxu0 0
  %4113 = vmatpush.bf16.msra.mxu0 0
  %4114 = vmatpush.bf16.msra.mxu0 0
  %4115 = vmatpush.bf16.msra.mxu0 %v478
  %4116 = vmatpush.bf16.msra.mxu0 %v476
  %4117 = vmatpush.bf16.msra.mxu0 %v474
  %4118 = vmatpush.bf16.msra.mxu0 %v472
  %4119 = vmatmul.bf16.gmra.mxu0 %v4095
  %v4120 = vpop.f32.mrf.mxu0
  %v4121 = vadd.f32 0.0, %v4120
  %v4122 = vpop.f32.mrf.mxu0
  %v4123 = vadd.f32 0.0, %v4122
  %4124 = vdwg.mxu0
  %v4125 = vadd.f32 %v4089, %v4107
  %v4126 = vadd.f32 %v4090, %v4121
  %v4127 = vadd.f32 %v4091, %v4109
  %v4128 = vadd.f32 %v4092, %v4123
  %v4129 = vxor.u32 %v4125, 2147483648
  %v4130 = vxor.u32 %v4126, 2147483648
  %v4131 = vxor.u32 %v4127, 2147483648
  %v4132 = vxor.u32 %v4128, 2147483648
  %v4133 = vmul.f32 %v4129, 1.442695
  %v4134 = vpow.pop %v4133
  %v4135 = vmul.f32 %v4130, 1.442695
  %v4136 = vpow.pop %v4135
  %v4137 = vmul.f32 %v4131, 1.442695
  %v4138 = vpow.pop %v4137
  %v4139 = vmul.f32 %v4132, 1.442695
  %v4140 = vpow.pop %v4139
  %v4141 = vadd.f32 %v4134, 1.0
  %v4142 = vadd.f32 %v4136, 1.0
  %v4143 = vadd.f32 %v4138, 1.0
  %v4144 = vadd.f32 %v4140, 1.0
  %v4145 = vrcp.pop %v4141
  %v4146 = vmul.f32 %v4141, %v4145
  %v4147 = vsub.f32 1.0, %v4146
  %v4148 = vmul.f32 %v4145, %v4147
  %v4149 = vadd.f32 %v4145, %v4148
  %vm4150 = vweird.f32 %v4141
  %vm4151 = vweird.f32 %v4145
  %vm4152 = vmor %vm4150, %vm4151
  %v4153 = vsel %vm4152, %v4145, %v4149
  %v4154 = vand.u32 2147483647, %v4141
  %vm4155 = vcmp.eq.f32.partialorder %v4154, 8.507059e+37
  %v4156 = vand.u32 %v4141, 2147483648
  %v4157 = vor.u32 1.1754944e-38, %v4156
  %v4158 = vsel %vm4155, %v4157, %v4153
  %v4159 = vmul.f32 1.0, %v4158
  %v4160 = vrcp.pop %v4142
  %v4161 = vmul.f32 %v4142, %v4160
  %v4162 = vsub.f32 1.0, %v4161
  %v4163 = vmul.f32 %v4160, %v4162
  %v4164 = vadd.f32 %v4160, %v4163
  %vm4165 = vweird.f32 %v4142
  %vm4166 = vweird.f32 %v4160
  %vm4167 = vmor %vm4165, %vm4166
  %v4168 = vsel %vm4167, %v4160, %v4164
  %v4169 = vand.u32 2147483647, %v4142
  %vm4170 = vcmp.eq.f32.partialorder %v4169, 8.507059e+37
  %v4171 = vand.u32 %v4142, 2147483648
  %v4172 = vor.u32 1.1754944e-38, %v4171
  %v4173 = vsel %vm4170, %v4172, %v4168
  %v4174 = vmul.f32 1.0, %v4173
  %v4175 = vrcp.pop %v4143
  %v4176 = vmul.f32 %v4143, %v4175
  %v4177 = vsub.f32 1.0, %v4176
  %v4178 = vmul.f32 %v4175, %v4177
  %v4179 = vadd.f32 %v4175, %v4178
  %vm4180 = vweird.f32 %v4143
  %vm4181 = vweird.f32 %v4175
  %vm4182 = vmor %vm4180, %vm4181
  %v4183 = vsel %vm4182, %v4175, %v4179
  %v4184 = vand.u32 2147483647, %v4143
  %vm4185 = vcmp.eq.f32.partialorder %v4184, 8.507059e+37
  %v4186 = vand.u32 %v4143, 2147483648
  %v4187 = vor.u32 1.1754944e-38, %v4186
  %v4188 = vsel %vm4185, %v4187, %v4183
  %v4189 = vmul.f32 1.0, %v4188
  %v4190 = vrcp.pop %v4144
  %v4191 = vmul.f32 %v4144, %v4190
  %v4192 = vsub.f32 1.0, %v4191
  %v4193 = vmul.f32 %v4190, %v4192
  %v4194 = vadd.f32 %v4190, %v4193
  %vm4195 = vweird.f32 %v4144
  %vm4196 = vweird.f32 %v4190
  %vm4197 = vmor %vm4195, %vm4196
  %v4198 = vsel %vm4197, %v4190, %v4194
  %v4199 = vand.u32 2147483647, %v4144
  %vm4200 = vcmp.eq.f32.partialorder %v4199, 8.507059e+37
  %v4201 = vand.u32 %v4144, 2147483648
  %v4202 = vor.u32 1.1754944e-38, %v4201
  %v4203 = vsel %vm4200, %v4202, %v4198
  %v4204 = vmul.f32 1.0, %v4203
  %v4205 = vmul.f32 %v4174, 2.0
  %v4206 = vmul.f32 %v4204, 2.0
  %v4207 = vsub.f32 %v4205, 1.0
  %v4208 = vsub.f32 %v4206, 1.0
  %v4209 = vmul.f32 %v4159, %v4081
  %v4210 = vmul.f32 %v4189, %v4082
  %v4211 = vmul.f32 %v4159, %v4207
  %v4212 = vmul.f32 %v4189, %v4208
  %4215 = vrot.lane.b32.xlu0 %v4211, 64
  %v4216 = vpop.permute.xlu0 %4215
  %4217 = vrot.lane.b32.xlu0 %v4212, 64
  %v4218 = vpop.permute.xlu0 %4217
  %v4221 = vadd.f32 %v4209, %v4216
  %v4222 = vadd.f32 %v4210, %v4218
  %v4223 = vtanh.pop %v4221
  %v4224 = vtanh.pop %v4222
  %v4225 = vmul.f32 %v4174, %v4223
  %v4226 = vmul.f32 %v4204, %v4224
  %v4227 = vld [vmem:[%s2076] sm:$0xff]
  %v4228 = vld [vmem:[%s2076 + $0x8] sm:$0xff]
  %v4229 = vunpack.c.l.bf16 %v4227
  %v4230 = vunpack.c.h.bf16 %v4227
  %v4231 = vunpack.c.l.bf16 %v4228
  %v4232 = vunpack.c.h.bf16 %v4228
  %v4233 = vpack.c.bf16 %v4226, %v4225
  %v4235 = vsel %vm487, %v4233, 0
  %4237 = vmatpush.bf16.msra.mxu0 0
  %4238 = vmatpush.bf16.msra.mxu0 0
  %4239 = vmatpush.bf16.msra.mxu0 0
  %4240 = vmatpush.bf16.msra.mxu0 0
  %4241 = vmatpush.bf16.msra.mxu0 %v477
  %4242 = vmatpush.bf16.msra.mxu0 %v475
  %4243 = vmatpush.bf16.msra.mxu0 %v473
  %4244 = vmatpush.bf16.msra.mxu0 %v471
  %4245 = vmatmul.bf16.gmra.mxu0 %v4235
  %v4246 = vpop.f32.mrf.mxu0
  %v4247 = vadd.f32 0.0, %v4246
  %v4248 = vpop.f32.mrf.mxu0
  %v4249 = vadd.f32 0.0, %v4248
  %4250 = vdwg.mxu0
  %4251 = vmatpush.bf16.msra.mxu0 0
  %4252 = vmatpush.bf16.msra.mxu0 0
  %4253 = vmatpush.bf16.msra.mxu0 0
  %4254 = vmatpush.bf16.msra.mxu0 0
  %4255 = vmatpush.bf16.msra.mxu0 %v478
  %4256 = vmatpush.bf16.msra.mxu0 %v476
  %4257 = vmatpush.bf16.msra.mxu0 %v474
  %4258 = vmatpush.bf16.msra.mxu0 %v472
  %4259 = vmatmul.bf16.gmra.mxu0 %v4235
  %v4260 = vpop.f32.mrf.mxu0
  %v4261 = vadd.f32 0.0, %v4260
  %v4262 = vpop.f32.mrf.mxu0
  %v4263 = vadd.f32 0.0, %v4262
  %4264 = vdwg.mxu0
  %v4265 = vadd.f32 %v4229, %v4247
  %v4266 = vadd.f32 %v4230, %v4261
  %v4267 = vadd.f32 %v4231, %v4249
  %v4268 = vadd.f32 %v4232, %v4263
  %v4269 = vxor.u32 %v4265, 2147483648
  %v4270 = vxor.u32 %v4266, 2147483648
  %v4271 = vxor.u32 %v4267, 2147483648
  %v4272 = vxor.u32 %v4268, 2147483648
  %v4273 = vmul.f32 %v4269, 1.442695
  %v4274 = vpow.pop %v4273
  %v4275 = vmul.f32 %v4270, 1.442695
  %v4276 = vpow.pop %v4275
  %v4277 = vmul.f32 %v4271, 1.442695
  %v4278 = vpow.pop %v4277
  %v4279 = vmul.f32 %v4272, 1.442695
  %v4280 = vpow.pop %v4279
  %v4281 = vadd.f32 %v4274, 1.0
  %v4282 = vadd.f32 %v4276, 1.0
  %v4283 = vadd.f32 %v4278, 1.0
  %v4284 = vadd.f32 %v4280, 1.0
  %v4285 = vrcp.pop %v4281
  %v4286 = vmul.f32 %v4281, %v4285
  %v4287 = vsub.f32 1.0, %v4286
  %v4288 = vmul.f32 %v4285, %v4287
  %v4289 = vadd.f32 %v4285, %v4288
  %vm4290 = vweird.f32 %v4281
  %vm4291 = vweird.f32 %v4285
  %vm4292 = vmor %vm4290, %vm4291
  %v4293 = vsel %vm4292, %v4285, %v4289
  %v4294 = vand.u32 2147483647, %v4281
  %vm4295 = vcmp.eq.f32.partialorder %v4294, 8.507059e+37
  %v4296 = vand.u32 %v4281, 2147483648
  %v4297 = vor.u32 1.1754944e-38, %v4296
  %v4298 = vsel %vm4295, %v4297, %v4293
  %v4299 = vmul.f32 1.0, %v4298
  %v4300 = vrcp.pop %v4282
  %v4301 = vmul.f32 %v4282, %v4300
  %v4302 = vsub.f32 1.0, %v4301
  %v4303 = vmul.f32 %v4300, %v4302
  %v4304 = vadd.f32 %v4300, %v4303
  %vm4305 = vweird.f32 %v4282
  %vm4306 = vweird.f32 %v4300
  %vm4307 = vmor %vm4305, %vm4306
  %v4308 = vsel %vm4307, %v4300, %v4304
  %v4309 = vand.u32 2147483647, %v4282
  %vm4310 = vcmp.eq.f32.partialorder %v4309, 8.507059e+37
  %v4311 = vand.u32 %v4282, 2147483648
  %v4312 = vor.u32 1.1754944e-38, %v4311
  %v4313 = vsel %vm4310, %v4312, %v4308
  %v4314 = vmul.f32 1.0, %v4313
  %v4315 = vrcp.pop %v4283
  %v4316 = vmul.f32 %v4283, %v4315
  %v4317 = vsub.f32 1.0, %v4316
  %v4318 = vmul.f32 %v4315, %v4317
  %v4319 = vadd.f32 %v4315, %v4318
  %vm4320 = vweird.f32 %v4283
  %vm4321 = vweird.f32 %v4315
  %vm4322 = vmor %vm4320, %vm4321
  %v4323 = vsel %vm4322, %v4315, %v4319
  %v4324 = vand.u32 2147483647, %v4283
  %vm4325 = vcmp.eq.f32.partialorder %v4324, 8.507059e+37
  %v4326 = vand.u32 %v4283, 2147483648
  %v4327 = vor.u32 1.1754944e-38, %v4326
  %v4328 = vsel %vm4325, %v4327, %v4323
  %v4329 = vmul.f32 1.0, %v4328
  %v4330 = vrcp.pop %v4284
  %v4331 = vmul.f32 %v4284, %v4330
  %v4332 = vsub.f32 1.0, %v4331
  %v4333 = vmul.f32 %v4330, %v4332
  %v4334 = vadd.f32 %v4330, %v4333
  %vm4335 = vweird.f32 %v4284
  %vm4336 = vweird.f32 %v4330
  %vm4337 = vmor %vm4335, %vm4336
  %v4338 = vsel %vm4337, %v4330, %v4334
  %v4339 = vand.u32 2147483647, %v4284
  %vm4340 = vcmp.eq.f32.partialorder %v4339, 8.507059e+37
  %v4341 = vand.u32 %v4284, 2147483648
  %v4342 = vor.u32 1.1754944e-38, %v4341
  %v4343 = vsel %vm4340, %v4342, %v4338
  %v4344 = vmul.f32 1.0, %v4343
  %v4345 = vmul.f32 %v4314, 2.0
  %v4346 = vmul.f32 %v4344, 2.0
  %v4347 = vsub.f32 %v4345, 1.0
  %v4348 = vsub.f32 %v4346, 1.0
  %v4349 = vmul.f32 %v4299, %v4221
  %v4350 = vmul.f32 %v4329, %v4222
  %v4351 = vmul.f32 %v4299, %v4347
  %v4352 = vmul.f32 %v4329, %v4348
  %4355 = vrot.lane.b32.xlu0 %v4351, 64
  %v4356 = vpop.permute.xlu0 %4355
  %4357 = vrot.lane.b32.xlu0 %v4352, 64
  %v4358 = vpop.permute.xlu0 %4357
  %v4361 = vadd.f32 %v4349, %v4356
  %v4362 = vadd.f32 %v4350, %v4358
  %v4363 = vtanh.pop %v4361
  %v4364 = vtanh.pop %v4362
  %v4365 = vmul.f32 %v4314, %v4363
  %v4366 = vmul.f32 %v4344, %v4364
  %v4367 = vld [vmem:[%s2217] sm:$0xff]
  %v4368 = vld [vmem:[%s2217 + $0x8] sm:$0xff]
  %v4369 = vunpack.c.l.bf16 %v4367
  %v4370 = vunpack.c.h.bf16 %v4367
  %v4371 = vunpack.c.l.bf16 %v4368
  %v4372 = vunpack.c.h.bf16 %v4368
  %v4373 = vpack.c.bf16 %v4366, %v4365
  %v4375 = vsel %vm487, %v4373, 0
  %4377 = vmatpush.bf16.msra.mxu0 0
  %4378 = vmatpush.bf16.msra.mxu0 0
  %4379 = vmatpush.bf16.msra.mxu0 0
  %4380 = vmatpush.bf16.msra.mxu0 0
  %4381 = vmatpush.bf16.msra.mxu0 %v477
  %4382 = vmatpush.bf16.msra.mxu0 %v475
  %4383 = vmatpush.bf16.msra.mxu0 %v473
  %4384 = vmatpush.bf16.msra.mxu0 %v471
  %4385 = vmatmul.bf16.gmra.mxu0 %v4375
  %v4386 = vpop.f32.mrf.mxu0
  %v4387 = vadd.f32 0.0, %v4386
  %v4388 = vpop.f32.mrf.mxu0
  %v4389 = vadd.f32 0.0, %v4388
  %4390 = vdwg.mxu0
  %4391 = vmatpush.bf16.msra.mxu0 0
  %4392 = vmatpush.bf16.msra.mxu0 0
  %4393 = vmatpush.bf16.msra.mxu0 0
  %4394 = vmatpush.bf16.msra.mxu0 0
  %4395 = vmatpush.bf16.msra.mxu0 %v478
  %4396 = vmatpush.bf16.msra.mxu0 %v476
  %4397 = vmatpush.bf16.msra.mxu0 %v474
  %4398 = vmatpush.bf16.msra.mxu0 %v472
  %4399 = vmatmul.bf16.gmra.mxu0 %v4375
  %v4400 = vpop.f32.mrf.mxu0
  %v4401 = vadd.f32 0.0, %v4400
  %v4402 = vpop.f32.mrf.mxu0
  %v4403 = vadd.f32 0.0, %v4402
  %4404 = vdwg.mxu0
  %v4405 = vadd.f32 %v4369, %v4387
  %v4406 = vadd.f32 %v4370, %v4401
  %v4407 = vadd.f32 %v4371, %v4389
  %v4408 = vadd.f32 %v4372, %v4403
  %v4409 = vxor.u32 %v4405, 2147483648
  %v4410 = vxor.u32 %v4406, 2147483648
  %v4411 = vxor.u32 %v4407, 2147483648
  %v4412 = vxor.u32 %v4408, 2147483648
  %v4413 = vmul.f32 %v4409, 1.442695
  %v4414 = vpow.pop %v4413
  %v4415 = vmul.f32 %v4410, 1.442695
  %v4416 = vpow.pop %v4415
  %v4417 = vmul.f32 %v4411, 1.442695
  %v4418 = vpow.pop %v4417
  %v4419 = vmul.f32 %v4412, 1.442695
  %v4420 = vpow.pop %v4419
  %v4421 = vadd.f32 %v4414, 1.0
  %v4422 = vadd.f32 %v4416, 1.0
  %v4423 = vadd.f32 %v4418, 1.0
  %v4424 = vadd.f32 %v4420, 1.0
  %v4425 = vrcp.pop %v4421
  %v4426 = vmul.f32 %v4421, %v4425
  %v4427 = vsub.f32 1.0, %v4426
  %v4428 = vmul.f32 %v4425, %v4427
  %v4429 = vadd.f32 %v4425, %v4428
  %vm4430 = vweird.f32 %v4421
  %vm4431 = vweird.f32 %v4425
  %vm4432 = vmor %vm4430, %vm4431
  %v4433 = vsel %vm4432, %v4425, %v4429
  %v4434 = vand.u32 2147483647, %v4421
  %vm4435 = vcmp.eq.f32.partialorder %v4434, 8.507059e+37
  %v4436 = vand.u32 %v4421, 2147483648
  %v4437 = vor.u32 1.1754944e-38, %v4436
  %v4438 = vsel %vm4435, %v4437, %v4433
  %v4439 = vmul.f32 1.0, %v4438
  %v4440 = vrcp.pop %v4422
  %v4441 = vmul.f32 %v4422, %v4440
  %v4442 = vsub.f32 1.0, %v4441
  %v4443 = vmul.f32 %v4440, %v4442
  %v4444 = vadd.f32 %v4440, %v4443
  %vm4445 = vweird.f32 %v4422
  %vm4446 = vweird.f32 %v4440
  %vm4447 = vmor %vm4445, %vm4446
  %v4448 = vsel %vm4447, %v4440, %v4444
  %v4449 = vand.u32 2147483647, %v4422
  %vm4450 = vcmp.eq.f32.partialorder %v4449, 8.507059e+37
  %v4451 = vand.u32 %v4422, 2147483648
  %v4452 = vor.u32 1.1754944e-38, %v4451
  %v4453 = vsel %vm4450, %v4452, %v4448
  %v4454 = vmul.f32 1.0, %v4453
  %v4455 = vrcp.pop %v4423
  %v4456 = vmul.f32 %v4423, %v4455
  %v4457 = vsub.f32 1.0, %v4456
  %v4458 = vmul.f32 %v4455, %v4457
  %v4459 = vadd.f32 %v4455, %v4458
  %vm4460 = vweird.f32 %v4423
  %vm4461 = vweird.f32 %v4455
  %vm4462 = vmor %vm4460, %vm4461
  %v4463 = vsel %vm4462, %v4455, %v4459
  %v4464 = vand.u32 2147483647, %v4423
  %vm4465 = vcmp.eq.f32.partialorder %v4464, 8.507059e+37
  %v4466 = vand.u32 %v4423, 2147483648
  %v4467 = vor.u32 1.1754944e-38, %v4466
  %v4468 = vsel %vm4465, %v4467, %v4463
  %v4469 = vmul.f32 1.0, %v4468
  %v4470 = vrcp.pop %v4424
  %v4471 = vmul.f32 %v4424, %v4470
  %v4472 = vsub.f32 1.0, %v4471
  %v4473 = vmul.f32 %v4470, %v4472
  %v4474 = vadd.f32 %v4470, %v4473
  %vm4475 = vweird.f32 %v4424
  %vm4476 = vweird.f32 %v4470
  %vm4477 = vmor %vm4475, %vm4476
  %v4478 = vsel %vm4477, %v4470, %v4474
  %v4479 = vand.u32 2147483647, %v4424
  %vm4480 = vcmp.eq.f32.partialorder %v4479, 8.507059e+37
  %v4481 = vand.u32 %v4424, 2147483648
  %v4482 = vor.u32 1.1754944e-38, %v4481
  %v4483 = vsel %vm4480, %v4482, %v4478
  %v4484 = vmul.f32 1.0, %v4483
  %v4485 = vmul.f32 %v4454, 2.0
  %v4486 = vmul.f32 %v4484, 2.0
  %v4487 = vsub.f32 %v4485, 1.0
  %v4488 = vsub.f32 %v4486, 1.0
  %v4489 = vmul.f32 %v4439, %v4361
  %v4490 = vmul.f32 %v4469, %v4362
  %v4491 = vmul.f32 %v4439, %v4487
  %v4492 = vmul.f32 %v4469, %v4488
  %4495 = vrot.lane.b32.xlu0 %v4491, 64
  %v4496 = vpop.permute.xlu0 %4495
  %4497 = vrot.lane.b32.xlu0 %v4492, 64
  %v4498 = vpop.permute.xlu0 %4497
  %v4501 = vadd.f32 %v4489, %v4496
  %v4502 = vadd.f32 %v4490, %v4498
  %v4503 = vtanh.pop %v4501
  %v4504 = vtanh.pop %v4502
  %v4505 = vmul.f32 %v4454, %v4503
  %v4506 = vmul.f32 %v4484, %v4504
  %v4507 = vld [vmem:[%s2358] sm:$0xff]
  %v4508 = vld [vmem:[%s2358 + $0x8] sm:$0xff]
  %v4509 = vunpack.c.l.bf16 %v4507
  %v4510 = vunpack.c.h.bf16 %v4507
  %v4511 = vunpack.c.l.bf16 %v4508
  %v4512 = vunpack.c.h.bf16 %v4508
  %v4513 = vpack.c.bf16 %v4506, %v4505
  %v4515 = vsel %vm487, %v4513, 0
  %4517 = vmatpush.bf16.msra.mxu0 0
  %4518 = vmatpush.bf16.msra.mxu0 0
  %4519 = vmatpush.bf16.msra.mxu0 0
  %4520 = vmatpush.bf16.msra.mxu0 0
  %4521 = vmatpush.bf16.msra.mxu0 %v477
  %4522 = vmatpush.bf16.msra.mxu0 %v475
  %4523 = vmatpush.bf16.msra.mxu0 %v473
  %4524 = vmatpush.bf16.msra.mxu0 %v471
  %4525 = vmatmul.bf16.gmra.mxu0 %v4515
  %v4526 = vpop.f32.mrf.mxu0
  %v4527 = vadd.f32 0.0, %v4526
  %v4528 = vpop.f32.mrf.mxu0
  %v4529 = vadd.f32 0.0, %v4528
  %4530 = vdwg.mxu0
  %4531 = vmatpush.bf16.msra.mxu0 0
  %4532 = vmatpush.bf16.msra.mxu0 0
  %4533 = vmatpush.bf16.msra.mxu0 0
  %4534 = vmatpush.bf16.msra.mxu0 0
  %4535 = vmatpush.bf16.msra.mxu0 %v478
  %4536 = vmatpush.bf16.msra.mxu0 %v476
  %4537 = vmatpush.bf16.msra.mxu0 %v474
  %4538 = vmatpush.bf16.msra.mxu0 %v472
  %4539 = vmatmul.bf16.gmra.mxu0 %v4515
  %v4540 = vpop.f32.mrf.mxu0
  %v4541 = vadd.f32 0.0, %v4540
  %v4542 = vpop.f32.mrf.mxu0
  %v4543 = vadd.f32 0.0, %v4542
  %4544 = vdwg.mxu0
  %v4545 = vadd.f32 %v4509, %v4527
  %v4546 = vadd.f32 %v4510, %v4541
  %v4547 = vadd.f32 %v4511, %v4529
  %v4548 = vadd.f32 %v4512, %v4543
  %v4549 = vxor.u32 %v4545, 2147483648
  %v4550 = vxor.u32 %v4546, 2147483648
  %v4551 = vxor.u32 %v4547, 2147483648
  %v4552 = vxor.u32 %v4548, 2147483648
  %v4553 = vmul.f32 %v4549, 1.442695
  %v4554 = vpow.pop %v4553
  %v4555 = vmul.f32 %v4550, 1.442695
  %v4556 = vpow.pop %v4555
  %v4557 = vmul.f32 %v4551, 1.442695
  %v4558 = vpow.pop %v4557
  %v4559 = vmul.f32 %v4552, 1.442695
  %v4560 = vpow.pop %v4559
  %v4561 = vadd.f32 %v4554, 1.0
  %v4562 = vadd.f32 %v4556, 1.0
  %v4563 = vadd.f32 %v4558, 1.0
  %v4564 = vadd.f32 %v4560, 1.0
  %v4565 = vrcp.pop %v4561
  %v4566 = vmul.f32 %v4561, %v4565
  %v4567 = vsub.f32 1.0, %v4566
  %v4568 = vmul.f32 %v4565, %v4567
  %v4569 = vadd.f32 %v4565, %v4568
  %vm4570 = vweird.f32 %v4561
  %vm4571 = vweird.f32 %v4565
  %vm4572 = vmor %vm4570, %vm4571
  %v4573 = vsel %vm4572, %v4565, %v4569
  %v4574 = vand.u32 2147483647, %v4561
  %vm4575 = vcmp.eq.f32.partialorder %v4574, 8.507059e+37
  %v4576 = vand.u32 %v4561, 2147483648
  %v4577 = vor.u32 1.1754944e-38, %v4576
  %v4578 = vsel %vm4575, %v4577, %v4573
  %v4579 = vmul.f32 1.0, %v4578
  %v4580 = vrcp.pop %v4562
  %v4581 = vmul.f32 %v4562, %v4580
  %v4582 = vsub.f32 1.0, %v4581
  %v4583 = vmul.f32 %v4580, %v4582
  %v4584 = vadd.f32 %v4580, %v4583
  %vm4585 = vweird.f32 %v4562
  %vm4586 = vweird.f32 %v4580
  %vm4587 = vmor %vm4585, %vm4586
  %v4588 = vsel %vm4587, %v4580, %v4584
  %v4589 = vand.u32 2147483647, %v4562
  %vm4590 = vcmp.eq.f32.partialorder %v4589, 8.507059e+37
  %v4591 = vand.u32 %v4562, 2147483648
  %v4592 = vor.u32 1.1754944e-38, %v4591
  %v4593 = vsel %vm4590, %v4592, %v4588
  %v4594 = vmul.f32 1.0, %v4593
  %v4595 = vrcp.pop %v4563
  %v4596 = vmul.f32 %v4563, %v4595
  %v4597 = vsub.f32 1.0, %v4596
  %v4598 = vmul.f32 %v4595, %v4597
  %v4599 = vadd.f32 %v4595, %v4598
  %vm4600 = vweird.f32 %v4563
  %vm4601 = vweird.f32 %v4595
  %vm4602 = vmor %vm4600, %vm4601
  %v4603 = vsel %vm4602, %v4595, %v4599
  %v4604 = vand.u32 2147483647, %v4563
  %vm4605 = vcmp.eq.f32.partialorder %v4604, 8.507059e+37
  %v4606 = vand.u32 %v4563, 2147483648
  %v4607 = vor.u32 1.1754944e-38, %v4606
  %v4608 = vsel %vm4605, %v4607, %v4603
  %v4609 = vmul.f32 1.0, %v4608
  %v4610 = vrcp.pop %v4564
  %v4611 = vmul.f32 %v4564, %v4610
  %v4612 = vsub.f32 1.0, %v4611
  %v4613 = vmul.f32 %v4610, %v4612
  %v4614 = vadd.f32 %v4610, %v4613
  %vm4615 = vweird.f32 %v4564
  %vm4616 = vweird.f32 %v4610
  %vm4617 = vmor %vm4615, %vm4616
  %v4618 = vsel %vm4617, %v4610, %v4614
  %v4619 = vand.u32 2147483647, %v4564
  %vm4620 = vcmp.eq.f32.partialorder %v4619, 8.507059e+37
  %v4621 = vand.u32 %v4564, 2147483648
  %v4622 = vor.u32 1.1754944e-38, %v4621
  %v4623 = vsel %vm4620, %v4622, %v4618
  %v4624 = vmul.f32 1.0, %v4623
  %v4625 = vmul.f32 %v4594, 2.0
  %v4626 = vmul.f32 %v4624, 2.0
  %v4627 = vsub.f32 %v4625, 1.0
  %v4628 = vsub.f32 %v4626, 1.0
  %v4629 = vmul.f32 %v4579, %v4501
  %v4630 = vmul.f32 %v4609, %v4502
  %v4631 = vmul.f32 %v4579, %v4627
  %v4632 = vmul.f32 %v4609, %v4628
  %4635 = vrot.lane.b32.xlu0 %v4631, 64
  %v4636 = vpop.permute.xlu0 %4635
  %4637 = vrot.lane.b32.xlu0 %v4632, 64
  %v4638 = vpop.permute.xlu0 %4637
  %v4641 = vadd.f32 %v4629, %v4636
  %v4642 = vadd.f32 %v4630, %v4638
  %v4643 = vtanh.pop %v4641
  %v4644 = vtanh.pop %v4642
  %v4645 = vmul.f32 %v4594, %v4643
  %v4646 = vmul.f32 %v4624, %v4644
  %v4647 = vld [vmem:[%s2499] sm:$0xff]
  %v4648 = vld [vmem:[%s2499 + $0x8] sm:$0xff]
  %v4649 = vunpack.c.l.bf16 %v4647
  %v4650 = vunpack.c.h.bf16 %v4647
  %v4651 = vunpack.c.l.bf16 %v4648
  %v4652 = vunpack.c.h.bf16 %v4648
  %v4653 = vpack.c.bf16 %v4646, %v4645
  %v4655 = vsel %vm487, %v4653, 0
  %4657 = vmatpush.bf16.msra.mxu0 0
  %4658 = vmatpush.bf16.msra.mxu0 0
  %4659 = vmatpush.bf16.msra.mxu0 0
  %4660 = vmatpush.bf16.msra.mxu0 0
  %4661 = vmatpush.bf16.msra.mxu0 %v477
  %4662 = vmatpush.bf16.msra.mxu0 %v475
  %4663 = vmatpush.bf16.msra.mxu0 %v473
  %4664 = vmatpush.bf16.msra.mxu0 %v471
  %4665 = vmatmul.bf16.gmra.mxu0 %v4655
  %v4666 = vpop.f32.mrf.mxu0
  %v4667 = vadd.f32 0.0, %v4666
  %v4668 = vpop.f32.mrf.mxu0
  %v4669 = vadd.f32 0.0, %v4668
  %4670 = vdwg.mxu0
  %4671 = vmatpush.bf16.msra.mxu0 0
  %4672 = vmatpush.bf16.msra.mxu0 0
  %4673 = vmatpush.bf16.msra.mxu0 0
  %4674 = vmatpush.bf16.msra.mxu0 0
  %4675 = vmatpush.bf16.msra.mxu0 %v478
  %4676 = vmatpush.bf16.msra.mxu0 %v476
  %4677 = vmatpush.bf16.msra.mxu0 %v474
  %4678 = vmatpush.bf16.msra.mxu0 %v472
  %4679 = vmatmul.bf16.gmra.mxu0 %v4655
  %v4680 = vpop.f32.mrf.mxu0
  %v4681 = vadd.f32 0.0, %v4680
  %v4682 = vpop.f32.mrf.mxu0
  %v4683 = vadd.f32 0.0, %v4682
  %4684 = vdwg.mxu0
  %v4685 = vadd.f32 %v4649, %v4667
  %v4686 = vadd.f32 %v4650, %v4681
  %v4687 = vadd.f32 %v4651, %v4669
  %v4688 = vadd.f32 %v4652, %v4683
  %v4689 = vxor.u32 %v4685, 2147483648
  %v4690 = vxor.u32 %v4686, 2147483648
  %v4691 = vxor.u32 %v4687, 2147483648
  %v4692 = vxor.u32 %v4688, 2147483648
  %v4693 = vmul.f32 %v4689, 1.442695
  %v4694 = vpow.pop %v4693
  %v4695 = vmul.f32 %v4690, 1.442695
  %v4696 = vpow.pop %v4695
  %v4697 = vmul.f32 %v4691, 1.442695
  %v4698 = vpow.pop %v4697
  %v4699 = vmul.f32 %v4692, 1.442695
  %v4700 = vpow.pop %v4699
  %v4701 = vadd.f32 %v4694, 1.0
  %v4702 = vadd.f32 %v4696, 1.0
  %v4703 = vadd.f32 %v4698, 1.0
  %v4704 = vadd.f32 %v4700, 1.0
  %v4705 = vrcp.pop %v4701
  %v4706 = vmul.f32 %v4701, %v4705
  %v4707 = vsub.f32 1.0, %v4706
  %v4708 = vmul.f32 %v4705, %v4707
  %v4709 = vadd.f32 %v4705, %v4708
  %vm4710 = vweird.f32 %v4701
  %vm4711 = vweird.f32 %v4705
  %vm4712 = vmor %vm4710, %vm4711
  %v4713 = vsel %vm4712, %v4705, %v4709
  %v4714 = vand.u32 2147483647, %v4701
  %vm4715 = vcmp.eq.f32.partialorder %v4714, 8.507059e+37
  %v4716 = vand.u32 %v4701, 2147483648
  %v4717 = vor.u32 1.1754944e-38, %v4716
  %v4718 = vsel %vm4715, %v4717, %v4713
  %v4719 = vmul.f32 1.0, %v4718
  %v4720 = vrcp.pop %v4702
  %v4721 = vmul.f32 %v4702, %v4720
  %v4722 = vsub.f32 1.0, %v4721
  %v4723 = vmul.f32 %v4720, %v4722
  %v4724 = vadd.f32 %v4720, %v4723
  %vm4725 = vweird.f32 %v4702
  %vm4726 = vweird.f32 %v4720
  %vm4727 = vmor %vm4725, %vm4726
  %v4728 = vsel %vm4727, %v4720, %v4724
  %v4729 = vand.u32 2147483647, %v4702
  %vm4730 = vcmp.eq.f32.partialorder %v4729, 8.507059e+37
  %v4731 = vand.u32 %v4702, 2147483648
  %v4732 = vor.u32 1.1754944e-38, %v4731
  %v4733 = vsel %vm4730, %v4732, %v4728
  %v4734 = vmul.f32 1.0, %v4733
  %v4735 = vrcp.pop %v4703
  %v4736 = vmul.f32 %v4703, %v4735
  %v4737 = vsub.f32 1.0, %v4736
  %v4738 = vmul.f32 %v4735, %v4737
  %v4739 = vadd.f32 %v4735, %v4738
  %vm4740 = vweird.f32 %v4703
  %vm4741 = vweird.f32 %v4735
  %vm4742 = vmor %vm4740, %vm4741
  %v4743 = vsel %vm4742, %v4735, %v4739
  %v4744 = vand.u32 2147483647, %v4703
  %vm4745 = vcmp.eq.f32.partialorder %v4744, 8.507059e+37
  %v4746 = vand.u32 %v4703, 2147483648
  %v4747 = vor.u32 1.1754944e-38, %v4746
  %v4748 = vsel %vm4745, %v4747, %v4743
  %v4749 = vmul.f32 1.0, %v4748
  %v4750 = vrcp.pop %v4704
  %v4751 = vmul.f32 %v4704, %v4750
  %v4752 = vsub.f32 1.0, %v4751
  %v4753 = vmul.f32 %v4750, %v4752
  %v4754 = vadd.f32 %v4750, %v4753
  %vm4755 = vweird.f32 %v4704
  %vm4756 = vweird.f32 %v4750
  %vm4757 = vmor %vm4755, %vm4756
  %v4758 = vsel %vm4757, %v4750, %v4754
  %v4759 = vand.u32 2147483647, %v4704
  %vm4760 = vcmp.eq.f32.partialorder %v4759, 8.507059e+37
  %v4761 = vand.u32 %v4704, 2147483648
  %v4762 = vor.u32 1.1754944e-38, %v4761
  %v4763 = vsel %vm4760, %v4762, %v4758
  %v4764 = vmul.f32 1.0, %v4763
  %v4765 = vmul.f32 %v4734, 2.0
  %v4766 = vmul.f32 %v4764, 2.0
  %v4767 = vsub.f32 %v4765, 1.0
  %v4768 = vsub.f32 %v4766, 1.0
  %v4769 = vmul.f32 %v4719, %v4641
  %v4770 = vmul.f32 %v4749, %v4642
  %v4771 = vmul.f32 %v4719, %v4767
  %v4772 = vmul.f32 %v4749, %v4768
  %4775 = vrot.lane.b32.xlu0 %v4771, 64
  %v4776 = vpop.permute.xlu0 %4775
  %4777 = vrot.lane.b32.xlu0 %v4772, 64
  %v4778 = vpop.permute.xlu0 %4777
  %v4781 = vadd.f32 %v4769, %v4776
  %v4782 = vadd.f32 %v4770, %v4778
  %v4783 = vtanh.pop %v4781
  %v4784 = vtanh.pop %v4782
  %v4785 = vmul.f32 %v4734, %v4783
  %v4786 = vmul.f32 %v4764, %v4784
  %v4787 = vld [vmem:[%s4] sm:$0xff]
  %v4788 = vld [vmem:[%s4 + $0x8] sm:$0xff]
  %v4789 = vld [vmem:[%s4 + $0x10] sm:$0xff]
  %v4790 = vld [vmem:[%s4 + $0x18] sm:$0xff]
  %v4791 = vld [vmem:[%s4 + $0x20] sm:$0xff]
  %v4792 = vld [vmem:[%s4 + $0x28] sm:$0xff]
  %v4793 = vld [vmem:[%s4 + $0x30] sm:$0xff]
  %v4794 = vld [vmem:[%s4 + $0x38] sm:$0xff]
  %v4795 = vld [vmem:[%s5] sm:$0x1]
  %v4797 = vperm.slane %v4795, 0
  %v4800 = vsel %vm487, %v4785, 0
  %v4803 = vsel %vm487, %v4786, 0
  %4805 = vmatpush.msra.mxu0 0.0
  %4806 = vmatpush.msra.mxu0 0.0
  %4807 = vmatpush.msra.mxu0 0.0
  %4808 = vmatpush.msra.mxu0 0.0
  %4809 = vmatpush.msra.mxu0 0.0
  %4810 = vmatpush.msra.mxu0 0.0
  %4811 = vmatpush.msra.mxu0 0.0
  %4812 = vmatpush.msra.mxu0 0.0
  %4813 = vmatpush.msra.mxu0 %v4794
  %4814 = vmatpush.msra.mxu0 %v4793
  %4815 = vmatpush.msra.mxu0 %v4792
  %4816 = vmatpush.msra.mxu0 %v4791
  %4817 = vmatpush.msra.mxu0 %v4790
  %4818 = vmatpush.msra.mxu0 %v4789
  %4819 = vmatpush.msra.mxu0 %v4788
  %4820 = vmatpush.msra.mxu0 %v4787
  %4821 = vmatmul.f32.gmra.mxu0 %v4800
  %v4822 = vpop.f32.mrf.mxu0
  %v4823 = vadd.f32 %v4797, %v4822
  %4824 = vmatmul.f32.gmra.mxu0 %v4803
  %v4825 = vpop.f32.mrf.mxu0
  %v4826 = vadd.f32 %v4797, %v4825
  %4827 = vdwg.mxu0
  %4828 = vmax.xlane.f32.xlu0 %v4823
  %v4829 = vpop.xlane.xlu0 %4828
  %4830 = vmax.xlane.f32.xlu0 %v4826
  %v4831 = vpop.xlane.xlu0 %4830
  %v4832 = vsub.f32 %v4823, %v4829
  %v4833 = vsub.f32 %v4826, %v4831
  %v4834 = vmul.f32 %v4832, 1.442695
  %v4835 = vpow.pop %v4834
  %v4836 = vmul.f32 %v4833, 1.442695
  %v4837 = vpow.pop %v4836
  %4838 = vadd.xlane.f32.xlu0 %v4835
  %v4839 = vpop.xlane.xlu0 %4838
  %4840 = vadd.xlane.f32.xlu0 %v4837
  %v4841 = vpop.xlane.xlu0 %4840
  %v4842 = vrcp.pop %v4839
  %v4843 = vmul.f32 %v4839, %v4842
  %v4844 = vsub.f32 1.0, %v4843
  %v4845 = vmul.f32 %v4842, %v4844
  %v4846 = vadd.f32 %v4842, %v4845
  %vm4847 = vweird.f32 %v4839
  %vm4848 = vweird.f32 %v4842
  %vm4849 = vmor %vm4847, %vm4848
  %v4850 = vsel %vm4849, %v4842, %v4846
  %v4851 = vand.u32 2147483647, %v4839
  %vm4852 = vcmp.eq.f32.partialorder %v4851, 8.507059e+37
  %v4853 = vand.u32 %v4839, 2147483648
  %v4854 = vor.u32 1.1754944e-38, %v4853
  %v4855 = vsel %vm4852, %v4854, %v4850
  %v4856 = vmul.f32 %v4835, %v4855
  %v4857 = vrcp.pop %v4841
  %v4858 = vmul.f32 %v4841, %v4857
  %v4859 = vsub.f32 1.0, %v4858
  %v4860 = vmul.f32 %v4857, %v4859
  %v4861 = vadd.f32 %v4857, %v4860
  %vm4862 = vweird.f32 %v4841
  %vm4863 = vweird.f32 %v4857
  %vm4864 = vmor %vm4862, %vm4863
  %v4865 = vsel %vm4864, %v4857, %v4861
  %v4866 = vand.u32 2147483647, %v4841
  %vm4867 = vcmp.eq.f32.partialorder %v4866, 8.507059e+37
  %v4868 = vand.u32 %v4841, 2147483648
  %v4869 = vor.u32 1.1754944e-38, %v4868
  %v4870 = vsel %vm4867, %v4869, %v4865
  %v4871 = vmul.f32 %v4837, %v4870
  %4872 = vst [vmem:[%s6] sm:$0xff] %v4856
  %4873 = vst [vmem:[%s6 + $0x8] sm:$0xff] %v4871
  // Predicated region
  $region26: #{lstm_forward.1} parent=0 // pred_check
    _
  $region27: #{lstm_forward.1} parent=0 // pred_check_branch
    %4875 = sbr.rel (0) target = $region29
  $region28: #{lstm_forward.1} parent=0 // pred_region
    _
  $region29: #{lstm_forward.1} parent=0 // pred_fallthru
    _
  // Predicated region
  $region30: #{lstm_forward.1} parent=0 // pred_check
    _
  $region31: #{lstm_forward.1} parent=0 // pred_check_branch
    %4877 = sbr.rel (0) target = $region33
  $region32: #{lstm_forward.1} parent=0 // pred_region
    _
  $region33: #{lstm_forward.1} parent=0 // pred_fallthru
    _

</llo_original>
